<compile_context>
chip_gen: v7x
topology: tpu7x:2x2x1
jax: 0.10.0
libtpu: 0.0.40
codegen_flags: <defaults>
</compile_context>

<pallas_src>
import functools

import jax
import jax.numpy as jnp
from jax import lax
from jax.experimental import pallas as pl
from jax.experimental.pallas import tpu as pltpu


def _round_up(x, m):
    return (x + m - 1) // m * m


def _fused_lstm_kernel(*refs, num_layers, t_chunk, b_pad, h_pad):
    """One time-chunk of the multi-layer LSTM (all layers fused).

    refs layout:
      refs[0]                        : x2d chunk (t_chunk*B_pad, In_pad) bf16
      refs[1+3l], refs[2+3l],
      refs[3+3l]                     : w_ih_l (F_pad, 4H_pad) bf16,
                                       w_hh_l (H_pad, 4H_pad) bf16,
                                       b_l    (1, 4H_pad)     f32
      refs[1+3L]                     : y chunk (t_chunk*B_pad, H_pad) f32
      refs[2+3L:]                    : state_h (L,B_pad,H_pad) bf16 (persistent),
                                       state_c (L,B_pad,H_pad) f32  (persistent),
                                       seq_scr (t_chunk*B_pad, H_pad) bf16,
                                       gp_scr  (t_chunk*B_pad, 4H_pad) f32
    """
    x_ref = refs[0]
    wih = [refs[1 + 3 * l] for l in range(num_layers)]
    whh = [refs[2 + 3 * l] for l in range(num_layers)]
    bias = [refs[3 + 3 * l] for l in range(num_layers)]
    y_ref = refs[1 + 3 * num_layers]
    state_h, state_c, seq_scr, gp_scr = refs[2 + 3 * num_layers:]

    # (h, c) carry lives in persistent scratch; zero it on the first chunk.
    @pl.when(pl.program_id(0) == 0)
    def _init():
        state_h[...] = jnp.zeros_like(state_h)
        state_c[...] = jnp.zeros_like(state_c)

    # Serial dependency chain: a modest unroll keeps LLO scheduling visibility
    # without inflating code size linearly in t_chunk.
    unroll = t_chunk if t_chunk <= 8 else 8

    for layer in range(num_layers):
        is_last = layer == num_layers - 1

        # ---- (1) batched input projection for the whole chunk: one MXU matmul,
        #          bias folded in here (not re-added every step).
        inp = x_ref[...] if layer == 0 else seq_scr[...]       # bf16
        gp_scr[...] = (
            jnp.dot(inp, wih[layer][...], preferred_element_type=jnp.float32)
            + bias[layer][...])

        # ---- (2) recurrence: only h_prev @ W_hh stays in the loop.  The weight
        #          load is hoisted (loop-invariant), not re-issued per step.
        whh_mat = whh[layer][...]                               # bf16 (H_pad, 4H_pad)
        h0 = state_h[layer]                                     # bf16 (B_pad, H_pad)
        c0 = state_c[layer]                                     # f32  (B_pad, H_pad)

        def step(t, carry, whh_mat=whh_mat, is_last=is_last):
            h_prev, c_prev = carry                              # bf16, f32
            row = pl.multiple_of(t * b_pad, b_pad)              # sublane aligned
            gates = gp_scr[pl.ds(row, b_pad), :] + jnp.dot(
                h_prev, whh_mat, preferred_element_type=jnp.float32)
            # Gate blocks are 128-lane aligned (H padded to 128) -> free slicing.
            i_g = jax.nn.sigmoid(gates[:, 0 * h_pad:1 * h_pad])
            f_g = jax.nn.sigmoid(gates[:, 1 * h_pad:2 * h_pad])
            g_g = jnp.tanh(gates[:, 2 * h_pad:3 * h_pad])
            o_g = jax.nn.sigmoid(gates[:, 3 * h_pad:4 * h_pad])
            c_new = f_g * c_prev + i_g * g_g
            h_new = o_g * jnp.tanh(c_new)                       # f32
            h_new_bf = h_new.astype(jnp.bfloat16)
            if is_last:
                y_ref[pl.ds(row, b_pad), :] = h_new             # lane-dense f32 store
            else:
                seq_scr[pl.ds(row, b_pad), :] = h_new_bf        # bf16 layer-to-layer
            return h_new_bf, c_new

        h_f, c_f = lax.fori_loop(0, t_chunk, step, (h0, c0), unroll=unroll)
        state_h[layer] = h_f
        state_c[layer] = c_f


def text_style_net_forward(x, params, t_chunk=None):
    """Forward of TextStyleNet: output sequence of the multi-layer LSTM.

    x: (seq_len, batch, num_chars) f32
    params: list of per-layer dicts {w_ih: (4H,In_l), w_hh: (4H,H), b_ih, b_hh: (4H,)}
    returns: (seq_len, batch, num_nodes) f32
    """
    T, B, In = x.shape
    L = len(params)
    H = params[0]["w_hh"].shape[1]

    B_pad = _round_up(max(B, 1), 16)      # native (16,128) bf16 MXU LHS tile
    In_pad = _round_up(max(In, 1), 128)   # lane granularity
    H_pad = _round_up(max(H, 1), 128)     # lane-dense gates / outputs

    if t_chunk is None:
        t_chunk = T if T <= 128 else 128  # bounds VMEM; overlaps DMA with recurrence
    T_pad = _round_up(T, t_chunk)
    n_chunks = T_pad // t_chunk

    # Pad + flatten input to a lane-dense (T_pad*B_pad, In_pad) bf16 slab.
    # Trailing padded timesteps only run *after* the real ones (LSTM is causal),
    # so they never affect valid outputs; padded batch rows are sliced off.
    x_p = jnp.zeros((T_pad, B_pad, In_pad), jnp.float32).at[:T, :B, :In].set(x)
    x2d = x_p.reshape(T_pad * B_pad, In_pad).astype(jnp.bfloat16)

    # Pack weights: transpose, combine biases, and place each gate (i,f,g,o)
    # in its own 128-lane-aligned column block; zero-pad elsewhere (padded
    # hidden columns provably stay exactly 0 through the recurrence).
    args = [x2d]
    for l, p in enumerate(params):
        in_size = In if l == 0 else H
        in_pad = In_pad if l == 0 else H_pad
        w_ih, w_hh = p["w_ih"], p["w_hh"]
        b = p["b_ih"] + p["b_hh"]
        wih_p = jnp.zeros((in_pad, 4 * H_pad), jnp.float32)
        whh_p = jnp.zeros((H_pad, 4 * H_pad), jnp.float32)
        b_p = jnp.zeros((1, 4 * H_pad), jnp.float32)
        for g in range(4):
            wih_p = wih_p.at[:in_size, g * H_pad:g * H_pad + H].set(
                w_ih[g * H:(g + 1) * H, :].T)
            whh_p = whh_p.at[:H, g * H_pad:g * H_pad + H].set(
                w_hh[g * H:(g + 1) * H, :].T)
            b_p = b_p.at[0, g * H_pad:g * H_pad + H].set(b[g * H:(g + 1) * H])
        args += [wih_p.astype(jnp.bfloat16), whh_p.astype(jnp.bfloat16), b_p]

    # Weight specs: full-array blocks with a constant index map (Pallas skips
    # the redundant re-fetch since the block index never changes).
    w_specs = []
    for a in args[1:]:
        w_specs.append(pl.BlockSpec(a.shape, lambda i: (0, 0)))

    blk_rows = t_chunk * B_pad

    # VMEM budget: actual footprint + headroom, never the full 64 MiB of v7x.
    w_bytes = sum(int(a.size) * a.dtype.itemsize for a in args[1:])
    footprint = (
        2 * blk_rows * In_pad * 2          # x chunk, double-buffered (bf16)
        + 2 * blk_rows * H_pad * 4         # y chunk, double-buffered (f32)
        + 2 * w_bytes                      # weights (pipelined buffers)
        + blk_rows * H_pad * 2             # seq_scr (bf16)
        + blk_rows * 4 * H_pad * 4         # gp_scr (f32)
        + L * B_pad * H_pad * (2 + 4))     # persistent h (bf16) + c (f32) state
    vmem_limit = int(min(48 * 1024 * 1024,
                         max(16 * 1024 * 1024, 2 * footprint)))

    kernel = functools.partial(
        _fused_lstm_kernel, num_layers=L, t_chunk=t_chunk,
        b_pad=B_pad, h_pad=H_pad)

    out2d = pl.pallas_call(
        kernel,
        out_shape=jax.ShapeDtypeStruct((T_pad * B_pad, H_pad), jnp.float32),
        grid_spec=pltpu.PrefetchScalarGridSpec(
            num_scalar_prefetch=0,
            grid=(n_chunks,),
            in_specs=[pl.BlockSpec((blk_rows, In_pad), lambda i: (i, 0))] + w_specs,
            out_specs=pl.BlockSpec((blk_rows, H_pad), lambda i: (i, 0)),
            scratch_shapes=[
                pltpu.VMEM((L, B_pad, H_pad), jnp.bfloat16),   # persistent h carry
                pltpu.VMEM((L, B_pad, H_pad), jnp.float32),    # persistent c carry
                pltpu.VMEM((blk_rows, H_pad), jnp.bfloat16),   # layer-to-layer h seq
                pltpu.VMEM((blk_rows, 4 * H_pad), jnp.float32),# batched input proj
            ]),
        compiler_params=pltpu.CompilerParams(
            dimension_semantics=("arbitrary",),                # time axis carries state
            vmem_limit_bytes=vmem_limit),
    )(*args)

    # TODO(synk): inter-layer dropout (p=0.1) is an eval-mode no-op; skipped.
    return out2d.reshape(T_pad, B_pad, H_pad)[:T, :B, :H]


# ---------------------------------------------------------------------------
# Pure-JAX f32 reference (PyTorch nn.LSTM math) for a correctness check.
# ---------------------------------------------------------------------------
def _lstm_layer_ref(x, w_ih, w_hh, b_ih, b_hh):
    T, B, _ = x.shape
    H = w_hh.shape[1]

    def step(carry, x_t):
        h, c = carry
        gates = x_t @ w_ih.T + h @ w_hh.T + b_ih + b_hh
        i = jax.nn.sigmoid(gates[:, 0:H])
        f = jax.nn.sigmoid(gates[:, H:2 * H])
        g = jnp.tanh(gates[:, 2 * H:3 * H])
        o = jax.nn.sigmoid(gates[:, 3 * H:4 * H])
        c = f * c + i * g
        h = o * jnp.tanh(c)
        return (h, c), h

    init = (jnp.zeros((B, H), jnp.float32), jnp.zeros((B, H), jnp.float32))
    _, ys = lax.scan(step, init, x)
    return ys


def init_params(key, num_chars, num_layers, num_nodes):
    """Deterministic PyTorch-style LSTM init: U(-1/sqrt(H), 1/sqrt(H))."""
    params = []
    k = 1.0 / jnp.sqrt(jnp.float32(num_nodes))
    for layer in range(num_layers):
        in_size = num_chars if layer == 0 else num_nodes
        key, k1, k2, k3, k4 = jax.random.split(key, 5)
        params.append({
            "w_ih": jax.random.uniform(k1, (4 * num_nodes, in_size),
                                       jnp.float32, -k, k),
            "w_hh": jax.random.uniform(k2, (4 * num_nodes, num_nodes),
                                       jnp.float32, -k, k),
            "b_ih": jax.random.uniform(k3, (4 * num_nodes,),
                                       jnp.float32, -k, k),
            "b_hh": jax.random.uniform(k4, (4 * num_nodes,),
                                       jnp.float32, -k, k),
        })
    return params


if __name__ == "__main__":
    # Small shapes consistent with the module: num_chars=32 (input vocab),
    # num_nodes=64 hidden, num_layers=2, seq_len=8, batch=4.
    num_chars, num_layers, num_nodes = 32, 2, 64
    seq_len, batch = 8, 4

    key = jax.random.PRNGKey(0)
    key, kx = jax.random.split(key)
    x = jax.random.normal(kx, (seq_len, batch, num_chars), jnp.float32)
    params = init_params(key, num_chars, num_layers, num_nodes)

    out = text_style_net_forward(x, params)
    out = jax.block_until_ready(out)

    ref = x
    for p in params:
        ref = _lstm_layer_ref(ref, p["w_ih"], p["w_hh"], p["b_ih"], p["b_hh"])
    ref = jax.block_until_ready(ref)

    assert out.shape == (seq_len, batch, num_nodes)
    max_err = float(jnp.max(jnp.abs(out - ref)))
    assert jnp.allclose(out, ref, atol=2e-2, rtol=2e-2), max_err

    print("KERNEL_OK")
</pallas_src>

<mosaic_0001>
module attributes {stable_mosaic.version = 11 : i64} {
  func.func @_fused_lstm_kernel(%arg0: i32, %arg1: memref<128x128xbf16, #tpu.memory_space<vmem>>, %arg2: memref<128x512xbf16, #tpu.memory_space<vmem>>, %arg3: memref<128x512xbf16, #tpu.memory_space<vmem>>, %arg4: memref<1x512xf32, #tpu.memory_space<vmem>>, %arg5: memref<128x512xbf16, #tpu.memory_space<vmem>>, %arg6: memref<128x512xbf16, #tpu.memory_space<vmem>>, %arg7: memref<1x512xf32, #tpu.memory_space<vmem>>, %arg8: memref<128x128xf32, #tpu.memory_space<vmem>>, %arg9: memref<2x16x128xbf16, #tpu.memory_space<vmem>>, %arg10: memref<2x16x128xf32, #tpu.memory_space<vmem>>, %arg11: memref<128x128xbf16, #tpu.memory_space<vmem>>, %arg12: memref<128x512xf32, #tpu.memory_space<vmem>>) attributes {dimension_semantics = [#tpu.dimension_semantics<arbitrary>], iteration_bounds = array<i64: 1>, scalar_prefetch = 0 : i64, scratch_operands = 4 : i64, tpu.core_type = #tpu.core_type<tc>, window_params = [{transform_indices = @transform_0, window_bounds = array<i64: 128, 128>}, {pipeline_mode = #tpu.pipeline_mode<synchronous>, transform_indices = @transform_1, window_bounds = array<i64: 128, 512>}, {pipeline_mode = #tpu.pipeline_mode<synchronous>, transform_indices = @transform_2, window_bounds = array<i64: 128, 512>}, {pipeline_mode = #tpu.pipeline_mode<synchronous>, transform_indices = @transform_3, window_bounds = array<i64: 1, 512>}, {pipeline_mode = #tpu.pipeline_mode<synchronous>, transform_indices = @transform_4, window_bounds = array<i64: 128, 512>}, {pipeline_mode = #tpu.pipeline_mode<synchronous>, transform_indices = @transform_5, window_bounds = array<i64: 128, 512>}, {pipeline_mode = #tpu.pipeline_mode<synchronous>, transform_indices = @transform_6, window_bounds = array<i64: 1, 512>}, {transform_indices = @transform_7, window_bounds = array<i64: 128, 128>}]} {
    %c0_i32 = arith.constant 0 : i32
    %0 = arith.cmpi eq, %arg0, %c0_i32 : i32
    %1 = arith.extui %0 : i1 to i32
    %c0_i32_0 = arith.constant 0 : i32
    %2 = arith.cmpi ne, %1, %c0_i32_0 : i32
    scf.if %2 {
      %cst_165 = arith.constant 0.000000e+00 : bf16
      %583 = vector.broadcast %cst_165 : bf16 to vector<2x16x128xbf16>
      %c0_166 = arith.constant 0 : index
      %c0_167 = arith.constant 0 : index
      %c0_168 = arith.constant 0 : index
      %584 = vector.load %arg9[%c0_166, %c0_167, %c0_168] : memref<2x16x128xbf16, #tpu.memory_space<vmem>>, vector<2x16x128xbf16>
      tpu.vector_store %arg9[%c0_166, %c0_167, %c0_168], %583 {strides = array<i32>} : memref<2x16x128xbf16, #tpu.memory_space<vmem>>, vector<2x16x128xbf16>,
      %cst_169 = arith.constant 0.000000e+00 : f32
      %585 = vector.broadcast %cst_169 : f32 to vector<2x16x128xf32>
      %c0_170 = arith.constant 0 : index
      %c0_171 = arith.constant 0 : index
      %c0_172 = arith.constant 0 : index
      %586 = vector.load %arg10[%c0_170, %c0_171, %c0_172] : memref<2x16x128xf32, #tpu.memory_space<vmem>>, vector<2x16x128xf32>
      tpu.vector_store %arg10[%c0_170, %c0_171, %c0_172], %585 {strides = array<i32>} : memref<2x16x128xf32, #tpu.memory_space<vmem>>, vector<2x16x128xf32>,
    } else {
    }
    %c0 = arith.constant 0 : index
    %c0_1 = arith.constant 0 : index
    %3 = vector.load %arg1[%c0, %c0_1] : memref<128x128xbf16, #tpu.memory_space<vmem>>, vector<128x128xbf16>
    %c0_2 = arith.constant 0 : index
    %c0_3 = arith.constant 0 : index
    %4 = vector.load %arg2[%c0_2, %c0_3] : memref<128x512xbf16, #tpu.memory_space<vmem>>, vector<128x512xbf16>
    %cst = arith.constant dense<0.000000e+00> : vector<128x512xf32>
    %5 = tpu.matmul %3, %4, %cst {dimension_numbers = #tpu.dot_dimension_numbers<[1], [0], [0], [1], [0, 0, 1, 1], [], []>} : vector<128x128xbf16>, vector<128x512xbf16>, vector<128x512xf32> -> vector<128x512xf32>
    %c0_4 = arith.constant 0 : index
    %c0_5 = arith.constant 0 : index
    %6 = vector.load %arg4[%c0_4, %c0_5] : memref<1x512xf32, #tpu.memory_space<vmem>>, vector<1x512xf32>
    %7 = vector.broadcast %6 : vector<1x512xf32> to vector<128x512xf32>
    %8 = arith.addf %5, %7 : vector<128x512xf32>
    %c0_6 = arith.constant 0 : index
    %c0_7 = arith.constant 0 : index
    %9 = vector.load %arg12[%c0_6, %c0_7] : memref<128x512xf32, #tpu.memory_space<vmem>>, vector<128x512xf32>
    tpu.vector_store %arg12[%c0_6, %c0_7], %8 {strides = array<i32>} : memref<128x512xf32, #tpu.memory_space<vmem>>, vector<128x512xf32>,
    %c0_8 = arith.constant 0 : index
    %c0_9 = arith.constant 0 : index
    %10 = vector.load %arg3[%c0_8, %c0_9] : memref<128x512xbf16, #tpu.memory_space<vmem>>, vector<128x512xbf16>
    %c0_10 = arith.constant 0 : index
    %c0_11 = arith.constant 0 : index
    %c0_12 = arith.constant 0 : index
    %11 = vector.load %arg9[%c0_10, %c0_11, %c0_12] : memref<2x16x128xbf16, #tpu.memory_space<vmem>>, vector<1x16x128xbf16>
    %12 = vector.shape_cast %11 : vector<1x16x128xbf16> to vector<16x128xbf16>
    %c0_13 = arith.constant 0 : index
    %c0_14 = arith.constant 0 : index
    %c0_15 = arith.constant 0 : index
    %13 = vector.load %arg10[%c0_13, %c0_14, %c0_15] : memref<2x16x128xf32, #tpu.memory_space<vmem>>, vector<1x16x128xf32>
    %14 = vector.shape_cast %13 : vector<1x16x128xf32> to vector<16x128xf32>
    %c0_i32_16 = arith.constant 0 : i32
    %c16_i32 = arith.constant 16 : i32
    %15 = arith.muli %c0_i32_16, %c16_i32 : i32
    %16 = tpu.assume_multiple %15, 16 : i32
    %17 = arith.index_cast %16 : i32 to index
    %c0_17 = arith.constant 0 : index
    %18 = vector.load %arg12[%17, %c0_17] : memref<128x512xf32, #tpu.memory_space<vmem>>, vector<16x512xf32>
    %cst_18 = arith.constant dense<0.000000e+00> : vector<16x512xf32>
    %19 = tpu.matmul %12, %10, %cst_18 {dimension_numbers = #tpu.dot_dimension_numbers<[1], [0], [0], [1], [0, 0, 1, 1], [], []>} : vector<16x128xbf16>, vector<128x512xbf16>, vector<16x512xf32> -> vector<16x512xf32>
    %20 = arith.addf %18, %19 : vector<16x512xf32>
    %21 = vector.extract_strided_slice %20 {offsets = [0, 0], sizes = [16, 128], strides = [1, 1]} : vector<16x512xf32> to vector<16x128xf32>
    %22 = arith.negf %21 : vector<16x128xf32>
    %23 = math.exp %22 : vector<16x128xf32>
    %cst_19 = arith.constant 1.000000e+00 : f32
    %24 = vector.broadcast %cst_19 : f32 to vector<16x128xf32>
    %25 = arith.addf %24, %23 : vector<16x128xf32>
    %26 = arith.divf %24, %25 : vector<16x128xf32>
    %27 = vector.extract_strided_slice %20 {offsets = [0, 128], sizes = [16, 128], strides = [1, 1]} : vector<16x512xf32> to vector<16x128xf32>
    %28 = arith.negf %27 : vector<16x128xf32>
    %29 = math.exp %28 : vector<16x128xf32>
    %cst_20 = arith.constant 1.000000e+00 : f32
    %30 = vector.broadcast %cst_20 : f32 to vector<16x128xf32>
    %31 = arith.addf %30, %29 : vector<16x128xf32>
    %32 = arith.divf %30, %31 : vector<16x128xf32>
    %33 = vector.extract_strided_slice %20 {offsets = [0, 256], sizes = [16, 128], strides = [1, 1]} : vector<16x512xf32> to vector<16x128xf32>
    %34 = math.tanh %33 : vector<16x128xf32>
    %35 = vector.extract_strided_slice %20 {offsets = [0, 384], sizes = [16, 128], strides = [1, 1]} : vector<16x512xf32> to vector<16x128xf32>
    %36 = arith.negf %35 : vector<16x128xf32>
    %37 = math.exp %36 : vector<16x128xf32>
    %cst_21 = arith.constant 1.000000e+00 : f32
    %38 = vector.broadcast %cst_21 : f32 to vector<16x128xf32>
    %39 = arith.addf %38, %37 : vector<16x128xf32>
    %40 = arith.divf %38, %39 : vector<16x128xf32>
    %41 = arith.mulf %32, %14 : vector<16x128xf32>
    %42 = arith.mulf %26, %34 : vector<16x128xf32>
    %43 = arith.addf %41, %42 : vector<16x128xf32>
    %44 = math.tanh %43 : vector<16x128xf32>
    %45 = arith.mulf %40, %44 : vector<16x128xf32>
    %46 = arith.truncf %45 : vector<16x128xf32> to vector<16x128xbf16>
    %47 = arith.index_cast %16 : i32 to index
    %c0_22 = arith.constant 0 : index
    %48 = vector.load %arg11[%47, %c0_22] : memref<128x128xbf16, #tpu.memory_space<vmem>>, vector<16x128xbf16>
    tpu.vector_store %arg11[%47, %c0_22], %46 {strides = array<i32>} : memref<128x128xbf16, #tpu.memory_space<vmem>>, vector<16x128xbf16>,
    %c1_i32 = arith.constant 1 : i32
    %c16_i32_23 = arith.constant 16 : i32
    %49 = arith.muli %c1_i32, %c16_i32_23 : i32
    %50 = tpu.assume_multiple %49, 16 : i32
    %51 = arith.index_cast %50 : i32 to index
    %c0_24 = arith.constant 0 : index
    %52 = vector.load %arg12[%51, %c0_24] : memref<128x512xf32, #tpu.memory_space<vmem>>, vector<16x512xf32>
    %cst_25 = arith.constant dense<0.000000e+00> : vector<16x512xf32>
    %53 = tpu.matmul %46, %10, %cst_25 {dimension_numbers = #tpu.dot_dimension_numbers<[1], [0], [0], [1], [0, 0, 1, 1], [], []>} : vector<16x128xbf16>, vector<128x512xbf16>, vector<16x512xf32> -> vector<16x512xf32>
    %54 = arith.addf %52, %53 : vector<16x512xf32>
    %55 = vector.extract_strided_slice %54 {offsets = [0, 0], sizes = [16, 128], strides = [1, 1]} : vector<16x512xf32> to vector<16x128xf32>
    %56 = arith.negf %55 : vector<16x128xf32>
    %57 = math.exp %56 : vector<16x128xf32>
    %cst_26 = arith.constant 1.000000e+00 : f32
    %58 = vector.broadcast %cst_26 : f32 to vector<16x128xf32>
    %59 = arith.addf %58, %57 : vector<16x128xf32>
    %60 = arith.divf %58, %59 : vector<16x128xf32>
    %61 = vector.extract_strided_slice %54 {offsets = [0, 128], sizes = [16, 128], strides = [1, 1]} : vector<16x512xf32> to vector<16x128xf32>
    %62 = arith.negf %61 : vector<16x128xf32>
    %63 = math.exp %62 : vector<16x128xf32>
    %cst_27 = arith.constant 1.000000e+00 : f32
    %64 = vector.broadcast %cst_27 : f32 to vector<16x128xf32>
    %65 = arith.addf %64, %63 : vector<16x128xf32>
    %66 = arith.divf %64, %65 : vector<16x128xf32>
    %67 = vector.extract_strided_slice %54 {offsets = [0, 256], sizes = [16, 128], strides = [1, 1]} : vector<16x512xf32> to vector<16x128xf32>
    %68 = math.tanh %67 : vector<16x128xf32>
    %69 = vector.extract_strided_slice %54 {offsets = [0, 384], sizes = [16, 128], strides = [1, 1]} : vector<16x512xf32> to vector<16x128xf32>
    %70 = arith.negf %69 : vector<16x128xf32>
    %71 = math.exp %70 : vector<16x128xf32>
    %cst_28 = arith.constant 1.000000e+00 : f32
    %72 = vector.broadcast %cst_28 : f32 to vector<16x128xf32>
    %73 = arith.addf %72, %71 : vector<16x128xf32>
    %74 = arith.divf %72, %73 : vector<16x128xf32>
    %75 = arith.mulf %66, %43 : vector<16x128xf32>
    %76 = arith.mulf %60, %68 : vector<16x128xf32>
    %77 = arith.addf %75, %76 : vector<16x128xf32>
    %78 = math.tanh %77 : vector<16x128xf32>
    %79 = arith.mulf %74, %78 : vector<16x128xf32>
    %80 = arith.truncf %79 : vector<16x128xf32> to vector<16x128xbf16>
    %81 = arith.index_cast %50 : i32 to index
    %c0_29 = arith.constant 0 : index
    %82 = vector.load %arg11[%81, %c0_29] : memref<128x128xbf16, #tpu.memory_space<vmem>>, vector<16x128xbf16>
    tpu.vector_store %arg11[%81, %c0_29], %80 {strides = array<i32>} : memref<128x128xbf16, #tpu.memory_space<vmem>>, vector<16x128xbf16>,
    %c2_i32 = arith.constant 2 : i32
    %c16_i32_30 = arith.constant 16 : i32
    %83 = arith.muli %c2_i32, %c16_i32_30 : i32
    %84 = tpu.assume_multiple %83, 16 : i32
    %85 = arith.index_cast %84 : i32 to index
    %c0_31 = arith.constant 0 : index
    %86 = vector.load %arg12[%85, %c0_31] : memref<128x512xf32, #tpu.memory_space<vmem>>, vector<16x512xf32>
    %cst_32 = arith.constant dense<0.000000e+00> : vector<16x512xf32>
    %87 = tpu.matmul %80, %10, %cst_32 {dimension_numbers = #tpu.dot_dimension_numbers<[1], [0], [0], [1], [0, 0, 1, 1], [], []>} : vector<16x128xbf16>, vector<128x512xbf16>, vector<16x512xf32> -> vector<16x512xf32>
    %88 = arith.addf %86, %87 : vector<16x512xf32>
    %89 = vector.extract_strided_slice %88 {offsets = [0, 0], sizes = [16, 128], strides = [1, 1]} : vector<16x512xf32> to vector<16x128xf32>
    %90 = arith.negf %89 : vector<16x128xf32>
    %91 = math.exp %90 : vector<16x128xf32>
    %cst_33 = arith.constant 1.000000e+00 : f32
    %92 = vector.broadcast %cst_33 : f32 to vector<16x128xf32>
    %93 = arith.addf %92, %91 : vector<16x128xf32>
    %94 = arith.divf %92, %93 : vector<16x128xf32>
    %95 = vector.extract_strided_slice %88 {offsets = [0, 128], sizes = [16, 128], strides = [1, 1]} : vector<16x512xf32> to vector<16x128xf32>
    %96 = arith.negf %95 : vector<16x128xf32>
    %97 = math.exp %96 : vector<16x128xf32>
    %cst_34 = arith.constant 1.000000e+00 : f32
    %98 = vector.broadcast %cst_34 : f32 to vector<16x128xf32>
    %99 = arith.addf %98, %97 : vector<16x128xf32>
    %100 = arith.divf %98, %99 : vector<16x128xf32>
    %101 = vector.extract_strided_slice %88 {offsets = [0, 256], sizes = [16, 128], strides = [1, 1]} : vector<16x512xf32> to vector<16x128xf32>
    %102 = math.tanh %101 : vector<16x128xf32>
    %103 = vector.extract_strided_slice %88 {offsets = [0, 384], sizes = [16, 128], strides = [1, 1]} : vector<16x512xf32> to vector<16x128xf32>
    %104 = arith.negf %103 : vector<16x128xf32>
    %105 = math.exp %104 : vector<16x128xf32>
    %cst_35 = arith.constant 1.000000e+00 : f32
    %106 = vector.broadcast %cst_35 : f32 to vector<16x128xf32>
    %107 = arith.addf %106, %105 : vector<16x128xf32>
    %108 = arith.divf %106, %107 : vector<16x128xf32>
    %109 = arith.mulf %100, %77 : vector<16x128xf32>
    %110 = arith.mulf %94, %102 : vector<16x128xf32>
    %111 = arith.addf %109, %110 : vector<16x128xf32>
    %112 = math.tanh %111 : vector<16x128xf32>
    %113 = arith.mulf %108, %112 : vector<16x128xf32>
    %114 = arith.truncf %113 : vector<16x128xf32> to vector<16x128xbf16>
    %115 = arith.index_cast %84 : i32 to index
    %c0_36 = arith.constant 0 : index
    %116 = vector.load %arg11[%115, %c0_36] : memref<128x128xbf16, #tpu.memory_space<vmem>>, vector<16x128xbf16>
    tpu.vector_store %arg11[%115, %c0_36], %114 {strides = array<i32>} : memref<128x128xbf16, #tpu.memory_space<vmem>>, vector<16x128xbf16>,
    %c3_i32 = arith.constant 3 : i32
    %c16_i32_37 = arith.constant 16 : i32
    %117 = arith.muli %c3_i32, %c16_i32_37 : i32
    %118 = tpu.assume_multiple %117, 16 : i32
    %119 = arith.index_cast %118 : i32 to index
    %c0_38 = arith.constant 0 : index
    %120 = vector.load %arg12[%119, %c0_38] : memref<128x512xf32, #tpu.memory_space<vmem>>, vector<16x512xf32>
    %cst_39 = arith.constant dense<0.000000e+00> : vector<16x512xf32>
    %121 = tpu.matmul %114, %10, %cst_39 {dimension_numbers = #tpu.dot_dimension_numbers<[1], [0], [0], [1], [0, 0, 1, 1], [], []>} : vector<16x128xbf16>, vector<128x512xbf16>, vector<16x512xf32> -> vector<16x512xf32>
    %122 = arith.addf %120, %121 : vector<16x512xf32>
    %123 = vector.extract_strided_slice %122 {offsets = [0, 0], sizes = [16, 128], strides = [1, 1]} : vector<16x512xf32> to vector<16x128xf32>
    %124 = arith.negf %123 : vector<16x128xf32>
    %125 = math.exp %124 : vector<16x128xf32>
    %cst_40 = arith.constant 1.000000e+00 : f32
    %126 = vector.broadcast %cst_40 : f32 to vector<16x128xf32>
    %127 = arith.addf %126, %125 : vector<16x128xf32>
    %128 = arith.divf %126, %127 : vector<16x128xf32>
    %129 = vector.extract_strided_slice %122 {offsets = [0, 128], sizes = [16, 128], strides = [1, 1]} : vector<16x512xf32> to vector<16x128xf32>
    %130 = arith.negf %129 : vector<16x128xf32>
    %131 = math.exp %130 : vector<16x128xf32>
    %cst_41 = arith.constant 1.000000e+00 : f32
    %132 = vector.broadcast %cst_41 : f32 to vector<16x128xf32>
    %133 = arith.addf %132, %131 : vector<16x128xf32>
    %134 = arith.divf %132, %133 : vector<16x128xf32>
    %135 = vector.extract_strided_slice %122 {offsets = [0, 256], sizes = [16, 128], strides = [1, 1]} : vector<16x512xf32> to vector<16x128xf32>
    %136 = math.tanh %135 : vector<16x128xf32>
    %137 = vector.extract_strided_slice %122 {offsets = [0, 384], sizes = [16, 128], strides = [1, 1]} : vector<16x512xf32> to vector<16x128xf32>
    %138 = arith.negf %137 : vector<16x128xf32>
    %139 = math.exp %138 : vector<16x128xf32>
    %cst_42 = arith.constant 1.000000e+00 : f32
    %140 = vector.broadcast %cst_42 : f32 to vector<16x128xf32>
    %141 = arith.addf %140, %139 : vector<16x128xf32>
    %142 = arith.divf %140, %141 : vector<16x128xf32>
    %143 = arith.mulf %134, %111 : vector<16x128xf32>
    %144 = arith.mulf %128, %136 : vector<16x128xf32>
    %145 = arith.addf %143, %144 : vector<16x128xf32>
    %146 = math.tanh %145 : vector<16x128xf32>
    %147 = arith.mulf %142, %146 : vector<16x128xf32>
    %148 = arith.truncf %147 : vector<16x128xf32> to vector<16x128xbf16>
    %149 = arith.index_cast %118 : i32 to index
    %c0_43 = arith.constant 0 : index
    %150 = vector.load %arg11[%149, %c0_43] : memref<128x128xbf16, #tpu.memory_space<vmem>>, vector<16x128xbf16>
    tpu.vector_store %arg11[%149, %c0_43], %148 {strides = array<i32>} : memref<128x128xbf16, #tpu.memory_space<vmem>>, vector<16x128xbf16>,
    %c4_i32 = arith.constant 4 : i32
    %c16_i32_44 = arith.constant 16 : i32
    %151 = arith.muli %c4_i32, %c16_i32_44 : i32
    %152 = tpu.assume_multiple %151, 16 : i32
    %153 = arith.index_cast %152 : i32 to index
    %c0_45 = arith.constant 0 : index
    %154 = vector.load %arg12[%153, %c0_45] : memref<128x512xf32, #tpu.memory_space<vmem>>, vector<16x512xf32>
    %cst_46 = arith.constant dense<0.000000e+00> : vector<16x512xf32>
    %155 = tpu.matmul %148, %10, %cst_46 {dimension_numbers = #tpu.dot_dimension_numbers<[1], [0], [0], [1], [0, 0, 1, 1], [], []>} : vector<16x128xbf16>, vector<128x512xbf16>, vector<16x512xf32> -> vector<16x512xf32>
    %156 = arith.addf %154, %155 : vector<16x512xf32>
    %157 = vector.extract_strided_slice %156 {offsets = [0, 0], sizes = [16, 128], strides = [1, 1]} : vector<16x512xf32> to vector<16x128xf32>
    %158 = arith.negf %157 : vector<16x128xf32>
    %159 = math.exp %158 : vector<16x128xf32>
    %cst_47 = arith.constant 1.000000e+00 : f32
    %160 = vector.broadcast %cst_47 : f32 to vector<16x128xf32>
    %161 = arith.addf %160, %159 : vector<16x128xf32>
    %162 = arith.divf %160, %161 : vector<16x128xf32>
    %163 = vector.extract_strided_slice %156 {offsets = [0, 128], sizes = [16, 128], strides = [1, 1]} : vector<16x512xf32> to vector<16x128xf32>
    %164 = arith.negf %163 : vector<16x128xf32>
    %165 = math.exp %164 : vector<16x128xf32>
    %cst_48 = arith.constant 1.000000e+00 : f32
    %166 = vector.broadcast %cst_48 : f32 to vector<16x128xf32>
    %167 = arith.addf %166, %165 : vector<16x128xf32>
    %168 = arith.divf %166, %167 : vector<16x128xf32>
    %169 = vector.extract_strided_slice %156 {offsets = [0, 256], sizes = [16, 128], strides = [1, 1]} : vector<16x512xf32> to vector<16x128xf32>
    %170 = math.tanh %169 : vector<16x128xf32>
    %171 = vector.extract_strided_slice %156 {offsets = [0, 384], sizes = [16, 128], strides = [1, 1]} : vector<16x512xf32> to vector<16x128xf32>
    %172 = arith.negf %171 : vector<16x128xf32>
    %173 = math.exp %172 : vector<16x128xf32>
    %cst_49 = arith.constant 1.000000e+00 : f32
    %174 = vector.broadcast %cst_49 : f32 to vector<16x128xf32>
    %175 = arith.addf %174, %173 : vector<16x128xf32>
    %176 = arith.divf %174, %175 : vector<16x128xf32>
    %177 = arith.mulf %168, %145 : vector<16x128xf32>
    %178 = arith.mulf %162, %170 : vector<16x128xf32>
    %179 = arith.addf %177, %178 : vector<16x128xf32>
    %180 = math.tanh %179 : vector<16x128xf32>
    %181 = arith.mulf %176, %180 : vector<16x128xf32>
    %182 = arith.truncf %181 : vector<16x128xf32> to vector<16x128xbf16>
    %183 = arith.index_cast %152 : i32 to index
    %c0_50 = arith.constant 0 : index
    %184 = vector.load %arg11[%183, %c0_50] : memref<128x128xbf16, #tpu.memory_space<vmem>>, vector<16x128xbf16>
    tpu.vector_store %arg11[%183, %c0_50], %182 {strides = array<i32>} : memref<128x128xbf16, #tpu.memory_space<vmem>>, vector<16x128xbf16>,
    %c5_i32 = arith.constant 5 : i32
    %c16_i32_51 = arith.constant 16 : i32
    %185 = arith.muli %c5_i32, %c16_i32_51 : i32
    %186 = tpu.assume_multiple %185, 16 : i32
    %187 = arith.index_cast %186 : i32 to index
    %c0_52 = arith.constant 0 : index
    %188 = vector.load %arg12[%187, %c0_52] : memref<128x512xf32, #tpu.memory_space<vmem>>, vector<16x512xf32>
    %cst_53 = arith.constant dense<0.000000e+00> : vector<16x512xf32>
    %189 = tpu.matmul %182, %10, %cst_53 {dimension_numbers = #tpu.dot_dimension_numbers<[1], [0], [0], [1], [0, 0, 1, 1], [], []>} : vector<16x128xbf16>, vector<128x512xbf16>, vector<16x512xf32> -> vector<16x512xf32>
    %190 = arith.addf %188, %189 : vector<16x512xf32>
    %191 = vector.extract_strided_slice %190 {offsets = [0, 0], sizes = [16, 128], strides = [1, 1]} : vector<16x512xf32> to vector<16x128xf32>
    %192 = arith.negf %191 : vector<16x128xf32>
    %193 = math.exp %192 : vector<16x128xf32>
    %cst_54 = arith.constant 1.000000e+00 : f32
    %194 = vector.broadcast %cst_54 : f32 to vector<16x128xf32>
    %195 = arith.addf %194, %193 : vector<16x128xf32>
    %196 = arith.divf %194, %195 : vector<16x128xf32>
    %197 = vector.extract_strided_slice %190 {offsets = [0, 128], sizes = [16, 128], strides = [1, 1]} : vector<16x512xf32> to vector<16x128xf32>
    %198 = arith.negf %197 : vector<16x128xf32>
    %199 = math.exp %198 : vector<16x128xf32>
    %cst_55 = arith.constant 1.000000e+00 : f32
    %200 = vector.broadcast %cst_55 : f32 to vector<16x128xf32>
    %201 = arith.addf %200, %199 : vector<16x128xf32>
    %202 = arith.divf %200, %201 : vector<16x128xf32>
    %203 = vector.extract_strided_slice %190 {offsets = [0, 256], sizes = [16, 128], strides = [1, 1]} : vector<16x512xf32> to vector<16x128xf32>
    %204 = math.tanh %203 : vector<16x128xf32>
    %205 = vector.extract_strided_slice %190 {offsets = [0, 384], sizes = [16, 128], strides = [1, 1]} : vector<16x512xf32> to vector<16x128xf32>
    %206 = arith.negf %205 : vector<16x128xf32>
    %207 = math.exp %206 : vector<16x128xf32>
    %cst_56 = arith.constant 1.000000e+00 : f32
    %208 = vector.broadcast %cst_56 : f32 to vector<16x128xf32>
    %209 = arith.addf %208, %207 : vector<16x128xf32>
    %210 = arith.divf %208, %209 : vector<16x128xf32>
    %211 = arith.mulf %202, %179 : vector<16x128xf32>
    %212 = arith.mulf %196, %204 : vector<16x128xf32>
    %213 = arith.addf %211, %212 : vector<16x128xf32>
    %214 = math.tanh %213 : vector<16x128xf32>
    %215 = arith.mulf %210, %214 : vector<16x128xf32>
    %216 = arith.truncf %215 : vector<16x128xf32> to vector<16x128xbf16>
    %217 = arith.index_cast %186 : i32 to index
    %c0_57 = arith.constant 0 : index
    %218 = vector.load %arg11[%217, %c0_57] : memref<128x128xbf16, #tpu.memory_space<vmem>>, vector<16x128xbf16>
    tpu.vector_store %arg11[%217, %c0_57], %216 {strides = array<i32>} : memref<128x128xbf16, #tpu.memory_space<vmem>>, vector<16x128xbf16>,
    %c6_i32 = arith.constant 6 : i32
    %c16_i32_58 = arith.constant 16 : i32
    %219 = arith.muli %c6_i32, %c16_i32_58 : i32
    %220 = tpu.assume_multiple %219, 16 : i32
    %221 = arith.index_cast %220 : i32 to index
    %c0_59 = arith.constant 0 : index
    %222 = vector.load %arg12[%221, %c0_59] : memref<128x512xf32, #tpu.memory_space<vmem>>, vector<16x512xf32>
    %cst_60 = arith.constant dense<0.000000e+00> : vector<16x512xf32>
    %223 = tpu.matmul %216, %10, %cst_60 {dimension_numbers = #tpu.dot_dimension_numbers<[1], [0], [0], [1], [0, 0, 1, 1], [], []>} : vector<16x128xbf16>, vector<128x512xbf16>, vector<16x512xf32> -> vector<16x512xf32>
    %224 = arith.addf %222, %223 : vector<16x512xf32>
    %225 = vector.extract_strided_slice %224 {offsets = [0, 0], sizes = [16, 128], strides = [1, 1]} : vector<16x512xf32> to vector<16x128xf32>
    %226 = arith.negf %225 : vector<16x128xf32>
    %227 = math.exp %226 : vector<16x128xf32>
    %cst_61 = arith.constant 1.000000e+00 : f32
    %228 = vector.broadcast %cst_61 : f32 to vector<16x128xf32>
    %229 = arith.addf %228, %227 : vector<16x128xf32>
    %230 = arith.divf %228, %229 : vector<16x128xf32>
    %231 = vector.extract_strided_slice %224 {offsets = [0, 128], sizes = [16, 128], strides = [1, 1]} : vector<16x512xf32> to vector<16x128xf32>
    %232 = arith.negf %231 : vector<16x128xf32>
    %233 = math.exp %232 : vector<16x128xf32>
    %cst_62 = arith.constant 1.000000e+00 : f32
    %234 = vector.broadcast %cst_62 : f32 to vector<16x128xf32>
    %235 = arith.addf %234, %233 : vector<16x128xf32>
    %236 = arith.divf %234, %235 : vector<16x128xf32>
    %237 = vector.extract_strided_slice %224 {offsets = [0, 256], sizes = [16, 128], strides = [1, 1]} : vector<16x512xf32> to vector<16x128xf32>
    %238 = math.tanh %237 : vector<16x128xf32>
    %239 = vector.extract_strided_slice %224 {offsets = [0, 384], sizes = [16, 128], strides = [1, 1]} : vector<16x512xf32> to vector<16x128xf32>
    %240 = arith.negf %239 : vector<16x128xf32>
    %241 = math.exp %240 : vector<16x128xf32>
    %cst_63 = arith.constant 1.000000e+00 : f32
    %242 = vector.broadcast %cst_63 : f32 to vector<16x128xf32>
    %243 = arith.addf %242, %241 : vector<16x128xf32>
    %244 = arith.divf %242, %243 : vector<16x128xf32>
    %245 = arith.mulf %236, %213 : vector<16x128xf32>
    %246 = arith.mulf %230, %238 : vector<16x128xf32>
    %247 = arith.addf %245, %246 : vector<16x128xf32>
    %248 = math.tanh %247 : vector<16x128xf32>
    %249 = arith.mulf %244, %248 : vector<16x128xf32>
    %250 = arith.truncf %249 : vector<16x128xf32> to vector<16x128xbf16>
    %251 = arith.index_cast %220 : i32 to index
    %c0_64 = arith.constant 0 : index
    %252 = vector.load %arg11[%251, %c0_64] : memref<128x128xbf16, #tpu.memory_space<vmem>>, vector<16x128xbf16>
    tpu.vector_store %arg11[%251, %c0_64], %250 {strides = array<i32>} : memref<128x128xbf16, #tpu.memory_space<vmem>>, vector<16x128xbf16>,
    %c7_i32 = arith.constant 7 : i32
    %c16_i32_65 = arith.constant 16 : i32
    %253 = arith.muli %c7_i32, %c16_i32_65 : i32
    %254 = tpu.assume_multiple %253, 16 : i32
    %255 = arith.index_cast %254 : i32 to index
    %c0_66 = arith.constant 0 : index
    %256 = vector.load %arg12[%255, %c0_66] : memref<128x512xf32, #tpu.memory_space<vmem>>, vector<16x512xf32>
    %cst_67 = arith.constant dense<0.000000e+00> : vector<16x512xf32>
    %257 = tpu.matmul %250, %10, %cst_67 {dimension_numbers = #tpu.dot_dimension_numbers<[1], [0], [0], [1], [0, 0, 1, 1], [], []>} : vector<16x128xbf16>, vector<128x512xbf16>, vector<16x512xf32> -> vector<16x512xf32>
    %258 = arith.addf %256, %257 : vector<16x512xf32>
    %259 = vector.extract_strided_slice %258 {offsets = [0, 0], sizes = [16, 128], strides = [1, 1]} : vector<16x512xf32> to vector<16x128xf32>
    %260 = arith.negf %259 : vector<16x128xf32>
    %261 = math.exp %260 : vector<16x128xf32>
    %cst_68 = arith.constant 1.000000e+00 : f32
    %262 = vector.broadcast %cst_68 : f32 to vector<16x128xf32>
    %263 = arith.addf %262, %261 : vector<16x128xf32>
    %264 = arith.divf %262, %263 : vector<16x128xf32>
    %265 = vector.extract_strided_slice %258 {offsets = [0, 128], sizes = [16, 128], strides = [1, 1]} : vector<16x512xf32> to vector<16x128xf32>
    %266 = arith.negf %265 : vector<16x128xf32>
    %267 = math.exp %266 : vector<16x128xf32>
    %cst_69 = arith.constant 1.000000e+00 : f32
    %268 = vector.broadcast %cst_69 : f32 to vector<16x128xf32>
    %269 = arith.addf %268, %267 : vector<16x128xf32>
    %270 = arith.divf %268, %269 : vector<16x128xf32>
    %271 = vector.extract_strided_slice %258 {offsets = [0, 256], sizes = [16, 128], strides = [1, 1]} : vector<16x512xf32> to vector<16x128xf32>
    %272 = math.tanh %271 : vector<16x128xf32>
    %273 = vector.extract_strided_slice %258 {offsets = [0, 384], sizes = [16, 128], strides = [1, 1]} : vector<16x512xf32> to vector<16x128xf32>
    %274 = arith.negf %273 : vector<16x128xf32>
    %275 = math.exp %274 : vector<16x128xf32>
    %cst_70 = arith.constant 1.000000e+00 : f32
    %276 = vector.broadcast %cst_70 : f32 to vector<16x128xf32>
    %277 = arith.addf %276, %275 : vector<16x128xf32>
    %278 = arith.divf %276, %277 : vector<16x128xf32>
    %279 = arith.mulf %270, %247 : vector<16x128xf32>
    %280 = arith.mulf %264, %272 : vector<16x128xf32>
    %281 = arith.addf %279, %280 : vector<16x128xf32>
    %282 = math.tanh %281 : vector<16x128xf32>
    %283 = arith.mulf %278, %282 : vector<16x128xf32>
    %284 = arith.truncf %283 : vector<16x128xf32> to vector<16x128xbf16>
    %285 = arith.index_cast %254 : i32 to index
    %c0_71 = arith.constant 0 : index
    %286 = vector.load %arg11[%285, %c0_71] : memref<128x128xbf16, #tpu.memory_space<vmem>>, vector<16x128xbf16>
    tpu.vector_store %arg11[%285, %c0_71], %284 {strides = array<i32>} : memref<128x128xbf16, #tpu.memory_space<vmem>>, vector<16x128xbf16>,
    %c8_i32 = arith.constant 8 : i32
    %c0_72 = arith.constant 0 : index
    %c0_73 = arith.constant 0 : index
    %c0_74 = arith.constant 0 : index
    %287 = vector.load %arg9[%c0_72, %c0_73, %c0_74] : memref<2x16x128xbf16, #tpu.memory_space<vmem>>, vector<1x16x128xbf16>
    %288 = vector.shape_cast %287 : vector<1x16x128xbf16> to vector<16x128xbf16>
    %289 = vector.shape_cast %284 : vector<16x128xbf16> to vector<1x16x128xbf16>
    tpu.vector_store %arg9[%c0_72, %c0_73, %c0_74], %289 {strides = array<i32>} : memref<2x16x128xbf16, #tpu.memory_space<vmem>>, vector<1x16x128xbf16>,
    %c0_75 = arith.constant 0 : index
    %c0_76 = arith.constant 0 : index
    %c0_77 = arith.constant 0 : index
    %290 = vector.load %arg10[%c0_75, %c0_76, %c0_77] : memref<2x16x128xf32, #tpu.memory_space<vmem>>, vector<1x16x128xf32>
    %291 = vector.shape_cast %290 : vector<1x16x128xf32> to vector<16x128xf32>
    %292 = vector.shape_cast %281 : vector<16x128xf32> to vector<1x16x128xf32>
    tpu.vector_store %arg10[%c0_75, %c0_76, %c0_77], %292 {strides = array<i32>} : memref<2x16x128xf32, #tpu.memory_space<vmem>>, vector<1x16x128xf32>,
    %c0_78 = arith.constant 0 : index
    %c0_79 = arith.constant 0 : index
    %293 = vector.load %arg11[%c0_78, %c0_79] : memref<128x128xbf16, #tpu.memory_space<vmem>>, vector<128x128xbf16>
    %c0_80 = arith.constant 0 : index
    %c0_81 = arith.constant 0 : index
    %294 = vector.load %arg5[%c0_80, %c0_81] : memref<128x512xbf16, #tpu.memory_space<vmem>>, vector<128x512xbf16>
    %cst_82 = arith.constant dense<0.000000e+00> : vector<128x512xf32>
    %295 = tpu.matmul %293, %294, %cst_82 {dimension_numbers = #tpu.dot_dimension_numbers<[1], [0], [0], [1], [0, 0, 1, 1], [], []>} : vector<128x128xbf16>, vector<128x512xbf16>, vector<128x512xf32> -> vector<128x512xf32>
    %c0_83 = arith.constant 0 : index
    %c0_84 = arith.constant 0 : index
    %296 = vector.load %arg7[%c0_83, %c0_84] : memref<1x512xf32, #tpu.memory_space<vmem>>, vector<1x512xf32>
    %297 = vector.broadcast %296 : vector<1x512xf32> to vector<128x512xf32>
    %298 = arith.addf %295, %297 : vector<128x512xf32>
    %c0_85 = arith.constant 0 : index
    %c0_86 = arith.constant 0 : index
    %299 = vector.load %arg12[%c0_85, %c0_86] : memref<128x512xf32, #tpu.memory_space<vmem>>, vector<128x512xf32>
    tpu.vector_store %arg12[%c0_85, %c0_86], %298 {strides = array<i32>} : memref<128x512xf32, #tpu.memory_space<vmem>>, vector<128x512xf32>,
    %c0_87 = arith.constant 0 : index
    %c0_88 = arith.constant 0 : index
    %300 = vector.load %arg6[%c0_87, %c0_88] : memref<128x512xbf16, #tpu.memory_space<vmem>>, vector<128x512xbf16>
    %c1 = arith.constant 1 : index
    %c0_89 = arith.constant 0 : index
    %c0_90 = arith.constant 0 : index
    %301 = vector.load %arg9[%c1, %c0_89, %c0_90] : memref<2x16x128xbf16, #tpu.memory_space<vmem>>, vector<1x16x128xbf16>
    %302 = vector.shape_cast %301 : vector<1x16x128xbf16> to vector<16x128xbf16>
    %c1_91 = arith.constant 1 : index
    %c0_92 = arith.constant 0 : index
    %c0_93 = arith.constant 0 : index
    %303 = vector.load %arg10[%c1_91, %c0_92, %c0_93] : memref<2x16x128xf32, #tpu.memory_space<vmem>>, vector<1x16x128xf32>
    %304 = vector.shape_cast %303 : vector<1x16x128xf32> to vector<16x128xf32>
    %c0_i32_94 = arith.constant 0 : i32
    %c16_i32_95 = arith.constant 16 : i32
    %305 = arith.muli %c0_i32_94, %c16_i32_95 : i32
    %306 = tpu.assume_multiple %305, 16 : i32
    %307 = arith.index_cast %306 : i32 to index
    %c0_96 = arith.constant 0 : index
    %308 = vector.load %arg12[%307, %c0_96] : memref<128x512xf32, #tpu.memory_space<vmem>>, vector<16x512xf32>
    %cst_97 = arith.constant dense<0.000000e+00> : vector<16x512xf32>
    %309 = tpu.matmul %302, %300, %cst_97 {dimension_numbers = #tpu.dot_dimension_numbers<[1], [0], [0], [1], [0, 0, 1, 1], [], []>} : vector<16x128xbf16>, vector<128x512xbf16>, vector<16x512xf32> -> vector<16x512xf32>
    %310 = arith.addf %308, %309 : vector<16x512xf32>
    %311 = vector.extract_strided_slice %310 {offsets = [0, 0], sizes = [16, 128], strides = [1, 1]} : vector<16x512xf32> to vector<16x128xf32>
    %312 = arith.negf %311 : vector<16x128xf32>
    %313 = math.exp %312 : vector<16x128xf32>
    %cst_98 = arith.constant 1.000000e+00 : f32
    %314 = vector.broadcast %cst_98 : f32 to vector<16x128xf32>
    %315 = arith.addf %314, %313 : vector<16x128xf32>
    %316 = arith.divf %314, %315 : vector<16x128xf32>
    %317 = vector.extract_strided_slice %310 {offsets = [0, 128], sizes = [16, 128], strides = [1, 1]} : vector<16x512xf32> to vector<16x128xf32>
    %318 = arith.negf %317 : vector<16x128xf32>
    %319 = math.exp %318 : vector<16x128xf32>
    %cst_99 = arith.constant 1.000000e+00 : f32
    %320 = vector.broadcast %cst_99 : f32 to vector<16x128xf32>
    %321 = arith.addf %320, %319 : vector<16x128xf32>
    %322 = arith.divf %320, %321 : vector<16x128xf32>
    %323 = vector.extract_strided_slice %310 {offsets = [0, 256], sizes = [16, 128], strides = [1, 1]} : vector<16x512xf32> to vector<16x128xf32>
    %324 = math.tanh %323 : vector<16x128xf32>
    %325 = vector.extract_strided_slice %310 {offsets = [0, 384], sizes = [16, 128], strides = [1, 1]} : vector<16x512xf32> to vector<16x128xf32>
    %326 = arith.negf %325 : vector<16x128xf32>
    %327 = math.exp %326 : vector<16x128xf32>
    %cst_100 = arith.constant 1.000000e+00 : f32
    %328 = vector.broadcast %cst_100 : f32 to vector<16x128xf32>
    %329 = arith.addf %328, %327 : vector<16x128xf32>
    %330 = arith.divf %328, %329 : vector<16x128xf32>
    %331 = arith.mulf %322, %304 : vector<16x128xf32>
    %332 = arith.mulf %316, %324 : vector<16x128xf32>
    %333 = arith.addf %331, %332 : vector<16x128xf32>
    %334 = math.tanh %333 : vector<16x128xf32>
    %335 = arith.mulf %330, %334 : vector<16x128xf32>
    %336 = arith.truncf %335 : vector<16x128xf32> to vector<16x128xbf16>
    %337 = arith.index_cast %306 : i32 to index
    %c0_101 = arith.constant 0 : index
    %338 = vector.load %arg8[%337, %c0_101] : memref<128x128xf32, #tpu.memory_space<vmem>>, vector<16x128xf32>
    tpu.vector_store %arg8[%337, %c0_101], %335 {strides = array<i32>} : memref<128x128xf32, #tpu.memory_space<vmem>>, vector<16x128xf32>,
    %c1_i32_102 = arith.constant 1 : i32
    %c16_i32_103 = arith.constant 16 : i32
    %339 = arith.muli %c1_i32_102, %c16_i32_103 : i32
    %340 = tpu.assume_multiple %339, 16 : i32
    %341 = arith.index_cast %340 : i32 to index
    %c0_104 = arith.constant 0 : index
    %342 = vector.load %arg12[%341, %c0_104] : memref<128x512xf32, #tpu.memory_space<vmem>>, vector<16x512xf32>
    %cst_105 = arith.constant dense<0.000000e+00> : vector<16x512xf32>
    %343 = tpu.matmul %336, %300, %cst_105 {dimension_numbers = #tpu.dot_dimension_numbers<[1], [0], [0], [1], [0, 0, 1, 1], [], []>} : vector<16x128xbf16>, vector<128x512xbf16>, vector<16x512xf32> -> vector<16x512xf32>
    %344 = arith.addf %342, %343 : vector<16x512xf32>
    %345 = vector.extract_strided_slice %344 {offsets = [0, 0], sizes = [16, 128], strides = [1, 1]} : vector<16x512xf32> to vector<16x128xf32>
    %346 = arith.negf %345 : vector<16x128xf32>
    %347 = math.exp %346 : vector<16x128xf32>
    %cst_106 = arith.constant 1.000000e+00 : f32
    %348 = vector.broadcast %cst_106 : f32 to vector<16x128xf32>
    %349 = arith.addf %348, %347 : vector<16x128xf32>
    %350 = arith.divf %348, %349 : vector<16x128xf32>
    %351 = vector.extract_strided_slice %344 {offsets = [0, 128], sizes = [16, 128], strides = [1, 1]} : vector<16x512xf32> to vector<16x128xf32>
    %352 = arith.negf %351 : vector<16x128xf32>
    %353 = math.exp %352 : vector<16x128xf32>
    %cst_107 = arith.constant 1.000000e+00 : f32
    %354 = vector.broadcast %cst_107 : f32 to vector<16x128xf32>
    %355 = arith.addf %354, %353 : vector<16x128xf32>
    %356 = arith.divf %354, %355 : vector<16x128xf32>
    %357 = vector.extract_strided_slice %344 {offsets = [0, 256], sizes = [16, 128], strides = [1, 1]} : vector<16x512xf32> to vector<16x128xf32>
    %358 = math.tanh %357 : vector<16x128xf32>
    %359 = vector.extract_strided_slice %344 {offsets = [0, 384], sizes = [16, 128], strides = [1, 1]} : vector<16x512xf32> to vector<16x128xf32>
    %360 = arith.negf %359 : vector<16x128xf32>
    %361 = math.exp %360 : vector<16x128xf32>
    %cst_108 = arith.constant 1.000000e+00 : f32
    %362 = vector.broadcast %cst_108 : f32 to vector<16x128xf32>
    %363 = arith.addf %362, %361 : vector<16x128xf32>
    %364 = arith.divf %362, %363 : vector<16x128xf32>
    %365 = arith.mulf %356, %333 : vector<16x128xf32>
    %366 = arith.mulf %350, %358 : vector<16x128xf32>
    %367 = arith.addf %365, %366 : vector<16x128xf32>
    %368 = math.tanh %367 : vector<16x128xf32>
    %369 = arith.mulf %364, %368 : vector<16x128xf32>
    %370 = arith.truncf %369 : vector<16x128xf32> to vector<16x128xbf16>
    %371 = arith.index_cast %340 : i32 to index
    %c0_109 = arith.constant 0 : index
    %372 = vector.load %arg8[%371, %c0_109] : memref<128x128xf32, #tpu.memory_space<vmem>>, vector<16x128xf32>
    tpu.vector_store %arg8[%371, %c0_109], %369 {strides = array<i32>} : memref<128x128xf32, #tpu.memory_space<vmem>>, vector<16x128xf32>,
    %c2_i32_110 = arith.constant 2 : i32
    %c16_i32_111 = arith.constant 16 : i32
    %373 = arith.muli %c2_i32_110, %c16_i32_111 : i32
    %374 = tpu.assume_multiple %373, 16 : i32
    %375 = arith.index_cast %374 : i32 to index
    %c0_112 = arith.constant 0 : index
    %376 = vector.load %arg12[%375, %c0_112] : memref<128x512xf32, #tpu.memory_space<vmem>>, vector<16x512xf32>
    %cst_113 = arith.constant dense<0.000000e+00> : vector<16x512xf32>
    %377 = tpu.matmul %370, %300, %cst_113 {dimension_numbers = #tpu.dot_dimension_numbers<[1], [0], [0], [1], [0, 0, 1, 1], [], []>} : vector<16x128xbf16>, vector<128x512xbf16>, vector<16x512xf32> -> vector<16x512xf32>
    %378 = arith.addf %376, %377 : vector<16x512xf32>
    %379 = vector.extract_strided_slice %378 {offsets = [0, 0], sizes = [16, 128], strides = [1, 1]} : vector<16x512xf32> to vector<16x128xf32>
    %380 = arith.negf %379 : vector<16x128xf32>
    %381 = math.exp %380 : vector<16x128xf32>
    %cst_114 = arith.constant 1.000000e+00 : f32
    %382 = vector.broadcast %cst_114 : f32 to vector<16x128xf32>
    %383 = arith.addf %382, %381 : vector<16x128xf32>
    %384 = arith.divf %382, %383 : vector<16x128xf32>
    %385 = vector.extract_strided_slice %378 {offsets = [0, 128], sizes = [16, 128], strides = [1, 1]} : vector<16x512xf32> to vector<16x128xf32>
    %386 = arith.negf %385 : vector<16x128xf32>
    %387 = math.exp %386 : vector<16x128xf32>
    %cst_115 = arith.constant 1.000000e+00 : f32
    %388 = vector.broadcast %cst_115 : f32 to vector<16x128xf32>
    %389 = arith.addf %388, %387 : vector<16x128xf32>
    %390 = arith.divf %388, %389 : vector<16x128xf32>
    %391 = vector.extract_strided_slice %378 {offsets = [0, 256], sizes = [16, 128], strides = [1, 1]} : vector<16x512xf32> to vector<16x128xf32>
    %392 = math.tanh %391 : vector<16x128xf32>
    %393 = vector.extract_strided_slice %378 {offsets = [0, 384], sizes = [16, 128], strides = [1, 1]} : vector<16x512xf32> to vector<16x128xf32>
    %394 = arith.negf %393 : vector<16x128xf32>
    %395 = math.exp %394 : vector<16x128xf32>
    %cst_116 = arith.constant 1.000000e+00 : f32
    %396 = vector.broadcast %cst_116 : f32 to vector<16x128xf32>
    %397 = arith.addf %396, %395 : vector<16x128xf32>
    %398 = arith.divf %396, %397 : vector<16x128xf32>
    %399 = arith.mulf %390, %367 : vector<16x128xf32>
    %400 = arith.mulf %384, %392 : vector<16x128xf32>
    %401 = arith.addf %399, %400 : vector<16x128xf32>
    %402 = math.tanh %401 : vector<16x128xf32>
    %403 = arith.mulf %398, %402 : vector<16x128xf32>
    %404 = arith.truncf %403 : vector<16x128xf32> to vector<16x128xbf16>
    %405 = arith.index_cast %374 : i32 to index
    %c0_117 = arith.constant 0 : index
    %406 = vector.load %arg8[%405, %c0_117] : memref<128x128xf32, #tpu.memory_space<vmem>>, vector<16x128xf32>
    tpu.vector_store %arg8[%405, %c0_117], %403 {strides = array<i32>} : memref<128x128xf32, #tpu.memory_space<vmem>>, vector<16x128xf32>,
    %c3_i32_118 = arith.constant 3 : i32
    %c16_i32_119 = arith.constant 16 : i32
    %407 = arith.muli %c3_i32_118, %c16_i32_119 : i32
    %408 = tpu.assume_multiple %407, 16 : i32
    %409 = arith.index_cast %408 : i32 to index
    %c0_120 = arith.constant 0 : index
    %410 = vector.load %arg12[%409, %c0_120] : memref<128x512xf32, #tpu.memory_space<vmem>>, vector<16x512xf32>
    %cst_121 = arith.constant dense<0.000000e+00> : vector<16x512xf32>
    %411 = tpu.matmul %404, %300, %cst_121 {dimension_numbers = #tpu.dot_dimension_numbers<[1], [0], [0], [1], [0, 0, 1, 1], [], []>} : vector<16x128xbf16>, vector<128x512xbf16>, vector<16x512xf32> -> vector<16x512xf32>
    %412 = arith.addf %410, %411 : vector<16x512xf32>
    %413 = vector.extract_strided_slice %412 {offsets = [0, 0], sizes = [16, 128], strides = [1, 1]} : vector<16x512xf32> to vector<16x128xf32>
    %414 = arith.negf %413 : vector<16x128xf32>
    %415 = math.exp %414 : vector<16x128xf32>
    %cst_122 = arith.constant 1.000000e+00 : f32
    %416 = vector.broadcast %cst_122 : f32 to vector<16x128xf32>
    %417 = arith.addf %416, %415 : vector<16x128xf32>
    %418 = arith.divf %416, %417 : vector<16x128xf32>
    %419 = vector.extract_strided_slice %412 {offsets = [0, 128], sizes = [16, 128], strides = [1, 1]} : vector<16x512xf32> to vector<16x128xf32>
    %420 = arith.negf %419 : vector<16x128xf32>
    %421 = math.exp %420 : vector<16x128xf32>
    %cst_123 = arith.constant 1.000000e+00 : f32
    %422 = vector.broadcast %cst_123 : f32 to vector<16x128xf32>
    %423 = arith.addf %422, %421 : vector<16x128xf32>
    %424 = arith.divf %422, %423 : vector<16x128xf32>
    %425 = vector.extract_strided_slice %412 {offsets = [0, 256], sizes = [16, 128], strides = [1, 1]} : vector<16x512xf32> to vector<16x128xf32>
    %426 = math.tanh %425 : vector<16x128xf32>
    %427 = vector.extract_strided_slice %412 {offsets = [0, 384], sizes = [16, 128], strides = [1, 1]} : vector<16x512xf32> to vector<16x128xf32>
    %428 = arith.negf %427 : vector<16x128xf32>
    %429 = math.exp %428 : vector<16x128xf32>
    %cst_124 = arith.constant 1.000000e+00 : f32
    %430 = vector.broadcast %cst_124 : f32 to vector<16x128xf32>
    %431 = arith.addf %430, %429 : vector<16x128xf32>
    %432 = arith.divf %430, %431 : vector<16x128xf32>
    %433 = arith.mulf %424, %401 : vector<16x128xf32>
    %434 = arith.mulf %418, %426 : vector<16x128xf32>
    %435 = arith.addf %433, %434 : vector<16x128xf32>
    %436 = math.tanh %435 : vector<16x128xf32>
    %437 = arith.mulf %432, %436 : vector<16x128xf32>
    %438 = arith.truncf %437 : vector<16x128xf32> to vector<16x128xbf16>
    %439 = arith.index_cast %408 : i32 to index
    %c0_125 = arith.constant 0 : index
    %440 = vector.load %arg8[%439, %c0_125] : memref<128x128xf32, #tpu.memory_space<vmem>>, vector<16x128xf32>
    tpu.vector_store %arg8[%439, %c0_125], %437 {strides = array<i32>} : memref<128x128xf32, #tpu.memory_space<vmem>>, vector<16x128xf32>,
    %c4_i32_126 = arith.constant 4 : i32
    %c16_i32_127 = arith.constant 16 : i32
    %441 = arith.muli %c4_i32_126, %c16_i32_127 : i32
    %442 = tpu.assume_multiple %441, 16 : i32
    %443 = arith.index_cast %442 : i32 to index
    %c0_128 = arith.constant 0 : index
    %444 = vector.load %arg12[%443, %c0_128] : memref<128x512xf32, #tpu.memory_space<vmem>>, vector<16x512xf32>
    %cst_129 = arith.constant dense<0.000000e+00> : vector<16x512xf32>
    %445 = tpu.matmul %438, %300, %cst_129 {dimension_numbers = #tpu.dot_dimension_numbers<[1], [0], [0], [1], [0, 0, 1, 1], [], []>} : vector<16x128xbf16>, vector<128x512xbf16>, vector<16x512xf32> -> vector<16x512xf32>
    %446 = arith.addf %444, %445 : vector<16x512xf32>
    %447 = vector.extract_strided_slice %446 {offsets = [0, 0], sizes = [16, 128], strides = [1, 1]} : vector<16x512xf32> to vector<16x128xf32>
    %448 = arith.negf %447 : vector<16x128xf32>
    %449 = math.exp %448 : vector<16x128xf32>
    %cst_130 = arith.constant 1.000000e+00 : f32
    %450 = vector.broadcast %cst_130 : f32 to vector<16x128xf32>
    %451 = arith.addf %450, %449 : vector<16x128xf32>
    %452 = arith.divf %450, %451 : vector<16x128xf32>
    %453 = vector.extract_strided_slice %446 {offsets = [0, 128], sizes = [16, 128], strides = [1, 1]} : vector<16x512xf32> to vector<16x128xf32>
    %454 = arith.negf %453 : vector<16x128xf32>
    %455 = math.exp %454 : vector<16x128xf32>
    %cst_131 = arith.constant 1.000000e+00 : f32
    %456 = vector.broadcast %cst_131 : f32 to vector<16x128xf32>
    %457 = arith.addf %456, %455 : vector<16x128xf32>
    %458 = arith.divf %456, %457 : vector<16x128xf32>
    %459 = vector.extract_strided_slice %446 {offsets = [0, 256], sizes = [16, 128], strides = [1, 1]} : vector<16x512xf32> to vector<16x128xf32>
    %460 = math.tanh %459 : vector<16x128xf32>
    %461 = vector.extract_strided_slice %446 {offsets = [0, 384], sizes = [16, 128], strides = [1, 1]} : vector<16x512xf32> to vector<16x128xf32>
    %462 = arith.negf %461 : vector<16x128xf32>
    %463 = math.exp %462 : vector<16x128xf32>
    %cst_132 = arith.constant 1.000000e+00 : f32
    %464 = vector.broadcast %cst_132 : f32 to vector<16x128xf32>
    %465 = arith.addf %464, %463 : vector<16x128xf32>
    %466 = arith.divf %464, %465 : vector<16x128xf32>
    %467 = arith.mulf %458, %435 : vector<16x128xf32>
    %468 = arith.mulf %452, %460 : vector<16x128xf32>
    %469 = arith.addf %467, %468 : vector<16x128xf32>
    %470 = math.tanh %469 : vector<16x128xf32>
    %471 = arith.mulf %466, %470 : vector<16x128xf32>
    %472 = arith.truncf %471 : vector<16x128xf32> to vector<16x128xbf16>
    %473 = arith.index_cast %442 : i32 to index
    %c0_133 = arith.constant 0 : index
    %474 = vector.load %arg8[%473, %c0_133] : memref<128x128xf32, #tpu.memory_space<vmem>>, vector<16x128xf32>
    tpu.vector_store %arg8[%473, %c0_133], %471 {strides = array<i32>} : memref<128x128xf32, #tpu.memory_space<vmem>>, vector<16x128xf32>,
    %c5_i32_134 = arith.constant 5 : i32
    %c16_i32_135 = arith.constant 16 : i32
    %475 = arith.muli %c5_i32_134, %c16_i32_135 : i32
    %476 = tpu.assume_multiple %475, 16 : i32
    %477 = arith.index_cast %476 : i32 to index
    %c0_136 = arith.constant 0 : index
    %478 = vector.load %arg12[%477, %c0_136] : memref<128x512xf32, #tpu.memory_space<vmem>>, vector<16x512xf32>
    %cst_137 = arith.constant dense<0.000000e+00> : vector<16x512xf32>
    %479 = tpu.matmul %472, %300, %cst_137 {dimension_numbers = #tpu.dot_dimension_numbers<[1], [0], [0], [1], [0, 0, 1, 1], [], []>} : vector<16x128xbf16>, vector<128x512xbf16>, vector<16x512xf32> -> vector<16x512xf32>
    %480 = arith.addf %478, %479 : vector<16x512xf32>
    %481 = vector.extract_strided_slice %480 {offsets = [0, 0], sizes = [16, 128], strides = [1, 1]} : vector<16x512xf32> to vector<16x128xf32>
    %482 = arith.negf %481 : vector<16x128xf32>
    %483 = math.exp %482 : vector<16x128xf32>
    %cst_138 = arith.constant 1.000000e+00 : f32
    %484 = vector.broadcast %cst_138 : f32 to vector<16x128xf32>
    %485 = arith.addf %484, %483 : vector<16x128xf32>
    %486 = arith.divf %484, %485 : vector<16x128xf32>
    %487 = vector.extract_strided_slice %480 {offsets = [0, 128], sizes = [16, 128], strides = [1, 1]} : vector<16x512xf32> to vector<16x128xf32>
    %488 = arith.negf %487 : vector<16x128xf32>
    %489 = math.exp %488 : vector<16x128xf32>
    %cst_139 = arith.constant 1.000000e+00 : f32
    %490 = vector.broadcast %cst_139 : f32 to vector<16x128xf32>
    %491 = arith.addf %490, %489 : vector<16x128xf32>
    %492 = arith.divf %490, %491 : vector<16x128xf32>
    %493 = vector.extract_strided_slice %480 {offsets = [0, 256], sizes = [16, 128], strides = [1, 1]} : vector<16x512xf32> to vector<16x128xf32>
    %494 = math.tanh %493 : vector<16x128xf32>
    %495 = vector.extract_strided_slice %480 {offsets = [0, 384], sizes = [16, 128], strides = [1, 1]} : vector<16x512xf32> to vector<16x128xf32>
    %496 = arith.negf %495 : vector<16x128xf32>
    %497 = math.exp %496 : vector<16x128xf32>
    %cst_140 = arith.constant 1.000000e+00 : f32
    %498 = vector.broadcast %cst_140 : f32 to vector<16x128xf32>
    %499 = arith.addf %498, %497 : vector<16x128xf32>
    %500 = arith.divf %498, %499 : vector<16x128xf32>
    %501 = arith.mulf %492, %469 : vector<16x128xf32>
    %502 = arith.mulf %486, %494 : vector<16x128xf32>
    %503 = arith.addf %501, %502 : vector<16x128xf32>
    %504 = math.tanh %503 : vector<16x128xf32>
    %505 = arith.mulf %500, %504 : vector<16x128xf32>
    %506 = arith.truncf %505 : vector<16x128xf32> to vector<16x128xbf16>
    %507 = arith.index_cast %476 : i32 to index
    %c0_141 = arith.constant 0 : index
    %508 = vector.load %arg8[%507, %c0_141] : memref<128x128xf32, #tpu.memory_space<vmem>>, vector<16x128xf32>
    tpu.vector_store %arg8[%507, %c0_141], %505 {strides = array<i32>} : memref<128x128xf32, #tpu.memory_space<vmem>>, vector<16x128xf32>,
    %c6_i32_142 = arith.constant 6 : i32
    %c16_i32_143 = arith.constant 16 : i32
    %509 = arith.muli %c6_i32_142, %c16_i32_143 : i32
    %510 = tpu.assume_multiple %509, 16 : i32
    %511 = arith.index_cast %510 : i32 to index
    %c0_144 = arith.constant 0 : index
    %512 = vector.load %arg12[%511, %c0_144] : memref<128x512xf32, #tpu.memory_space<vmem>>, vector<16x512xf32>
    %cst_145 = arith.constant dense<0.000000e+00> : vector<16x512xf32>
    %513 = tpu.matmul %506, %300, %cst_145 {dimension_numbers = #tpu.dot_dimension_numbers<[1], [0], [0], [1], [0, 0, 1, 1], [], []>} : vector<16x128xbf16>, vector<128x512xbf16>, vector<16x512xf32> -> vector<16x512xf32>
    %514 = arith.addf %512, %513 : vector<16x512xf32>
    %515 = vector.extract_strided_slice %514 {offsets = [0, 0], sizes = [16, 128], strides = [1, 1]} : vector<16x512xf32> to vector<16x128xf32>
    %516 = arith.negf %515 : vector<16x128xf32>
    %517 = math.exp %516 : vector<16x128xf32>
    %cst_146 = arith.constant 1.000000e+00 : f32
    %518 = vector.broadcast %cst_146 : f32 to vector<16x128xf32>
    %519 = arith.addf %518, %517 : vector<16x128xf32>
    %520 = arith.divf %518, %519 : vector<16x128xf32>
    %521 = vector.extract_strided_slice %514 {offsets = [0, 128], sizes = [16, 128], strides = [1, 1]} : vector<16x512xf32> to vector<16x128xf32>
    %522 = arith.negf %521 : vector<16x128xf32>
    %523 = math.exp %522 : vector<16x128xf32>
    %cst_147 = arith.constant 1.000000e+00 : f32
    %524 = vector.broadcast %cst_147 : f32 to vector<16x128xf32>
    %525 = arith.addf %524, %523 : vector<16x128xf32>
    %526 = arith.divf %524, %525 : vector<16x128xf32>
    %527 = vector.extract_strided_slice %514 {offsets = [0, 256], sizes = [16, 128], strides = [1, 1]} : vector<16x512xf32> to vector<16x128xf32>
    %528 = math.tanh %527 : vector<16x128xf32>
    %529 = vector.extract_strided_slice %514 {offsets = [0, 384], sizes = [16, 128], strides = [1, 1]} : vector<16x512xf32> to vector<16x128xf32>
    %530 = arith.negf %529 : vector<16x128xf32>
    %531 = math.exp %530 : vector<16x128xf32>
    %cst_148 = arith.constant 1.000000e+00 : f32
    %532 = vector.broadcast %cst_148 : f32 to vector<16x128xf32>
    %533 = arith.addf %532, %531 : vector<16x128xf32>
    %534 = arith.divf %532, %533 : vector<16x128xf32>
    %535 = arith.mulf %526, %503 : vector<16x128xf32>
    %536 = arith.mulf %520, %528 : vector<16x128xf32>
    %537 = arith.addf %535, %536 : vector<16x128xf32>
    %538 = math.tanh %537 : vector<16x128xf32>
    %539 = arith.mulf %534, %538 : vector<16x128xf32>
    %540 = arith.truncf %539 : vector<16x128xf32> to vector<16x128xbf16>
    %541 = arith.index_cast %510 : i32 to index
    %c0_149 = arith.constant 0 : index
    %542 = vector.load %arg8[%541, %c0_149] : memref<128x128xf32, #tpu.memory_space<vmem>>, vector<16x128xf32>
    tpu.vector_store %arg8[%541, %c0_149], %539 {strides = array<i32>} : memref<128x128xf32, #tpu.memory_space<vmem>>, vector<16x128xf32>,
    %c7_i32_150 = arith.constant 7 : i32
    %c16_i32_151 = arith.constant 16 : i32
    %543 = arith.muli %c7_i32_150, %c16_i32_151 : i32
    %544 = tpu.assume_multiple %543, 16 : i32
    %545 = arith.index_cast %544 : i32 to index
    %c0_152 = arith.constant 0 : index
    %546 = vector.load %arg12[%545, %c0_152] : memref<128x512xf32, #tpu.memory_space<vmem>>, vector<16x512xf32>
    %cst_153 = arith.constant dense<0.000000e+00> : vector<16x512xf32>
    %547 = tpu.matmul %540, %300, %cst_153 {dimension_numbers = #tpu.dot_dimension_numbers<[1], [0], [0], [1], [0, 0, 1, 1], [], []>} : vector<16x128xbf16>, vector<128x512xbf16>, vector<16x512xf32> -> vector<16x512xf32>
    %548 = arith.addf %546, %547 : vector<16x512xf32>
    %549 = vector.extract_strided_slice %548 {offsets = [0, 0], sizes = [16, 128], strides = [1, 1]} : vector<16x512xf32> to vector<16x128xf32>
    %550 = arith.negf %549 : vector<16x128xf32>
    %551 = math.exp %550 : vector<16x128xf32>
    %cst_154 = arith.constant 1.000000e+00 : f32
    %552 = vector.broadcast %cst_154 : f32 to vector<16x128xf32>
    %553 = arith.addf %552, %551 : vector<16x128xf32>
    %554 = arith.divf %552, %553 : vector<16x128xf32>
    %555 = vector.extract_strided_slice %548 {offsets = [0, 128], sizes = [16, 128], strides = [1, 1]} : vector<16x512xf32> to vector<16x128xf32>
    %556 = arith.negf %555 : vector<16x128xf32>
    %557 = math.exp %556 : vector<16x128xf32>
    %cst_155 = arith.constant 1.000000e+00 : f32
    %558 = vector.broadcast %cst_155 : f32 to vector<16x128xf32>
    %559 = arith.addf %558, %557 : vector<16x128xf32>
    %560 = arith.divf %558, %559 : vector<16x128xf32>
    %561 = vector.extract_strided_slice %548 {offsets = [0, 256], sizes = [16, 128], strides = [1, 1]} : vector<16x512xf32> to vector<16x128xf32>
    %562 = math.tanh %561 : vector<16x128xf32>
    %563 = vector.extract_strided_slice %548 {offsets = [0, 384], sizes = [16, 128], strides = [1, 1]} : vector<16x512xf32> to vector<16x128xf32>
    %564 = arith.negf %563 : vector<16x128xf32>
    %565 = math.exp %564 : vector<16x128xf32>
    %cst_156 = arith.constant 1.000000e+00 : f32
    %566 = vector.broadcast %cst_156 : f32 to vector<16x128xf32>
    %567 = arith.addf %566, %565 : vector<16x128xf32>
    %568 = arith.divf %566, %567 : vector<16x128xf32>
    %569 = arith.mulf %560, %537 : vector<16x128xf32>
    %570 = arith.mulf %554, %562 : vector<16x128xf32>
    %571 = arith.addf %569, %570 : vector<16x128xf32>
    %572 = math.tanh %571 : vector<16x128xf32>
    %573 = arith.mulf %568, %572 : vector<16x128xf32>
    %574 = arith.truncf %573 : vector<16x128xf32> to vector<16x128xbf16>
    %575 = arith.index_cast %544 : i32 to index
    %c0_157 = arith.constant 0 : index
    %576 = vector.load %arg8[%575, %c0_157] : memref<128x128xf32, #tpu.memory_space<vmem>>, vector<16x128xf32>
    tpu.vector_store %arg8[%575, %c0_157], %573 {strides = array<i32>} : memref<128x128xf32, #tpu.memory_space<vmem>>, vector<16x128xf32>,
    %c8_i32_158 = arith.constant 8 : i32
    %c1_159 = arith.constant 1 : index
    %c0_160 = arith.constant 0 : index
    %c0_161 = arith.constant 0 : index
    %577 = vector.load %arg9[%c1_159, %c0_160, %c0_161] : memref<2x16x128xbf16, #tpu.memory_space<vmem>>, vector<1x16x128xbf16>
    %578 = vector.shape_cast %577 : vector<1x16x128xbf16> to vector<16x128xbf16>
    %579 = vector.shape_cast %574 : vector<16x128xbf16> to vector<1x16x128xbf16>
    tpu.vector_store %arg9[%c1_159, %c0_160, %c0_161], %579 {strides = array<i32>} : memref<2x16x128xbf16, #tpu.memory_space<vmem>>, vector<1x16x128xbf16>,
    %c1_162 = arith.constant 1 : index
    %c0_163 = arith.constant 0 : index
    %c0_164 = arith.constant 0 : index
    %580 = vector.load %arg10[%c1_162, %c0_163, %c0_164] : memref<2x16x128xf32, #tpu.memory_space<vmem>>, vector<1x16x128xf32>
    %581 = vector.shape_cast %580 : vector<1x16x128xf32> to vector<16x128xf32>
    %582 = vector.shape_cast %571 : vector<16x128xf32> to vector<1x16x128xf32>
    tpu.vector_store %arg10[%c1_162, %c0_163, %c0_164], %582 {strides = array<i32>} : memref<2x16x128xf32, #tpu.memory_space<vmem>>, vector<1x16x128xf32>,
    return
  }
  func.func @transform_0(%arg0: i32) -> (i32, i32) {
    %c0_i32 = arith.constant 0 : i32
    %c0_i32_0 = arith.constant 0 : i32
    return %arg0, %c0_i32 : i32, i32
  }
  func.func @transform_1(%arg0: i32) -> (i32, i32) {
    %c0_i32 = arith.constant 0 : i32
    %c0_i32_0 = arith.constant 0 : i32
    %c0_i32_1 = arith.constant 0 : i32
    return %c0_i32, %c0_i32_0 : i32, i32
  }
  func.func @transform_2(%arg0: i32) -> (i32, i32) {
    %c0_i32 = arith.constant 0 : i32
    %c0_i32_0 = arith.constant 0 : i32
    %c0_i32_1 = arith.constant 0 : i32
    return %c0_i32, %c0_i32_0 : i32, i32
  }
  func.func @transform_3(%arg0: i32) -> (i32, i32) {
    %c0_i32 = arith.constant 0 : i32
    %c0_i32_0 = arith.constant 0 : i32
    %c0_i32_1 = arith.constant 0 : i32
    return %c0_i32, %c0_i32_0 : i32, i32
  }
  func.func @transform_4(%arg0: i32) -> (i32, i32) {
    %c0_i32 = arith.constant 0 : i32
    %c0_i32_0 = arith.constant 0 : i32
    %c0_i32_1 = arith.constant 0 : i32
    return %c0_i32, %c0_i32_0 : i32, i32
  }
  func.func @transform_5(%arg0: i32) -> (i32, i32) {
    %c0_i32 = arith.constant 0 : i32
    %c0_i32_0 = arith.constant 0 : i32
    %c0_i32_1 = arith.constant 0 : i32
    return %c0_i32, %c0_i32_0 : i32, i32
  }
  func.func @transform_6(%arg0: i32) -> (i32, i32) {
    %c0_i32 = arith.constant 0 : i32
    %c0_i32_0 = arith.constant 0 : i32
    %c0_i32_1 = arith.constant 0 : i32
    return %c0_i32, %c0_i32_0 : i32, i32
  }
  func.func @transform_7(%arg0: i32) -> (i32, i32) {
    %c0_i32 = arith.constant 0 : i32
    %c0_i32_0 = arith.constant 0 : i32
    return %arg0, %c0_i32 : i32, i32
  }
}

</mosaic_0001>

<llo_original>
// kernel: tpu_custom_call.1
$region0: #{tpu_custom_call.1}
  #allocation0 [shape = 'u32[]', space=smem, size = 0x4, offset = 0x4, fixed_abs, tag = 'smem constant byte address 0x4 - core index']
  #allocation1 [shape = 'u32[144,128]{1,0:T(1,128)}', space=vmem, size = 0x12000, scoped, tag = 'internal scratch']
  #allocation2 [shape = 'bf16[2,16,128]{2,1,0:T(16,128)(2,1)}', space=vmem, size = 0x2000, scoped, tag = 'scratch operand']
  #allocation3 [shape = 'f32[2,16,128]{2,1,0:T(8,128)}', space=vmem, size = 0x4000, scoped, tag = 'scratch operand']
  #allocation4 [shape = 'bf16[128,128]{1,0:T(16,128)(2,1)}', space=vmem, size = 0x8000, scoped, tag = 'scratch operand']
  #allocation5 [shape = 'f32[128,512]{1,0:T(8,128)}', space=vmem, size = 0x40000, scoped, tag = 'scratch operand']
  %s0 = inlined_call_operand.hbm [shape: bf16[128,128], index: 0, kind: input, shape index: {}]
  %s1 = inlined_call_operand.hbm [shape: bf16[128,512], index: 1, kind: input, shape index: {}]
  %s2 = inlined_call_operand.hbm [shape: bf16[128,512], index: 2, kind: input, shape index: {}]
  %s3 = inlined_call_operand.vmem [shape: f32[1,512], index: 3, kind: input, shape index: {}]
  %s4 = inlined_call_operand.hbm [shape: bf16[128,512], index: 4, kind: input, shape index: {}]
  %s5 = inlined_call_operand.hbm [shape: bf16[128,512], index: 5, kind: input, shape index: {}]
  %s6 = inlined_call_operand.vmem [shape: f32[1,512], index: 6, kind: input, shape index: {}]
  %s7 = inlined_call_operand.hbm [shape: f32[128,128], index: 7, kind: output, shape index: {}]
  %s8 = sld [smem:[#allocation0]]
  $region62: #{tpu_custom_call.1} parent=0
    _
  %s10 = ssub.s32 1, %s8
  %s11 = scalar_select 0, %s10, %s8
  $region1: #{tpu_custom_call.1} parent=0
    #allocation6 [shape = 'u8[32768]{0}', space=vmem, size = 0x8000, scoped, tag = 'input window, operand 0, single buffered']
    #allocation7 [shape = 's32[1]{0}', space=sflag, size = 0x4, scoped, tag = 'scoped memory for tpu_custom_call.1']
    #allocation8 [shape = 's32[1]{0}', space=sflag, size = 0x4, scoped, tag = 'scoped memory for tpu_custom_call.1']
    #allocation9 [shape = 'u8[131072]{0}', space=vmem, size = 0x20000, scoped, tag = 'input window, operand 1, single buffered']
    #allocation10 [shape = 's32[1]{0}', space=sflag, size = 0x4, scoped, tag = 'scoped memory for tpu_custom_call.1']
    #allocation11 [shape = 'u8[131072]{0}', space=vmem, size = 0x20000, scoped, tag = 'input window, operand 2, single buffered']
    #allocation12 [shape = 'u8[131072]{0}', space=vmem, size = 0x20000, scoped, tag = 'input window, operand 4, single buffered']
    #allocation13 [shape = 's32[1]{0}', space=sflag, size = 0x4, scoped, tag = 'scoped memory for tpu_custom_call.1']
    #allocation14 [shape = 'u8[131072]{0}', space=vmem, size = 0x20000, scoped, tag = 'input window, operand 5, single buffered']
    #allocation15 [shape = 'u8[65536]{0}', space=vmem, size = 0x10000, scoped, tag = 'output window, operand 0, single buffered']
    %12 = vsyncpa [#allocation7], 0
    %13 = vsyncpa [#allocation10], 0
    %14 = vsyncpa [#allocation13], 0
    %15 = vsyncpa [#allocation8], 0
    // Predicated region
    $region2: #{tpu_custom_call.1} parent=1 // pred_check
      _
    $region3: #{tpu_custom_call.1} parent=1 // pred_check_branch
      %17 = sbr.rel (0) target = $region5
    $region4: #{tpu_custom_call.1} parent=1 // pred_region
      %s19 = ssub.s32 1024, 1024
      %20 = vsyncadd [#allocation7], %s19
      %s21 = sshll.u32 [#allocation6], 4
      %s22 = int_to_ptr.vmem [resolvable:$true] %s21
      %27 = dma.hbm_to_vmem [thread:$0]  %s0, 1024, %s22, [#allocation7], 64, 64, 4
    $region5: #{tpu_custom_call.1} parent=1 // pred_fallthru
      _
    // Predicated region
    $region6: #{tpu_custom_call.1} parent=1 // pred_check
      _
    $region7: #{tpu_custom_call.1} parent=1 // pred_check_branch
      %29 = sbr.rel (0) target = $region9
    $region8: #{tpu_custom_call.1} parent=1 // pred_region
      %s31 = ssub.s32 4096, 4096
      %32 = vsyncadd [#allocation10], %s31
      %s33 = sshll.u32 [#allocation9], 4
      %s34 = int_to_ptr.vmem [resolvable:$true] %s33
      %39 = dma.hbm_to_vmem [thread:$0]  %s1, 4096, %s34, [#allocation10], 256, 256, 16
    $region9: #{tpu_custom_call.1} parent=1 // pred_fallthru
      _
    // Predicated region
    $region10: #{tpu_custom_call.1} parent=1 // pred_check
      _
    $region11: #{tpu_custom_call.1} parent=1 // pred_check_branch
      %41 = sbr.rel (0) target = $region13
    $region12: #{tpu_custom_call.1} parent=1 // pred_region
      %s43 = ssub.s32 4096, 4096
      %44 = vsyncadd [#allocation10], %s43
      %s45 = sshll.u32 [#allocation11], 4
      %s46 = int_to_ptr.vmem [resolvable:$true] %s45
      %51 = dma.hbm_to_vmem [thread:$0]  %s2, 4096, %s46, [#allocation10], 256, 256, 16
    $region13: #{tpu_custom_call.1} parent=1 // pred_fallthru
      _
    // Predicated region
    $region14: #{tpu_custom_call.1} parent=1 // pred_check
      _
    $region15: #{tpu_custom_call.1} parent=1 // pred_check_branch
      %53 = sbr.rel (0) target = $region17
    $region16: #{tpu_custom_call.1} parent=1 // pred_region
      _
    $region17: #{tpu_custom_call.1} parent=1 // pred_fallthru
      _
    // Predicated region
    $region18: #{tpu_custom_call.1} parent=1 // pred_check
      _
    $region19: #{tpu_custom_call.1} parent=1 // pred_check_branch
      %55 = sbr.rel (0) target = $region21
    $region20: #{tpu_custom_call.1} parent=1 // pred_region
      %s57 = ssub.s32 4096, 4096
      %58 = vsyncadd [#allocation13], %s57
      %s59 = sshll.u32 [#allocation12], 4
      %s60 = int_to_ptr.vmem [resolvable:$true] %s59
      %65 = dma.hbm_to_vmem [thread:$0]  %s4, 4096, %s60, [#allocation13], 256, 256, 16
    $region21: #{tpu_custom_call.1} parent=1 // pred_fallthru
      _
    // Predicated region
    $region22: #{tpu_custom_call.1} parent=1 // pred_check
      _
    $region23: #{tpu_custom_call.1} parent=1 // pred_check_branch
      %67 = sbr.rel (0) target = $region25
    $region24: #{tpu_custom_call.1} parent=1 // pred_region
      %s69 = ssub.s32 4096, 4096
      %70 = vsyncadd [#allocation13], %s69
      %s71 = sshll.u32 [#allocation14], 4
      %s72 = int_to_ptr.vmem [resolvable:$true] %s71
      %77 = dma.hbm_to_vmem [thread:$0]  %s5, 4096, %s72, [#allocation13], 256, 256, 16
    $region25: #{tpu_custom_call.1} parent=1 // pred_fallthru
      _
    // Predicated region
    $region26: #{tpu_custom_call.1} parent=1 // pred_check
      _
    $region27: #{tpu_custom_call.1} parent=1 // pred_check_branch
      %79 = sbr.rel (0) target = $region29
    $region28: #{tpu_custom_call.1} parent=1 // pred_region
      _
    $region29: #{tpu_custom_call.1} parent=1 // pred_fallthru
      _
    // Predicated region
    $region30: #{tpu_custom_call.1} parent=1 // pred_check
      _
    $region31: #{tpu_custom_call.1} parent=1 // pred_check_branch
      %81 = sbr.rel (0) target = $region33
    $region32: #{tpu_custom_call.1} parent=1 // pred_region
      %82 = dma.done [#allocation7], 1024
    $region33: #{tpu_custom_call.1} parent=1 // pred_fallthru
      _
    // Predicated region
    $region34: #{tpu_custom_call.1} parent=1 // pred_check
      _
    $region35: #{tpu_custom_call.1} parent=1 // pred_check_branch
      %84 = sbr.rel (0) target = $region37
    $region36: #{tpu_custom_call.1} parent=1 // pred_region
      %85 = dma.done [#allocation10], 4096
    $region37: #{tpu_custom_call.1} parent=1 // pred_fallthru
      _
    // Predicated region
    $region38: #{tpu_custom_call.1} parent=1 // pred_check
      _
    $region39: #{tpu_custom_call.1} parent=1 // pred_check_branch
      %87 = sbr.rel (0) target = $region41
    $region40: #{tpu_custom_call.1} parent=1 // pred_region
      %88 = dma.done [#allocation10], 4096
    $region41: #{tpu_custom_call.1} parent=1 // pred_fallthru
      _
    // Predicated region
    $region42: #{tpu_custom_call.1} parent=1 // pred_check
      _
    $region43: #{tpu_custom_call.1} parent=1 // pred_check_branch
      %90 = sbr.rel (0) target = $region45
    $region44: #{tpu_custom_call.1} parent=1 // pred_region
      %91 = dma.done [#allocation13], 4096
    $region45: #{tpu_custom_call.1} parent=1 // pred_fallthru
      _
    // Predicated region
    $region46: #{tpu_custom_call.1} parent=1 // pred_check
      _
    $region47: #{tpu_custom_call.1} parent=1 // pred_check_branch
      %93 = sbr.rel (0) target = $region49
    $region48: #{tpu_custom_call.1} parent=1 // pred_region
      %94 = dma.done [#allocation13], 4096
    $region49: #{tpu_custom_call.1} parent=1 // pred_fallthru
      _
    %p96 = scmp.eq.s32.totalorder 0, 0
    // Predicated region
    $region50: #{tpu_custom_call.1} parent=1 // pred_check
      %p97 = pneg %p96
    $region51: #{tpu_custom_call.1} parent=1 // pred_check_branch
      %99 = sbr.rel (%p97) target = $region53
    $region52: #{tpu_custom_call.1} parent=1 // pred_region
      %100 = vst [vmem:[#allocation2] sm:$0xff] 0
      %101 = vst [vmem:[#allocation2 + $0x8] sm:$0xff] 0
      %102 = vst [vmem:[#allocation3] sm:$0xff] 0.0
      %103 = vst [vmem:[#allocation3 + $0x8] sm:$0xff] 0.0
      %104 = vst [vmem:[#allocation3 + $0x10] sm:$0xff] 0.0
      %105 = vst [vmem:[#allocation3 + $0x18] sm:$0xff] 0.0
    $region53: #{tpu_custom_call.1} parent=1 // pred_fallthru
      _
    %v106 = vld [vmem:[#allocation6] sm:$0xf]
    %v107 = vld [vmem:[#allocation6 + $0x4] sm:$0xf]
    %v108 = vld [vmem:[#allocation6 + $0x8] sm:$0xf]
    %v109 = vld [vmem:[#allocation6 + $0xc] sm:$0xf]
    %v110 = vld [vmem:[#allocation6 + $0x10] sm:$0xf]
    %v111 = vld [vmem:[#allocation6 + $0x14] sm:$0xf]
    %v112 = vld [vmem:[#allocation6 + $0x18] sm:$0xf]
    %v113 = vld [vmem:[#allocation6 + $0x1c] sm:$0xf]
    %v114 = vld [vmem:[#allocation6 + $0x20] sm:$0xf]
    %v115 = vld [vmem:[#allocation6 + $0x24] sm:$0xf]
    %v116 = vld [vmem:[#allocation6 + $0x28] sm:$0xf]
    %v117 = vld [vmem:[#allocation6 + $0x2c] sm:$0xf]
    %v118 = vld [vmem:[#allocation6 + $0x30] sm:$0xf]
    %v119 = vld [vmem:[#allocation6 + $0x34] sm:$0xf]
    %v120 = vld [vmem:[#allocation6 + $0x38] sm:$0xf]
    %v121 = vld [vmem:[#allocation6 + $0x3c] sm:$0xf]
    %v122 = vld [vmem:[#allocation9] sm:$0xff]
    %v123 = vld [vmem:[#allocation9 + $0x8] sm:$0xff]
    %v124 = vld [vmem:[#allocation9 + $0x10] sm:$0xff]
    %v125 = vld [vmem:[#allocation9 + $0x18] sm:$0xff]
    %v126 = vld [vmem:[#allocation9 + $0x20] sm:$0xff]
    %v127 = vld [vmem:[#allocation9 + $0x28] sm:$0xff]
    %v128 = vld [vmem:[#allocation9 + $0x30] sm:$0xff]
    %v129 = vld [vmem:[#allocation9 + $0x38] sm:$0xff]
    %v130 = vld [vmem:[#allocation9 + $0x40] sm:$0xff]
    %v131 = vld [vmem:[#allocation9 + $0x48] sm:$0xff]
    %v132 = vld [vmem:[#allocation9 + $0x50] sm:$0xff]
    %v133 = vld [vmem:[#allocation9 + $0x58] sm:$0xff]
    %v134 = vld [vmem:[#allocation9 + $0x60] sm:$0xff]
    %v135 = vld [vmem:[#allocation9 + $0x68] sm:$0xff]
    %v136 = vld [vmem:[#allocation9 + $0x70] sm:$0xff]
    %v137 = vld [vmem:[#allocation9 + $0x78] sm:$0xff]
    %v138 = vld [vmem:[#allocation9 + $0x80] sm:$0xff]
    %v139 = vld [vmem:[#allocation9 + $0x88] sm:$0xff]
    %v140 = vld [vmem:[#allocation9 + $0x90] sm:$0xff]
    %v141 = vld [vmem:[#allocation9 + $0x98] sm:$0xff]
    %v142 = vld [vmem:[#allocation9 + $0xa0] sm:$0xff]
    %v143 = vld [vmem:[#allocation9 + $0xa8] sm:$0xff]
    %v144 = vld [vmem:[#allocation9 + $0xb0] sm:$0xff]
    %v145 = vld [vmem:[#allocation9 + $0xb8] sm:$0xff]
    %v146 = vld [vmem:[#allocation9 + $0xc0] sm:$0xff]
    %v147 = vld [vmem:[#allocation9 + $0xc8] sm:$0xff]
    %v148 = vld [vmem:[#allocation9 + $0xd0] sm:$0xff]
    %v149 = vld [vmem:[#allocation9 + $0xd8] sm:$0xff]
    %v150 = vld [vmem:[#allocation9 + $0xe0] sm:$0xff]
    %v151 = vld [vmem:[#allocation9 + $0xe8] sm:$0xff]
    %v152 = vld [vmem:[#allocation9 + $0xf0] sm:$0xff]
    %v153 = vld [vmem:[#allocation9 + $0xf8] sm:$0xff]
    %v154 = vld [vmem:[%s3] sm:$0xf]
    %v156 = vlaneseq
    %v157 = vshrl.u32 %v156, 7
    %v158 = vsub.s32 0, %v157
    %v159 = vrot.slane %v154, %v158
    %v160 = vlaneseq
    %v161 = vshrl.u32 %v160, 7
    %v162 = vsub.s32 1, %v161
    %v163 = vrot.slane %v154, %v162
    %v164 = vlaneseq
    %v165 = vshrl.u32 %v164, 7
    %v166 = vsub.s32 2, %v165
    %v167 = vrot.slane %v154, %v166
    %v168 = vlaneseq
    %v169 = vshrl.u32 %v168, 7
    %v170 = vsub.s32 3, %v169
    %v171 = vrot.slane %v154, %v170
    %v192 = vunpack.c.l.b16 %v106
    %v193 = vunpack.c.l.b16 %v107
    %v194 = vunpack.c.l.b16 %v108
    %v195 = vunpack.c.l.b16 %v109
    %v196 = vunpack.c.l.b16 %v110
    %v197 = vunpack.c.l.b16 %v111
    %v198 = vunpack.c.l.b16 %v112
    %v199 = vunpack.c.l.b16 %v113
    %v200 = vunpack.c.l.b16 %v114
    %v201 = vunpack.c.l.b16 %v115
    %v202 = vunpack.c.l.b16 %v116
    %v203 = vunpack.c.l.b16 %v117
    %v204 = vunpack.c.l.b16 %v118
    %v205 = vunpack.c.l.b16 %v119
    %v206 = vunpack.c.l.b16 %v120
    %v207 = vunpack.c.l.b16 %v121
    %v208 = vpack.c.b16 %v193, %v192
    %v209 = vpack.c.b16 %v195, %v194
    %v210 = vpack.c.b16 %v197, %v196
    %v211 = vpack.c.b16 %v199, %v198
    %v212 = vpack.c.b16 %v201, %v200
    %v213 = vpack.c.b16 %v203, %v202
    %v214 = vpack.c.b16 %v205, %v204
    %v215 = vpack.c.b16 %v207, %v206
    %v256 = vunpack.c.l.b16 %v122
    %v257 = vunpack.c.h.b16 %v122
    %v258 = vunpack.c.l.b16 %v123
    %v259 = vunpack.c.h.b16 %v123
    %v260 = vunpack.c.l.b16 %v124
    %v261 = vunpack.c.h.b16 %v124
    %v262 = vunpack.c.l.b16 %v125
    %v263 = vunpack.c.h.b16 %v125
    %v264 = vunpack.c.l.b16 %v126
    %v265 = vunpack.c.h.b16 %v126
    %v266 = vunpack.c.l.b16 %v127
    %v267 = vunpack.c.h.b16 %v127
    %v268 = vunpack.c.l.b16 %v128
    %v269 = vunpack.c.h.b16 %v128
    %v270 = vunpack.c.l.b16 %v129
    %v271 = vunpack.c.h.b16 %v129
    %v272 = vunpack.c.l.b16 %v130
    %v273 = vunpack.c.h.b16 %v130
    %v274 = vunpack.c.l.b16 %v131
    %v275 = vunpack.c.h.b16 %v131
    %v276 = vunpack.c.l.b16 %v132
    %v277 = vunpack.c.h.b16 %v132
    %v278 = vunpack.c.l.b16 %v133
    %v279 = vunpack.c.h.b16 %v133
    %v280 = vunpack.c.l.b16 %v134
    %v281 = vunpack.c.h.b16 %v134
    %v282 = vunpack.c.l.b16 %v135
    %v283 = vunpack.c.h.b16 %v135
    %v284 = vunpack.c.l.b16 %v136
    %v285 = vunpack.c.h.b16 %v136
    %v286 = vunpack.c.l.b16 %v137
    %v287 = vunpack.c.h.b16 %v137
    %v288 = vunpack.c.l.b16 %v138
    %v289 = vunpack.c.h.b16 %v138
    %v290 = vunpack.c.l.b16 %v139
    %v291 = vunpack.c.h.b16 %v139
    %v292 = vunpack.c.l.b16 %v140
    %v293 = vunpack.c.h.b16 %v140
    %v294 = vunpack.c.l.b16 %v141
    %v295 = vunpack.c.h.b16 %v141
    %v296 = vunpack.c.l.b16 %v142
    %v297 = vunpack.c.h.b16 %v142
    %v298 = vunpack.c.l.b16 %v143
    %v299 = vunpack.c.h.b16 %v143
    %v300 = vunpack.c.l.b16 %v144
    %v301 = vunpack.c.h.b16 %v144
    %v302 = vunpack.c.l.b16 %v145
    %v303 = vunpack.c.h.b16 %v145
    %v304 = vunpack.c.l.b16 %v146
    %v305 = vunpack.c.h.b16 %v146
    %v306 = vunpack.c.l.b16 %v147
    %v307 = vunpack.c.h.b16 %v147
    %v308 = vunpack.c.l.b16 %v148
    %v309 = vunpack.c.h.b16 %v148
    %v310 = vunpack.c.l.b16 %v149
    %v311 = vunpack.c.h.b16 %v149
    %v312 = vunpack.c.l.b16 %v150
    %v313 = vunpack.c.h.b16 %v150
    %v314 = vunpack.c.l.b16 %v151
    %v315 = vunpack.c.h.b16 %v151
    %v316 = vunpack.c.l.b16 %v152
    %v317 = vunpack.c.h.b16 %v152
    %v318 = vunpack.c.l.b16 %v153
    %v319 = vunpack.c.h.b16 %v153
    %v320 = vpack.c.b16 %v260, %v256
    %v321 = vpack.c.b16 %v261, %v257
    %v322 = vpack.c.b16 %v262, %v258
    %v323 = vpack.c.b16 %v263, %v259
    %v324 = vpack.c.b16 %v268, %v264
    %v325 = vpack.c.b16 %v269, %v265
    %v326 = vpack.c.b16 %v270, %v266
    %v327 = vpack.c.b16 %v271, %v267
    %v328 = vpack.c.b16 %v276, %v272
    %v329 = vpack.c.b16 %v277, %v273
    %v330 = vpack.c.b16 %v278, %v274
    %v331 = vpack.c.b16 %v279, %v275
    %v332 = vpack.c.b16 %v284, %v280
    %v333 = vpack.c.b16 %v285, %v281
    %v334 = vpack.c.b16 %v286, %v282
    %v335 = vpack.c.b16 %v287, %v283
    %v336 = vpack.c.b16 %v292, %v288
    %v337 = vpack.c.b16 %v293, %v289
    %v338 = vpack.c.b16 %v294, %v290
    %v339 = vpack.c.b16 %v295, %v291
    %v340 = vpack.c.b16 %v300, %v296
    %v341 = vpack.c.b16 %v301, %v297
    %v342 = vpack.c.b16 %v302, %v298
    %v343 = vpack.c.b16 %v303, %v299
    %v344 = vpack.c.b16 %v308, %v304
    %v345 = vpack.c.b16 %v309, %v305
    %v346 = vpack.c.b16 %v310, %v306
    %v347 = vpack.c.b16 %v311, %v307
    %v348 = vpack.c.b16 %v316, %v312
    %v349 = vpack.c.b16 %v317, %v313
    %v350 = vpack.c.b16 %v318, %v314
    %v351 = vpack.c.b16 %v319, %v315
    %384 = vmatprep.subr.bf16.mxu0 %v321
    %385 = vmatpush1.bf16.msra.mxu0 %v320
    %386 = vmatprep.subr.bf16.mxu0 %v325
    %387 = vmatpush1.bf16.msra.mxu0 %v324
    %388 = vmatprep.subr.bf16.mxu0 %v329
    %389 = vmatpush1.bf16.msra.mxu0 %v328
    %390 = vmatprep.subr.bf16.mxu0 %v333
    %391 = vmatpush1.bf16.msra.mxu0 %v332
    %392 = vmatprep.subr.bf16.mxu0 %v337
    %393 = vmatpush1.bf16.msra.mxu0 %v336
    %394 = vmatprep.subr.bf16.mxu0 %v341
    %395 = vmatpush1.bf16.msra.mxu0 %v340
    %396 = vmatprep.subr.bf16.mxu0 %v345
    %397 = vmatpush1.bf16.msra.mxu0 %v344
    %398 = vmatprep.subr.bf16.mxu0 %v349
    %399 = vmatpush1.bf16.msra.mxu0 %v348
    %400 = vmatprep.subr.bf16.mxu0 0
    %401 = vmatpush1.bf16.msra.mxu0 0
    %402 = vmatprep.subr.bf16.mxu0 0
    %403 = vmatpush1.bf16.msra.mxu0 0
    %404 = vmatprep.subr.bf16.mxu0 0
    %405 = vmatpush1.bf16.msra.mxu0 0
    %406 = vmatprep.subr.bf16.mxu0 0
    %407 = vmatpush1.bf16.msra.mxu0 0
    %408 = vmatprep.subr.bf16.mxu0 0
    %409 = vmatpush1.bf16.msra.mxu0 0
    %410 = vmatprep.subr.bf16.mxu0 0
    %411 = vmatpush1.bf16.msra.mxu0 0
    %412 = vmatprep.subr.bf16.mxu0 0
    %413 = vmatpush1.bf16.msra.mxu0 0
    %414 = vmatprep.subr.bf16.mxu0 0
    %415 = vmatpush1.bf16.msra.mxu0 0
    %416 = vmatprep.mubr.bf16.mxu0 0
    %417 = vmatmul.mubr.bf16.gmra.mrb[0].mxu0 %v208
    %v418 = vpop.f32.mrb[0].mxu0
    %v419 = vadd.f32 %v159, %v418
    %v420 = vpop.f32.mrb[0].mxu0
    %v421 = vadd.f32 %v163, %v420
    %v422 = vpop.f32.mrb[0].mxu0
    %v423 = vadd.f32 %v159, %v422
    %v424 = vpop.f32.mrb[0].mxu0
    %v425 = vadd.f32 %v163, %v424
    %426 = vmatprep.mubr.bf16.mxu0 0
    %427 = vmatmul.mubr.bf16.gmra.mrb[0].mxu0 %v209
    %v428 = vpop.f32.mrb[0].mxu0
    %v429 = vadd.f32 %v159, %v428
    %v430 = vpop.f32.mrb[0].mxu0
    %v431 = vadd.f32 %v163, %v430
    %v432 = vpop.f32.mrb[0].mxu0
    %v433 = vadd.f32 %v159, %v432
    %v434 = vpop.f32.mrb[0].mxu0
    %v435 = vadd.f32 %v163, %v434
    %436 = vmatprep.mubr.bf16.mxu0 0
    %437 = vmatmul.mubr.bf16.gmra.mrb[0].mxu0 %v210
    %v438 = vpop.f32.mrb[0].mxu0
    %v439 = vadd.f32 %v159, %v438
    %v440 = vpop.f32.mrb[0].mxu0
    %v441 = vadd.f32 %v163, %v440
    %v442 = vpop.f32.mrb[0].mxu0
    %v443 = vadd.f32 %v159, %v442
    %v444 = vpop.f32.mrb[0].mxu0
    %v445 = vadd.f32 %v163, %v444
    %446 = vmatprep.mubr.bf16.mxu0 0
    %447 = vmatmul.mubr.bf16.gmra.mrb[0].mxu0 %v211
    %v448 = vpop.f32.mrb[0].mxu0
    %v449 = vadd.f32 %v159, %v448
    %v450 = vpop.f32.mrb[0].mxu0
    %v451 = vadd.f32 %v163, %v450
    %v452 = vpop.f32.mrb[0].mxu0
    %v453 = vadd.f32 %v159, %v452
    %v454 = vpop.f32.mrb[0].mxu0
    %v455 = vadd.f32 %v163, %v454
    %456 = vmatprep.mubr.bf16.mxu0 0
    %457 = vmatmul.mubr.bf16.gmra.mrb[0].mxu0 %v212
    %v458 = vpop.f32.mrb[0].mxu0
    %v459 = vadd.f32 %v159, %v458
    %v460 = vpop.f32.mrb[0].mxu0
    %v461 = vadd.f32 %v163, %v460
    %v462 = vpop.f32.mrb[0].mxu0
    %v463 = vadd.f32 %v159, %v462
    %v464 = vpop.f32.mrb[0].mxu0
    %v465 = vadd.f32 %v163, %v464
    %466 = vmatprep.mubr.bf16.mxu0 0
    %467 = vmatmul.mubr.bf16.gmra.mrb[0].mxu0 %v213
    %v468 = vpop.f32.mrb[0].mxu0
    %v469 = vadd.f32 %v159, %v468
    %v470 = vpop.f32.mrb[0].mxu0
    %v471 = vadd.f32 %v163, %v470
    %v472 = vpop.f32.mrb[0].mxu0
    %v473 = vadd.f32 %v159, %v472
    %v474 = vpop.f32.mrb[0].mxu0
    %v475 = vadd.f32 %v163, %v474
    %476 = vmatprep.mubr.bf16.mxu0 0
    %477 = vmatmul.mubr.bf16.gmra.mrb[0].mxu0 %v214
    %v478 = vpop.f32.mrb[0].mxu0
    %v479 = vadd.f32 %v159, %v478
    %v480 = vpop.f32.mrb[0].mxu0
    %v481 = vadd.f32 %v163, %v480
    %v482 = vpop.f32.mrb[0].mxu0
    %v483 = vadd.f32 %v159, %v482
    %v484 = vpop.f32.mrb[0].mxu0
    %v485 = vadd.f32 %v163, %v484
    %486 = vmatprep.mubr.bf16.mxu0 0
    %487 = vmatmul.mubr.bf16.gmra.mrb[0].mxu0 %v215
    %v488 = vpop.f32.mrb[0].mxu0
    %v489 = vadd.f32 %v159, %v488
    %v490 = vpop.f32.mrb[0].mxu0
    %v491 = vadd.f32 %v163, %v490
    %v492 = vpop.f32.mrb[0].mxu0
    %v493 = vadd.f32 %v159, %v492
    %v494 = vpop.f32.mrb[0].mxu0
    %v495 = vadd.f32 %v163, %v494
    %496 = vdwg.mxu0
    %497 = vmatprep.subr.bf16.mxu0 %v323
    %498 = vmatpush1.bf16.msra.mxu0 %v322
    %499 = vmatprep.subr.bf16.mxu0 %v327
    %500 = vmatpush1.bf16.msra.mxu0 %v326
    %501 = vmatprep.subr.bf16.mxu0 %v331
    %502 = vmatpush1.bf16.msra.mxu0 %v330
    %503 = vmatprep.subr.bf16.mxu0 %v335
    %504 = vmatpush1.bf16.msra.mxu0 %v334
    %505 = vmatprep.subr.bf16.mxu0 %v339
    %506 = vmatpush1.bf16.msra.mxu0 %v338
    %507 = vmatprep.subr.bf16.mxu0 %v343
    %508 = vmatpush1.bf16.msra.mxu0 %v342
    %509 = vmatprep.subr.bf16.mxu0 %v347
    %510 = vmatpush1.bf16.msra.mxu0 %v346
    %511 = vmatprep.subr.bf16.mxu0 %v351
    %512 = vmatpush1.bf16.msra.mxu0 %v350
    %513 = vmatprep.subr.bf16.mxu0 0
    %514 = vmatpush1.bf16.msra.mxu0 0
    %515 = vmatprep.subr.bf16.mxu0 0
    %516 = vmatpush1.bf16.msra.mxu0 0
    %517 = vmatprep.subr.bf16.mxu0 0
    %518 = vmatpush1.bf16.msra.mxu0 0
    %519 = vmatprep.subr.bf16.mxu0 0
    %520 = vmatpush1.bf16.msra.mxu0 0
    %521 = vmatprep.subr.bf16.mxu0 0
    %522 = vmatpush1.bf16.msra.mxu0 0
    %523 = vmatprep.subr.bf16.mxu0 0
    %524 = vmatpush1.bf16.msra.mxu0 0
    %525 = vmatprep.subr.bf16.mxu0 0
    %526 = vmatpush1.bf16.msra.mxu0 0
    %527 = vmatprep.subr.bf16.mxu0 0
    %528 = vmatpush1.bf16.msra.mxu0 0
    %529 = vmatprep.mubr.bf16.mxu0 0
    %530 = vmatmul.mubr.bf16.gmra.mrb[0].mxu0 %v208
    %v531 = vpop.f32.mrb[0].mxu0
    %v532 = vadd.f32 %v167, %v531
    %v533 = vpop.f32.mrb[0].mxu0
    %v534 = vadd.f32 %v171, %v533
    %v535 = vpop.f32.mrb[0].mxu0
    %v536 = vadd.f32 %v167, %v535
    %v537 = vpop.f32.mrb[0].mxu0
    %v538 = vadd.f32 %v171, %v537
    %539 = vmatprep.mubr.bf16.mxu0 0
    %540 = vmatmul.mubr.bf16.gmra.mrb[0].mxu0 %v209
    %v541 = vpop.f32.mrb[0].mxu0
    %v542 = vadd.f32 %v167, %v541
    %v543 = vpop.f32.mrb[0].mxu0
    %v544 = vadd.f32 %v171, %v543
    %v545 = vpop.f32.mrb[0].mxu0
    %v546 = vadd.f32 %v167, %v545
    %v547 = vpop.f32.mrb[0].mxu0
    %v548 = vadd.f32 %v171, %v547
    %549 = vmatprep.mubr.bf16.mxu0 0
    %550 = vmatmul.mubr.bf16.gmra.mrb[0].mxu0 %v210
    %v551 = vpop.f32.mrb[0].mxu0
    %v552 = vadd.f32 %v167, %v551
    %v553 = vpop.f32.mrb[0].mxu0
    %v554 = vadd.f32 %v171, %v553
    %v555 = vpop.f32.mrb[0].mxu0
    %v556 = vadd.f32 %v167, %v555
    %v557 = vpop.f32.mrb[0].mxu0
    %v558 = vadd.f32 %v171, %v557
    %559 = vmatprep.mubr.bf16.mxu0 0
    %560 = vmatmul.mubr.bf16.gmra.mrb[0].mxu0 %v211
    %v561 = vpop.f32.mrb[0].mxu0
    %v562 = vadd.f32 %v167, %v561
    %v563 = vpop.f32.mrb[0].mxu0
    %v564 = vadd.f32 %v171, %v563
    %v565 = vpop.f32.mrb[0].mxu0
    %v566 = vadd.f32 %v167, %v565
    %v567 = vpop.f32.mrb[0].mxu0
    %v568 = vadd.f32 %v171, %v567
    %569 = vmatprep.mubr.bf16.mxu0 0
    %570 = vmatmul.mubr.bf16.gmra.mrb[0].mxu0 %v212
    %v571 = vpop.f32.mrb[0].mxu0
    %v572 = vadd.f32 %v167, %v571
    %v573 = vpop.f32.mrb[0].mxu0
    %v574 = vadd.f32 %v171, %v573
    %v575 = vpop.f32.mrb[0].mxu0
    %v576 = vadd.f32 %v167, %v575
    %v577 = vpop.f32.mrb[0].mxu0
    %v578 = vadd.f32 %v171, %v577
    %579 = vmatprep.mubr.bf16.mxu0 0
    %580 = vmatmul.mubr.bf16.gmra.mrb[0].mxu0 %v213
    %v581 = vpop.f32.mrb[0].mxu0
    %v582 = vadd.f32 %v167, %v581
    %v583 = vpop.f32.mrb[0].mxu0
    %v584 = vadd.f32 %v171, %v583
    %v585 = vpop.f32.mrb[0].mxu0
    %v586 = vadd.f32 %v167, %v585
    %v587 = vpop.f32.mrb[0].mxu0
    %v588 = vadd.f32 %v171, %v587
    %589 = vmatprep.mubr.bf16.mxu0 0
    %590 = vmatmul.mubr.bf16.gmra.mrb[0].mxu0 %v214
    %v591 = vpop.f32.mrb[0].mxu0
    %v592 = vadd.f32 %v167, %v591
    %v593 = vpop.f32.mrb[0].mxu0
    %v594 = vadd.f32 %v171, %v593
    %v595 = vpop.f32.mrb[0].mxu0
    %v596 = vadd.f32 %v167, %v595
    %v597 = vpop.f32.mrb[0].mxu0
    %v598 = vadd.f32 %v171, %v597
    %599 = vmatprep.mubr.bf16.mxu0 0
    %600 = vmatmul.mubr.bf16.gmra.mrb[0].mxu0 %v215
    %v601 = vpop.f32.mrb[0].mxu0
    %v602 = vadd.f32 %v167, %v601
    %v603 = vpop.f32.mrb[0].mxu0
    %v604 = vadd.f32 %v171, %v603
    %v605 = vpop.f32.mrb[0].mxu0
    %v606 = vadd.f32 %v167, %v605
    %v607 = vpop.f32.mrb[0].mxu0
    %v608 = vadd.f32 %v171, %v607
    %609 = vdwg.mxu0
    %610 = vst [vmem:[#allocation5] sm:$0xff] %v419
    %611 = vst [vmem:[#allocation5 + $0x8] sm:$0xff] %v421
    %612 = vst [vmem:[#allocation5 + $0x10] sm:$0xff] %v532
    %613 = vst [vmem:[#allocation5 + $0x18] sm:$0xff] %v534
    %614 = vst [vmem:[#allocation5 + $0x20] sm:$0xff] %v423
    %615 = vst [vmem:[#allocation5 + $0x28] sm:$0xff] %v425
    %616 = vst [vmem:[#allocation5 + $0x30] sm:$0xff] %v536
    %617 = vst [vmem:[#allocation5 + $0x38] sm:$0xff] %v538
    %618 = vst [vmem:[#allocation5 + $0x40] sm:$0xff] %v429
    %619 = vst [vmem:[#allocation5 + $0x48] sm:$0xff] %v431
    %620 = vst [vmem:[#allocation5 + $0x50] sm:$0xff] %v542
    %621 = vst [vmem:[#allocation5 + $0x58] sm:$0xff] %v544
    %622 = vst [vmem:[#allocation5 + $0x60] sm:$0xff] %v433
    %623 = vst [vmem:[#allocation5 + $0x68] sm:$0xff] %v435
    %624 = vst [vmem:[#allocation5 + $0x70] sm:$0xff] %v546
    %625 = vst [vmem:[#allocation5 + $0x78] sm:$0xff] %v548
    %626 = vst [vmem:[#allocation5 + $0x80] sm:$0xff] %v439
    %627 = vst [vmem:[#allocation5 + $0x88] sm:$0xff] %v441
    %628 = vst [vmem:[#allocation5 + $0x90] sm:$0xff] %v552
    %629 = vst [vmem:[#allocation5 + $0x98] sm:$0xff] %v554
    %630 = vst [vmem:[#allocation5 + $0xa0] sm:$0xff] %v443
    %631 = vst [vmem:[#allocation5 + $0xa8] sm:$0xff] %v445
    %632 = vst [vmem:[#allocation5 + $0xb0] sm:$0xff] %v556
    %633 = vst [vmem:[#allocation5 + $0xb8] sm:$0xff] %v558
    %634 = vst [vmem:[#allocation5 + $0xc0] sm:$0xff] %v449
    %635 = vst [vmem:[#allocation5 + $0xc8] sm:$0xff] %v451
    %636 = vst [vmem:[#allocation5 + $0xd0] sm:$0xff] %v562
    %637 = vst [vmem:[#allocation5 + $0xd8] sm:$0xff] %v564
    %638 = vst [vmem:[#allocation5 + $0xe0] sm:$0xff] %v453
    %639 = vst [vmem:[#allocation5 + $0xe8] sm:$0xff] %v455
    %640 = vst [vmem:[#allocation5 + $0xf0] sm:$0xff] %v566
    %641 = vst [vmem:[#allocation5 + $0xf8] sm:$0xff] %v568
    %642 = vst [vmem:[#allocation5 + $0x100] sm:$0xff] %v459
    %643 = vst [vmem:[#allocation5 + $0x108] sm:$0xff] %v461
    %644 = vst [vmem:[#allocation5 + $0x110] sm:$0xff] %v572
    %645 = vst [vmem:[#allocation5 + $0x118] sm:$0xff] %v574
    %646 = vst [vmem:[#allocation5 + $0x120] sm:$0xff] %v463
    %647 = vst [vmem:[#allocation5 + $0x128] sm:$0xff] %v465
    %648 = vst [vmem:[#allocation5 + $0x130] sm:$0xff] %v576
    %649 = vst [vmem:[#allocation5 + $0x138] sm:$0xff] %v578
    %650 = vst [vmem:[#allocation5 + $0x140] sm:$0xff] %v469
    %651 = vst [vmem:[#allocation5 + $0x148] sm:$0xff] %v471
    %652 = vst [vmem:[#allocation5 + $0x150] sm:$0xff] %v582
    %653 = vst [vmem:[#allocation5 + $0x158] sm:$0xff] %v584
    %654 = vst [vmem:[#allocation5 + $0x160] sm:$0xff] %v473
    %655 = vst [vmem:[#allocation5 + $0x168] sm:$0xff] %v475
    %656 = vst [vmem:[#allocation5 + $0x170] sm:$0xff] %v586
    %657 = vst [vmem:[#allocation5 + $0x178] sm:$0xff] %v588
    %658 = vst [vmem:[#allocation5 + $0x180] sm:$0xff] %v479
    %659 = vst [vmem:[#allocation5 + $0x188] sm:$0xff] %v481
    %660 = vst [vmem:[#allocation5 + $0x190] sm:$0xff] %v592
    %661 = vst [vmem:[#allocation5 + $0x198] sm:$0xff] %v594
    %662 = vst [vmem:[#allocation5 + $0x1a0] sm:$0xff] %v483
    %663 = vst [vmem:[#allocation5 + $0x1a8] sm:$0xff] %v485
    %664 = vst [vmem:[#allocation5 + $0x1b0] sm:$0xff] %v596
    %665 = vst [vmem:[#allocation5 + $0x1b8] sm:$0xff] %v598
    %666 = vst [vmem:[#allocation5 + $0x1c0] sm:$0xff] %v489
    %667 = vst [vmem:[#allocation5 + $0x1c8] sm:$0xff] %v491
    %668 = vst [vmem:[#allocation5 + $0x1d0] sm:$0xff] %v602
    %669 = vst [vmem:[#allocation5 + $0x1d8] sm:$0xff] %v604
    %670 = vst [vmem:[#allocation5 + $0x1e0] sm:$0xff] %v493
    %671 = vst [vmem:[#allocation5 + $0x1e8] sm:$0xff] %v495
    %672 = vst [vmem:[#allocation5 + $0x1f0] sm:$0xff] %v606
    %673 = vst [vmem:[#allocation5 + $0x1f8] sm:$0xff] %v608
    %v674 = vld [vmem:[#allocation11] sm:$0xff]
    %v675 = vld [vmem:[#allocation11 + $0x8] sm:$0xff]
    %v676 = vld [vmem:[#allocation11 + $0x10] sm:$0xff]
    %v677 = vld [vmem:[#allocation11 + $0x18] sm:$0xff]
    %v678 = vld [vmem:[#allocation11 + $0x20] sm:$0xff]
    %v679 = vld [vmem:[#allocation11 + $0x28] sm:$0xff]
    %v680 = vld [vmem:[#allocation11 + $0x30] sm:$0xff]
    %v681 = vld [vmem:[#allocation11 + $0x38] sm:$0xff]
    %v682 = vld [vmem:[#allocation11 + $0x40] sm:$0xff]
    %v683 = vld [vmem:[#allocation11 + $0x48] sm:$0xff]
    %v684 = vld [vmem:[#allocation11 + $0x50] sm:$0xff]
    %v685 = vld [vmem:[#allocation11 + $0x58] sm:$0xff]
    %v686 = vld [vmem:[#allocation11 + $0x60] sm:$0xff]
    %v687 = vld [vmem:[#allocation11 + $0x68] sm:$0xff]
    %v688 = vld [vmem:[#allocation11 + $0x70] sm:$0xff]
    %v689 = vld [vmem:[#allocation11 + $0x78] sm:$0xff]
    %v690 = vld [vmem:[#allocation11 + $0x80] sm:$0xff]
    %v691 = vld [vmem:[#allocation11 + $0x88] sm:$0xff]
    %v692 = vld [vmem:[#allocation11 + $0x90] sm:$0xff]
    %v693 = vld [vmem:[#allocation11 + $0x98] sm:$0xff]
    %v694 = vld [vmem:[#allocation11 + $0xa0] sm:$0xff]
    %v695 = vld [vmem:[#allocation11 + $0xa8] sm:$0xff]
    %v696 = vld [vmem:[#allocation11 + $0xb0] sm:$0xff]
    %v697 = vld [vmem:[#allocation11 + $0xb8] sm:$0xff]
    %v698 = vld [vmem:[#allocation11 + $0xc0] sm:$0xff]
    %v699 = vld [vmem:[#allocation11 + $0xc8] sm:$0xff]
    %v700 = vld [vmem:[#allocation11 + $0xd0] sm:$0xff]
    %v701 = vld [vmem:[#allocation11 + $0xd8] sm:$0xff]
    %v702 = vld [vmem:[#allocation11 + $0xe0] sm:$0xff]
    %v703 = vld [vmem:[#allocation11 + $0xe8] sm:$0xff]
    %v704 = vld [vmem:[#allocation11 + $0xf0] sm:$0xff]
    %v705 = vld [vmem:[#allocation11 + $0xf8] sm:$0xff]
    %v706 = vld [vmem:[#allocation2] sm:$0xff]
    %v707 = vld [vmem:[#allocation3] sm:$0xff]
    %v708 = vld [vmem:[#allocation3 + $0x8] sm:$0xff]
    %s709 = smul.u32 0, 4
    %s710 = smul.addr %s709, 8
    %s711 = scalar_lea.vmem [#allocation5], %s710
    %v712 = vld [vmem:[%s711] sm:$0xff]
    %v713 = vld [vmem:[%s711 + $0x8] sm:$0xff]
    %v714 = vld [vmem:[%s711 + $0x10] sm:$0xff]
    %v715 = vld [vmem:[%s711 + $0x18] sm:$0xff]
    %v716 = vld [vmem:[%s711 + $0x20] sm:$0xff]
    %v717 = vld [vmem:[%s711 + $0x28] sm:$0xff]
    %v718 = vld [vmem:[%s711 + $0x30] sm:$0xff]
    %v719 = vld [vmem:[%s711 + $0x38] sm:$0xff]
    %v752 = vunpack.c.l.b16 %v674
    %v753 = vunpack.c.h.b16 %v674
    %v754 = vunpack.c.l.b16 %v675
    %v755 = vunpack.c.h.b16 %v675
    %v756 = vunpack.c.l.b16 %v676
    %v757 = vunpack.c.h.b16 %v676
    %v758 = vunpack.c.l.b16 %v677
    %v759 = vunpack.c.h.b16 %v677
    %v760 = vunpack.c.l.b16 %v678
    %v761 = vunpack.c.h.b16 %v678
    %v762 = vunpack.c.l.b16 %v679
    %v763 = vunpack.c.h.b16 %v679
    %v764 = vunpack.c.l.b16 %v680
    %v765 = vunpack.c.h.b16 %v680
    %v766 = vunpack.c.l.b16 %v681
    %v767 = vunpack.c.h.b16 %v681
    %v768 = vunpack.c.l.b16 %v682
    %v769 = vunpack.c.h.b16 %v682
    %v770 = vunpack.c.l.b16 %v683
    %v771 = vunpack.c.h.b16 %v683
    %v772 = vunpack.c.l.b16 %v684
    %v773 = vunpack.c.h.b16 %v684
    %v774 = vunpack.c.l.b16 %v685
    %v775 = vunpack.c.h.b16 %v685
    %v776 = vunpack.c.l.b16 %v686
    %v777 = vunpack.c.h.b16 %v686
    %v778 = vunpack.c.l.b16 %v687
    %v779 = vunpack.c.h.b16 %v687
    %v780 = vunpack.c.l.b16 %v688
    %v781 = vunpack.c.h.b16 %v688
    %v782 = vunpack.c.l.b16 %v689
    %v783 = vunpack.c.h.b16 %v689
    %v784 = vunpack.c.l.b16 %v690
    %v785 = vunpack.c.h.b16 %v690
    %v786 = vunpack.c.l.b16 %v691
    %v787 = vunpack.c.h.b16 %v691
    %v788 = vunpack.c.l.b16 %v692
    %v789 = vunpack.c.h.b16 %v692
    %v790 = vunpack.c.l.b16 %v693
    %v791 = vunpack.c.h.b16 %v693
    %v792 = vunpack.c.l.b16 %v694
    %v793 = vunpack.c.h.b16 %v694
    %v794 = vunpack.c.l.b16 %v695
    %v795 = vunpack.c.h.b16 %v695
    %v796 = vunpack.c.l.b16 %v696
    %v797 = vunpack.c.h.b16 %v696
    %v798 = vunpack.c.l.b16 %v697
    %v799 = vunpack.c.h.b16 %v697
    %v800 = vunpack.c.l.b16 %v698
    %v801 = vunpack.c.h.b16 %v698
    %v802 = vunpack.c.l.b16 %v699
    %v803 = vunpack.c.h.b16 %v699
    %v804 = vunpack.c.l.b16 %v700
    %v805 = vunpack.c.h.b16 %v700
    %v806 = vunpack.c.l.b16 %v701
    %v807 = vunpack.c.h.b16 %v701
    %v808 = vunpack.c.l.b16 %v702
    %v809 = vunpack.c.h.b16 %v702
    %v810 = vunpack.c.l.b16 %v703
    %v811 = vunpack.c.h.b16 %v703
    %v812 = vunpack.c.l.b16 %v704
    %v813 = vunpack.c.h.b16 %v704
    %v814 = vunpack.c.l.b16 %v705
    %v815 = vunpack.c.h.b16 %v705
    %v816 = vpack.c.b16 %v756, %v752
    %v817 = vpack.c.b16 %v757, %v753
    %v818 = vpack.c.b16 %v758, %v754
    %v819 = vpack.c.b16 %v759, %v755
    %v820 = vpack.c.b16 %v764, %v760
    %v821 = vpack.c.b16 %v765, %v761
    %v822 = vpack.c.b16 %v766, %v762
    %v823 = vpack.c.b16 %v767, %v763
    %v824 = vpack.c.b16 %v772, %v768
    %v825 = vpack.c.b16 %v773, %v769
    %v826 = vpack.c.b16 %v774, %v770
    %v827 = vpack.c.b16 %v775, %v771
    %v828 = vpack.c.b16 %v780, %v776
    %v829 = vpack.c.b16 %v781, %v777
    %v830 = vpack.c.b16 %v782, %v778
    %v831 = vpack.c.b16 %v783, %v779
    %v832 = vpack.c.b16 %v788, %v784
    %v833 = vpack.c.b16 %v789, %v785
    %v834 = vpack.c.b16 %v790, %v786
    %v835 = vpack.c.b16 %v791, %v787
    %v836 = vpack.c.b16 %v796, %v792
    %v837 = vpack.c.b16 %v797, %v793
    %v838 = vpack.c.b16 %v798, %v794
    %v839 = vpack.c.b16 %v799, %v795
    %v840 = vpack.c.b16 %v804, %v800
    %v841 = vpack.c.b16 %v805, %v801
    %v842 = vpack.c.b16 %v806, %v802
    %v843 = vpack.c.b16 %v807, %v803
    %v844 = vpack.c.b16 %v812, %v808
    %v845 = vpack.c.b16 %v813, %v809
    %v846 = vpack.c.b16 %v814, %v810
    %v847 = vpack.c.b16 %v815, %v811
    %880 = vmatprep.subr.bf16.mxu0 %v817
    %881 = vmatpush1.bf16.msra.mxu0 %v816
    %882 = vmatprep.subr.bf16.mxu0 %v821
    %883 = vmatpush1.bf16.msra.mxu0 %v820
    %884 = vmatprep.subr.bf16.mxu0 %v825
    %885 = vmatpush1.bf16.msra.mxu0 %v824
    %886 = vmatprep.subr.bf16.mxu0 %v829
    %887 = vmatpush1.bf16.msra.mxu0 %v828
    %888 = vmatprep.subr.bf16.mxu0 %v833
    %889 = vmatpush1.bf16.msra.mxu0 %v832
    %890 = vmatprep.subr.bf16.mxu0 %v837
    %891 = vmatpush1.bf16.msra.mxu0 %v836
    %892 = vmatprep.subr.bf16.mxu0 %v841
    %893 = vmatpush1.bf16.msra.mxu0 %v840
    %894 = vmatprep.subr.bf16.mxu0 %v845
    %895 = vmatpush1.bf16.msra.mxu0 %v844
    %896 = vmatprep.subr.bf16.mxu0 0
    %897 = vmatpush1.bf16.msra.mxu0 0
    %898 = vmatprep.subr.bf16.mxu0 0
    %899 = vmatpush1.bf16.msra.mxu0 0
    %900 = vmatprep.subr.bf16.mxu0 0
    %901 = vmatpush1.bf16.msra.mxu0 0
    %902 = vmatprep.subr.bf16.mxu0 0
    %903 = vmatpush1.bf16.msra.mxu0 0
    %904 = vmatprep.subr.bf16.mxu0 0
    %905 = vmatpush1.bf16.msra.mxu0 0
    %906 = vmatprep.subr.bf16.mxu0 0
    %907 = vmatpush1.bf16.msra.mxu0 0
    %908 = vmatprep.subr.bf16.mxu0 0
    %909 = vmatpush1.bf16.msra.mxu0 0
    %910 = vmatprep.subr.bf16.mxu0 0
    %911 = vmatpush1.bf16.msra.mxu0 0
    %912 = vmatprep.mubr.bf16.mxu0 0
    %913 = vmatmul.mubr.bf16.gmra.mrb[0].mxu0 %v706
    %v914 = vpop.f32.mrb[0].mxu0
    %v915 = vadd.f32 0.0, %v914
    %v916 = vpop.f32.mrb[0].mxu0
    %v917 = vadd.f32 0.0, %v916
    %v918 = vpop.f32.mrb[0].mxu0
    %v919 = vadd.f32 0.0, %v918
    %v920 = vpop.f32.mrb[0].mxu0
    %v921 = vadd.f32 0.0, %v920
    %922 = vdwg.mxu0
    %923 = vmatprep.subr.bf16.mxu0 %v819
    %924 = vmatpush1.bf16.msra.mxu0 %v818
    %925 = vmatprep.subr.bf16.mxu0 %v823
    %926 = vmatpush1.bf16.msra.mxu0 %v822
    %927 = vmatprep.subr.bf16.mxu0 %v827
    %928 = vmatpush1.bf16.msra.mxu0 %v826
    %929 = vmatprep.subr.bf16.mxu0 %v831
    %930 = vmatpush1.bf16.msra.mxu0 %v830
    %931 = vmatprep.subr.bf16.mxu0 %v835
    %932 = vmatpush1.bf16.msra.mxu0 %v834
    %933 = vmatprep.subr.bf16.mxu0 %v839
    %934 = vmatpush1.bf16.msra.mxu0 %v838
    %935 = vmatprep.subr.bf16.mxu0 %v843
    %936 = vmatpush1.bf16.msra.mxu0 %v842
    %937 = vmatprep.subr.bf16.mxu0 %v847
    %938 = vmatpush1.bf16.msra.mxu0 %v846
    %939 = vmatprep.subr.bf16.mxu0 0
    %940 = vmatpush1.bf16.msra.mxu0 0
    %941 = vmatprep.subr.bf16.mxu0 0
    %942 = vmatpush1.bf16.msra.mxu0 0
    %943 = vmatprep.subr.bf16.mxu0 0
    %944 = vmatpush1.bf16.msra.mxu0 0
    %945 = vmatprep.subr.bf16.mxu0 0
    %946 = vmatpush1.bf16.msra.mxu0 0
    %947 = vmatprep.subr.bf16.mxu0 0
    %948 = vmatpush1.bf16.msra.mxu0 0
    %949 = vmatprep.subr.bf16.mxu0 0
    %950 = vmatpush1.bf16.msra.mxu0 0
    %951 = vmatprep.subr.bf16.mxu0 0
    %952 = vmatpush1.bf16.msra.mxu0 0
    %953 = vmatprep.subr.bf16.mxu0 0
    %954 = vmatpush1.bf16.msra.mxu0 0
    %955 = vmatprep.mubr.bf16.mxu0 0
    %956 = vmatmul.mubr.bf16.gmra.mrb[0].mxu0 %v706
    %v957 = vpop.f32.mrb[0].mxu0
    %v958 = vadd.f32 0.0, %v957
    %v959 = vpop.f32.mrb[0].mxu0
    %v960 = vadd.f32 0.0, %v959
    %v961 = vpop.f32.mrb[0].mxu0
    %v962 = vadd.f32 0.0, %v961
    %v963 = vpop.f32.mrb[0].mxu0
    %v964 = vadd.f32 0.0, %v963
    %965 = vdwg.mxu0
    %v966 = vadd.f32 %v712, %v915
    %v967 = vadd.f32 %v713, %v917
    %v968 = vadd.f32 %v714, %v958
    %v969 = vadd.f32 %v715, %v960
    %v970 = vadd.f32 %v716, %v919
    %v971 = vadd.f32 %v717, %v921
    %v972 = vadd.f32 %v718, %v962
    %v973 = vadd.f32 %v719, %v964
    %v974 = vxor.u32 %v966, 2147483648
    %v975 = vxor.u32 %v970, 2147483648
    %v976 = vmul.f32 %v974, 1.442695
    %v977 = vpow.pop %v976
    %v978 = vmul.f32 %v975, 1.442695
    %v979 = vpow.pop %v978
    %v980 = vadd.f32 %v977, 1.0
    %v981 = vadd.f32 %v979, 1.0
    %v982 = vrcp.pop %v980
    %v983 = vmul.f32 1.0, %v982
    %v984 = vrcp.pop %v981
    %v985 = vmul.f32 1.0, %v984
    %v986 = vxor.u32 %v967, 2147483648
    %v987 = vxor.u32 %v971, 2147483648
    %v988 = vmul.f32 %v986, 1.442695
    %v989 = vpow.pop %v988
    %v990 = vmul.f32 %v987, 1.442695
    %v991 = vpow.pop %v990
    %v992 = vadd.f32 %v989, 1.0
    %v993 = vadd.f32 %v991, 1.0
    %v994 = vrcp.pop %v992
    %v995 = vmul.f32 1.0, %v994
    %v996 = vrcp.pop %v993
    %v997 = vmul.f32 1.0, %v996
    %v998 = vtanh.pop %v968
    %v999 = vtanh.pop %v972
    %v1000 = vxor.u32 %v969, 2147483648
    %v1001 = vxor.u32 %v973, 2147483648
    %v1002 = vmul.f32 %v1000, 1.442695
    %v1003 = vpow.pop %v1002
    %v1004 = vmul.f32 %v1001, 1.442695
    %v1005 = vpow.pop %v1004
    %v1006 = vadd.f32 %v1003, 1.0
    %v1007 = vadd.f32 %v1005, 1.0
    %v1008 = vrcp.pop %v1006
    %v1009 = vmul.f32 1.0, %v1008
    %v1010 = vrcp.pop %v1007
    %v1011 = vmul.f32 1.0, %v1010
    %v1012 = vmul.f32 %v995, %v707
    %v1013 = vmul.f32 %v997, %v708
    %v1014 = vmul.f32 %v983, %v998
    %v1015 = vmul.f32 %v985, %v999
    %v1016 = vadd.f32 %v1012, %v1014
    %v1017 = vadd.f32 %v1013, %v1015
    %v1018 = vtanh.pop %v1016
    %v1019 = vtanh.pop %v1017
    %v1020 = vmul.f32 %v1009, %v1018
    %v1021 = vmul.f32 %v1011, %v1019
    %v1022 = vpack.c.bf16 %v1021, %v1020
    %1023 = vst [vmem:[#allocation4] sm:$0xff] %v1022
    %s1024 = smul.u32 2, 4
    %s1025 = smul.addr %s1024, 8
    %s1026 = scalar_lea.vmem [#allocation5], %s1025
    %v1027 = vld [vmem:[%s1026] sm:$0xff]
    %v1028 = vld [vmem:[%s1026 + $0x8] sm:$0xff]
    %v1029 = vld [vmem:[%s1026 + $0x10] sm:$0xff]
    %v1030 = vld [vmem:[%s1026 + $0x18] sm:$0xff]
    %v1031 = vld [vmem:[%s1026 + $0x20] sm:$0xff]
    %v1032 = vld [vmem:[%s1026 + $0x28] sm:$0xff]
    %v1033 = vld [vmem:[%s1026 + $0x30] sm:$0xff]
    %v1034 = vld [vmem:[%s1026 + $0x38] sm:$0xff]
    %1035 = vmatprep.subr.bf16.mxu0 %v817
    %1036 = vmatpush1.bf16.msra.mxu0 %v816
    %1037 = vmatprep.subr.bf16.mxu0 %v821
    %1038 = vmatpush1.bf16.msra.mxu0 %v820
    %1039 = vmatprep.subr.bf16.mxu0 %v825
    %1040 = vmatpush1.bf16.msra.mxu0 %v824
    %1041 = vmatprep.subr.bf16.mxu0 %v829
    %1042 = vmatpush1.bf16.msra.mxu0 %v828
    %1043 = vmatprep.subr.bf16.mxu0 %v833
    %1044 = vmatpush1.bf16.msra.mxu0 %v832
    %1045 = vmatprep.subr.bf16.mxu0 %v837
    %1046 = vmatpush1.bf16.msra.mxu0 %v836
    %1047 = vmatprep.subr.bf16.mxu0 %v841
    %1048 = vmatpush1.bf16.msra.mxu0 %v840
    %1049 = vmatprep.subr.bf16.mxu0 %v845
    %1050 = vmatpush1.bf16.msra.mxu0 %v844
    %1051 = vmatprep.subr.bf16.mxu0 0
    %1052 = vmatpush1.bf16.msra.mxu0 0
    %1053 = vmatprep.subr.bf16.mxu0 0
    %1054 = vmatpush1.bf16.msra.mxu0 0
    %1055 = vmatprep.subr.bf16.mxu0 0
    %1056 = vmatpush1.bf16.msra.mxu0 0
    %1057 = vmatprep.subr.bf16.mxu0 0
    %1058 = vmatpush1.bf16.msra.mxu0 0
    %1059 = vmatprep.subr.bf16.mxu0 0
    %1060 = vmatpush1.bf16.msra.mxu0 0
    %1061 = vmatprep.subr.bf16.mxu0 0
    %1062 = vmatpush1.bf16.msra.mxu0 0
    %1063 = vmatprep.subr.bf16.mxu0 0
    %1064 = vmatpush1.bf16.msra.mxu0 0
    %1065 = vmatprep.subr.bf16.mxu0 0
    %1066 = vmatpush1.bf16.msra.mxu0 0
    %1067 = vmatprep.mubr.bf16.mxu0 0
    %1068 = vmatmul.mubr.bf16.gmra.mrb[0].mxu0 %v1022
    %v1069 = vpop.f32.mrb[0].mxu0
    %v1070 = vadd.f32 0.0, %v1069
    %v1071 = vpop.f32.mrb[0].mxu0
    %v1072 = vadd.f32 0.0, %v1071
    %v1073 = vpop.f32.mrb[0].mxu0
    %v1074 = vadd.f32 0.0, %v1073
    %v1075 = vpop.f32.mrb[0].mxu0
    %v1076 = vadd.f32 0.0, %v1075
    %1077 = vdwg.mxu0
    %1078 = vmatprep.subr.bf16.mxu0 %v819
    %1079 = vmatpush1.bf16.msra.mxu0 %v818
    %1080 = vmatprep.subr.bf16.mxu0 %v823
    %1081 = vmatpush1.bf16.msra.mxu0 %v822
    %1082 = vmatprep.subr.bf16.mxu0 %v827
    %1083 = vmatpush1.bf16.msra.mxu0 %v826
    %1084 = vmatprep.subr.bf16.mxu0 %v831
    %1085 = vmatpush1.bf16.msra.mxu0 %v830
    %1086 = vmatprep.subr.bf16.mxu0 %v835
    %1087 = vmatpush1.bf16.msra.mxu0 %v834
    %1088 = vmatprep.subr.bf16.mxu0 %v839
    %1089 = vmatpush1.bf16.msra.mxu0 %v838
    %1090 = vmatprep.subr.bf16.mxu0 %v843
    %1091 = vmatpush1.bf16.msra.mxu0 %v842
    %1092 = vmatprep.subr.bf16.mxu0 %v847
    %1093 = vmatpush1.bf16.msra.mxu0 %v846
    %1094 = vmatprep.subr.bf16.mxu0 0
    %1095 = vmatpush1.bf16.msra.mxu0 0
    %1096 = vmatprep.subr.bf16.mxu0 0
    %1097 = vmatpush1.bf16.msra.mxu0 0
    %1098 = vmatprep.subr.bf16.mxu0 0
    %1099 = vmatpush1.bf16.msra.mxu0 0
    %1100 = vmatprep.subr.bf16.mxu0 0
    %1101 = vmatpush1.bf16.msra.mxu0 0
    %1102 = vmatprep.subr.bf16.mxu0 0
    %1103 = vmatpush1.bf16.msra.mxu0 0
    %1104 = vmatprep.subr.bf16.mxu0 0
    %1105 = vmatpush1.bf16.msra.mxu0 0
    %1106 = vmatprep.subr.bf16.mxu0 0
    %1107 = vmatpush1.bf16.msra.mxu0 0
    %1108 = vmatprep.subr.bf16.mxu0 0
    %1109 = vmatpush1.bf16.msra.mxu0 0
    %1110 = vmatprep.mubr.bf16.mxu0 0
    %1111 = vmatmul.mubr.bf16.gmra.mrb[0].mxu0 %v1022
    %v1112 = vpop.f32.mrb[0].mxu0
    %v1113 = vadd.f32 0.0, %v1112
    %v1114 = vpop.f32.mrb[0].mxu0
    %v1115 = vadd.f32 0.0, %v1114
    %v1116 = vpop.f32.mrb[0].mxu0
    %v1117 = vadd.f32 0.0, %v1116
    %v1118 = vpop.f32.mrb[0].mxu0
    %v1119 = vadd.f32 0.0, %v1118
    %1120 = vdwg.mxu0
    %v1121 = vadd.f32 %v1027, %v1070
    %v1122 = vadd.f32 %v1028, %v1072
    %v1123 = vadd.f32 %v1029, %v1113
    %v1124 = vadd.f32 %v1030, %v1115
    %v1125 = vadd.f32 %v1031, %v1074
    %v1126 = vadd.f32 %v1032, %v1076
    %v1127 = vadd.f32 %v1033, %v1117
    %v1128 = vadd.f32 %v1034, %v1119
    %v1129 = vxor.u32 %v1121, 2147483648
    %v1130 = vxor.u32 %v1125, 2147483648
    %v1131 = vmul.f32 %v1129, 1.442695
    %v1132 = vpow.pop %v1131
    %v1133 = vmul.f32 %v1130, 1.442695
    %v1134 = vpow.pop %v1133
    %v1135 = vadd.f32 %v1132, 1.0
    %v1136 = vadd.f32 %v1134, 1.0
    %v1137 = vrcp.pop %v1135
    %v1138 = vmul.f32 1.0, %v1137
    %v1139 = vrcp.pop %v1136
    %v1140 = vmul.f32 1.0, %v1139
    %v1141 = vxor.u32 %v1122, 2147483648
    %v1142 = vxor.u32 %v1126, 2147483648
    %v1143 = vmul.f32 %v1141, 1.442695
    %v1144 = vpow.pop %v1143
    %v1145 = vmul.f32 %v1142, 1.442695
    %v1146 = vpow.pop %v1145
    %v1147 = vadd.f32 %v1144, 1.0
    %v1148 = vadd.f32 %v1146, 1.0
    %v1149 = vrcp.pop %v1147
    %v1150 = vmul.f32 1.0, %v1149
    %v1151 = vrcp.pop %v1148
    %v1152 = vmul.f32 1.0, %v1151
    %v1153 = vtanh.pop %v1123
    %v1154 = vtanh.pop %v1127
    %v1155 = vxor.u32 %v1124, 2147483648
    %v1156 = vxor.u32 %v1128, 2147483648
    %v1157 = vmul.f32 %v1155, 1.442695
    %v1158 = vpow.pop %v1157
    %v1159 = vmul.f32 %v1156, 1.442695
    %v1160 = vpow.pop %v1159
    %v1161 = vadd.f32 %v1158, 1.0
    %v1162 = vadd.f32 %v1160, 1.0
    %v1163 = vrcp.pop %v1161
    %v1164 = vmul.f32 1.0, %v1163
    %v1165 = vrcp.pop %v1162
    %v1166 = vmul.f32 1.0, %v1165
    %v1167 = vmul.f32 %v1150, %v1016
    %v1168 = vmul.f32 %v1152, %v1017
    %v1169 = vmul.f32 %v1138, %v1153
    %v1170 = vmul.f32 %v1140, %v1154
    %v1171 = vadd.f32 %v1167, %v1169
    %v1172 = vadd.f32 %v1168, %v1170
    %v1173 = vtanh.pop %v1171
    %v1174 = vtanh.pop %v1172
    %v1175 = vmul.f32 %v1164, %v1173
    %v1176 = vmul.f32 %v1166, %v1174
    %v1177 = vpack.c.bf16 %v1176, %v1175
    %s1178 = scalar_lea.vmem [#allocation4], 8
    %1179 = vst [vmem:[%s1178] sm:$0xff] %v1177
    %s1180 = smul.u32 4, 4
    %s1181 = smul.addr %s1180, 8
    %s1182 = scalar_lea.vmem [#allocation5], %s1181
    %v1183 = vld [vmem:[%s1182] sm:$0xff]
    %v1184 = vld [vmem:[%s1182 + $0x8] sm:$0xff]
    %v1185 = vld [vmem:[%s1182 + $0x10] sm:$0xff]
    %v1186 = vld [vmem:[%s1182 + $0x18] sm:$0xff]
    %v1187 = vld [vmem:[%s1182 + $0x20] sm:$0xff]
    %v1188 = vld [vmem:[%s1182 + $0x28] sm:$0xff]
    %v1189 = vld [vmem:[%s1182 + $0x30] sm:$0xff]
    %v1190 = vld [vmem:[%s1182 + $0x38] sm:$0xff]
    %1191 = vmatprep.subr.bf16.mxu0 %v817
    %1192 = vmatpush1.bf16.msra.mxu0 %v816
    %1193 = vmatprep.subr.bf16.mxu0 %v821
    %1194 = vmatpush1.bf16.msra.mxu0 %v820
    %1195 = vmatprep.subr.bf16.mxu0 %v825
    %1196 = vmatpush1.bf16.msra.mxu0 %v824
    %1197 = vmatprep.subr.bf16.mxu0 %v829
    %1198 = vmatpush1.bf16.msra.mxu0 %v828
    %1199 = vmatprep.subr.bf16.mxu0 %v833
    %1200 = vmatpush1.bf16.msra.mxu0 %v832
    %1201 = vmatprep.subr.bf16.mxu0 %v837
    %1202 = vmatpush1.bf16.msra.mxu0 %v836
    %1203 = vmatprep.subr.bf16.mxu0 %v841
    %1204 = vmatpush1.bf16.msra.mxu0 %v840
    %1205 = vmatprep.subr.bf16.mxu0 %v845
    %1206 = vmatpush1.bf16.msra.mxu0 %v844
    %1207 = vmatprep.subr.bf16.mxu0 0
    %1208 = vmatpush1.bf16.msra.mxu0 0
    %1209 = vmatprep.subr.bf16.mxu0 0
    %1210 = vmatpush1.bf16.msra.mxu0 0
    %1211 = vmatprep.subr.bf16.mxu0 0
    %1212 = vmatpush1.bf16.msra.mxu0 0
    %1213 = vmatprep.subr.bf16.mxu0 0
    %1214 = vmatpush1.bf16.msra.mxu0 0
    %1215 = vmatprep.subr.bf16.mxu0 0
    %1216 = vmatpush1.bf16.msra.mxu0 0
    %1217 = vmatprep.subr.bf16.mxu0 0
    %1218 = vmatpush1.bf16.msra.mxu0 0
    %1219 = vmatprep.subr.bf16.mxu0 0
    %1220 = vmatpush1.bf16.msra.mxu0 0
    %1221 = vmatprep.subr.bf16.mxu0 0
    %1222 = vmatpush1.bf16.msra.mxu0 0
    %1223 = vmatprep.mubr.bf16.mxu0 0
    %1224 = vmatmul.mubr.bf16.gmra.mrb[0].mxu0 %v1177
    %v1225 = vpop.f32.mrb[0].mxu0
    %v1226 = vadd.f32 0.0, %v1225
    %v1227 = vpop.f32.mrb[0].mxu0
    %v1228 = vadd.f32 0.0, %v1227
    %v1229 = vpop.f32.mrb[0].mxu0
    %v1230 = vadd.f32 0.0, %v1229
    %v1231 = vpop.f32.mrb[0].mxu0
    %v1232 = vadd.f32 0.0, %v1231
    %1233 = vdwg.mxu0
    %1234 = vmatprep.subr.bf16.mxu0 %v819
    %1235 = vmatpush1.bf16.msra.mxu0 %v818
    %1236 = vmatprep.subr.bf16.mxu0 %v823
    %1237 = vmatpush1.bf16.msra.mxu0 %v822
    %1238 = vmatprep.subr.bf16.mxu0 %v827
    %1239 = vmatpush1.bf16.msra.mxu0 %v826
    %1240 = vmatprep.subr.bf16.mxu0 %v831
    %1241 = vmatpush1.bf16.msra.mxu0 %v830
    %1242 = vmatprep.subr.bf16.mxu0 %v835
    %1243 = vmatpush1.bf16.msra.mxu0 %v834
    %1244 = vmatprep.subr.bf16.mxu0 %v839
    %1245 = vmatpush1.bf16.msra.mxu0 %v838
    %1246 = vmatprep.subr.bf16.mxu0 %v843
    %1247 = vmatpush1.bf16.msra.mxu0 %v842
    %1248 = vmatprep.subr.bf16.mxu0 %v847
    %1249 = vmatpush1.bf16.msra.mxu0 %v846
    %1250 = vmatprep.subr.bf16.mxu0 0
    %1251 = vmatpush1.bf16.msra.mxu0 0
    %1252 = vmatprep.subr.bf16.mxu0 0
    %1253 = vmatpush1.bf16.msra.mxu0 0
    %1254 = vmatprep.subr.bf16.mxu0 0
    %1255 = vmatpush1.bf16.msra.mxu0 0
    %1256 = vmatprep.subr.bf16.mxu0 0
    %1257 = vmatpush1.bf16.msra.mxu0 0
    %1258 = vmatprep.subr.bf16.mxu0 0
    %1259 = vmatpush1.bf16.msra.mxu0 0
    %1260 = vmatprep.subr.bf16.mxu0 0
    %1261 = vmatpush1.bf16.msra.mxu0 0
    %1262 = vmatprep.subr.bf16.mxu0 0
    %1263 = vmatpush1.bf16.msra.mxu0 0
    %1264 = vmatprep.subr.bf16.mxu0 0
    %1265 = vmatpush1.bf16.msra.mxu0 0
    %1266 = vmatprep.mubr.bf16.mxu0 0
    %1267 = vmatmul.mubr.bf16.gmra.mrb[0].mxu0 %v1177
    %v1268 = vpop.f32.mrb[0].mxu0
    %v1269 = vadd.f32 0.0, %v1268
    %v1270 = vpop.f32.mrb[0].mxu0
    %v1271 = vadd.f32 0.0, %v1270
    %v1272 = vpop.f32.mrb[0].mxu0
    %v1273 = vadd.f32 0.0, %v1272
    %v1274 = vpop.f32.mrb[0].mxu0
    %v1275 = vadd.f32 0.0, %v1274
    %1276 = vdwg.mxu0
    %v1277 = vadd.f32 %v1183, %v1226
    %v1278 = vadd.f32 %v1184, %v1228
    %v1279 = vadd.f32 %v1185, %v1269
    %v1280 = vadd.f32 %v1186, %v1271
    %v1281 = vadd.f32 %v1187, %v1230
    %v1282 = vadd.f32 %v1188, %v1232
    %v1283 = vadd.f32 %v1189, %v1273
    %v1284 = vadd.f32 %v1190, %v1275
    %v1285 = vxor.u32 %v1277, 2147483648
    %v1286 = vxor.u32 %v1281, 2147483648
    %v1287 = vmul.f32 %v1285, 1.442695
    %v1288 = vpow.pop %v1287
    %v1289 = vmul.f32 %v1286, 1.442695
    %v1290 = vpow.pop %v1289
    %v1291 = vadd.f32 %v1288, 1.0
    %v1292 = vadd.f32 %v1290, 1.0
    %v1293 = vrcp.pop %v1291
    %v1294 = vmul.f32 1.0, %v1293
    %v1295 = vrcp.pop %v1292
    %v1296 = vmul.f32 1.0, %v1295
    %v1297 = vxor.u32 %v1278, 2147483648
    %v1298 = vxor.u32 %v1282, 2147483648
    %v1299 = vmul.f32 %v1297, 1.442695
    %v1300 = vpow.pop %v1299
    %v1301 = vmul.f32 %v1298, 1.442695
    %v1302 = vpow.pop %v1301
    %v1303 = vadd.f32 %v1300, 1.0
    %v1304 = vadd.f32 %v1302, 1.0
    %v1305 = vrcp.pop %v1303
    %v1306 = vmul.f32 1.0, %v1305
    %v1307 = vrcp.pop %v1304
    %v1308 = vmul.f32 1.0, %v1307
    %v1309 = vtanh.pop %v1279
    %v1310 = vtanh.pop %v1283
    %v1311 = vxor.u32 %v1280, 2147483648
    %v1312 = vxor.u32 %v1284, 2147483648
    %v1313 = vmul.f32 %v1311, 1.442695
    %v1314 = vpow.pop %v1313
    %v1315 = vmul.f32 %v1312, 1.442695
    %v1316 = vpow.pop %v1315
    %v1317 = vadd.f32 %v1314, 1.0
    %v1318 = vadd.f32 %v1316, 1.0
    %v1319 = vrcp.pop %v1317
    %v1320 = vmul.f32 1.0, %v1319
    %v1321 = vrcp.pop %v1318
    %v1322 = vmul.f32 1.0, %v1321
    %v1323 = vmul.f32 %v1306, %v1171
    %v1324 = vmul.f32 %v1308, %v1172
    %v1325 = vmul.f32 %v1294, %v1309
    %v1326 = vmul.f32 %v1296, %v1310
    %v1327 = vadd.f32 %v1323, %v1325
    %v1328 = vadd.f32 %v1324, %v1326
    %v1329 = vtanh.pop %v1327
    %v1330 = vtanh.pop %v1328
    %v1331 = vmul.f32 %v1320, %v1329
    %v1332 = vmul.f32 %v1322, %v1330
    %v1333 = vpack.c.bf16 %v1332, %v1331
    %s1334 = scalar_lea.vmem [#allocation4], 16
    %1335 = vst [vmem:[%s1334] sm:$0xff] %v1333
    %s1336 = smul.u32 6, 4
    %s1337 = smul.addr %s1336, 8
    %s1338 = scalar_lea.vmem [#allocation5], %s1337
    %v1339 = vld [vmem:[%s1338] sm:$0xff]
    %v1340 = vld [vmem:[%s1338 + $0x8] sm:$0xff]
    %v1341 = vld [vmem:[%s1338 + $0x10] sm:$0xff]
    %v1342 = vld [vmem:[%s1338 + $0x18] sm:$0xff]
    %v1343 = vld [vmem:[%s1338 + $0x20] sm:$0xff]
    %v1344 = vld [vmem:[%s1338 + $0x28] sm:$0xff]
    %v1345 = vld [vmem:[%s1338 + $0x30] sm:$0xff]
    %v1346 = vld [vmem:[%s1338 + $0x38] sm:$0xff]
    %1347 = vmatprep.subr.bf16.mxu0 %v817
    %1348 = vmatpush1.bf16.msra.mxu0 %v816
    %1349 = vmatprep.subr.bf16.mxu0 %v821
    %1350 = vmatpush1.bf16.msra.mxu0 %v820
    %1351 = vmatprep.subr.bf16.mxu0 %v825
    %1352 = vmatpush1.bf16.msra.mxu0 %v824
    %1353 = vmatprep.subr.bf16.mxu0 %v829
    %1354 = vmatpush1.bf16.msra.mxu0 %v828
    %1355 = vmatprep.subr.bf16.mxu0 %v833
    %1356 = vmatpush1.bf16.msra.mxu0 %v832
    %1357 = vmatprep.subr.bf16.mxu0 %v837
    %1358 = vmatpush1.bf16.msra.mxu0 %v836
    %1359 = vmatprep.subr.bf16.mxu0 %v841
    %1360 = vmatpush1.bf16.msra.mxu0 %v840
    %1361 = vmatprep.subr.bf16.mxu0 %v845
    %1362 = vmatpush1.bf16.msra.mxu0 %v844
    %1363 = vmatprep.subr.bf16.mxu0 0
    %1364 = vmatpush1.bf16.msra.mxu0 0
    %1365 = vmatprep.subr.bf16.mxu0 0
    %1366 = vmatpush1.bf16.msra.mxu0 0
    %1367 = vmatprep.subr.bf16.mxu0 0
    %1368 = vmatpush1.bf16.msra.mxu0 0
    %1369 = vmatprep.subr.bf16.mxu0 0
    %1370 = vmatpush1.bf16.msra.mxu0 0
    %1371 = vmatprep.subr.bf16.mxu0 0
    %1372 = vmatpush1.bf16.msra.mxu0 0
    %1373 = vmatprep.subr.bf16.mxu0 0
    %1374 = vmatpush1.bf16.msra.mxu0 0
    %1375 = vmatprep.subr.bf16.mxu0 0
    %1376 = vmatpush1.bf16.msra.mxu0 0
    %1377 = vmatprep.subr.bf16.mxu0 0
    %1378 = vmatpush1.bf16.msra.mxu0 0
    %1379 = vmatprep.mubr.bf16.mxu0 0
    %1380 = vmatmul.mubr.bf16.gmra.mrb[0].mxu0 %v1333
    %v1381 = vpop.f32.mrb[0].mxu0
    %v1382 = vadd.f32 0.0, %v1381
    %v1383 = vpop.f32.mrb[0].mxu0
    %v1384 = vadd.f32 0.0, %v1383
    %v1385 = vpop.f32.mrb[0].mxu0
    %v1386 = vadd.f32 0.0, %v1385
    %v1387 = vpop.f32.mrb[0].mxu0
    %v1388 = vadd.f32 0.0, %v1387
    %1389 = vdwg.mxu0
    %1390 = vmatprep.subr.bf16.mxu0 %v819
    %1391 = vmatpush1.bf16.msra.mxu0 %v818
    %1392 = vmatprep.subr.bf16.mxu0 %v823
    %1393 = vmatpush1.bf16.msra.mxu0 %v822
    %1394 = vmatprep.subr.bf16.mxu0 %v827
    %1395 = vmatpush1.bf16.msra.mxu0 %v826
    %1396 = vmatprep.subr.bf16.mxu0 %v831
    %1397 = vmatpush1.bf16.msra.mxu0 %v830
    %1398 = vmatprep.subr.bf16.mxu0 %v835
    %1399 = vmatpush1.bf16.msra.mxu0 %v834
    %1400 = vmatprep.subr.bf16.mxu0 %v839
    %1401 = vmatpush1.bf16.msra.mxu0 %v838
    %1402 = vmatprep.subr.bf16.mxu0 %v843
    %1403 = vmatpush1.bf16.msra.mxu0 %v842
    %1404 = vmatprep.subr.bf16.mxu0 %v847
    %1405 = vmatpush1.bf16.msra.mxu0 %v846
    %1406 = vmatprep.subr.bf16.mxu0 0
    %1407 = vmatpush1.bf16.msra.mxu0 0
    %1408 = vmatprep.subr.bf16.mxu0 0
    %1409 = vmatpush1.bf16.msra.mxu0 0
    %1410 = vmatprep.subr.bf16.mxu0 0
    %1411 = vmatpush1.bf16.msra.mxu0 0
    %1412 = vmatprep.subr.bf16.mxu0 0
    %1413 = vmatpush1.bf16.msra.mxu0 0
    %1414 = vmatprep.subr.bf16.mxu0 0
    %1415 = vmatpush1.bf16.msra.mxu0 0
    %1416 = vmatprep.subr.bf16.mxu0 0
    %1417 = vmatpush1.bf16.msra.mxu0 0
    %1418 = vmatprep.subr.bf16.mxu0 0
    %1419 = vmatpush1.bf16.msra.mxu0 0
    %1420 = vmatprep.subr.bf16.mxu0 0
    %1421 = vmatpush1.bf16.msra.mxu0 0
    %1422 = vmatprep.mubr.bf16.mxu0 0
    %1423 = vmatmul.mubr.bf16.gmra.mrb[0].mxu0 %v1333
    %v1424 = vpop.f32.mrb[0].mxu0
    %v1425 = vadd.f32 0.0, %v1424
    %v1426 = vpop.f32.mrb[0].mxu0
    %v1427 = vadd.f32 0.0, %v1426
    %v1428 = vpop.f32.mrb[0].mxu0
    %v1429 = vadd.f32 0.0, %v1428
    %v1430 = vpop.f32.mrb[0].mxu0
    %v1431 = vadd.f32 0.0, %v1430
    %1432 = vdwg.mxu0
    %v1433 = vadd.f32 %v1339, %v1382
    %v1434 = vadd.f32 %v1340, %v1384
    %v1435 = vadd.f32 %v1341, %v1425
    %v1436 = vadd.f32 %v1342, %v1427
    %v1437 = vadd.f32 %v1343, %v1386
    %v1438 = vadd.f32 %v1344, %v1388
    %v1439 = vadd.f32 %v1345, %v1429
    %v1440 = vadd.f32 %v1346, %v1431
    %v1441 = vxor.u32 %v1433, 2147483648
    %v1442 = vxor.u32 %v1437, 2147483648
    %v1443 = vmul.f32 %v1441, 1.442695
    %v1444 = vpow.pop %v1443
    %v1445 = vmul.f32 %v1442, 1.442695
    %v1446 = vpow.pop %v1445
    %v1447 = vadd.f32 %v1444, 1.0
    %v1448 = vadd.f32 %v1446, 1.0
    %v1449 = vrcp.pop %v1447
    %v1450 = vmul.f32 1.0, %v1449
    %v1451 = vrcp.pop %v1448
    %v1452 = vmul.f32 1.0, %v1451
    %v1453 = vxor.u32 %v1434, 2147483648
    %v1454 = vxor.u32 %v1438, 2147483648
    %v1455 = vmul.f32 %v1453, 1.442695
    %v1456 = vpow.pop %v1455
    %v1457 = vmul.f32 %v1454, 1.442695
    %v1458 = vpow.pop %v1457
    %v1459 = vadd.f32 %v1456, 1.0
    %v1460 = vadd.f32 %v1458, 1.0
    %v1461 = vrcp.pop %v1459
    %v1462 = vmul.f32 1.0, %v1461
    %v1463 = vrcp.pop %v1460
    %v1464 = vmul.f32 1.0, %v1463
    %v1465 = vtanh.pop %v1435
    %v1466 = vtanh.pop %v1439
    %v1467 = vxor.u32 %v1436, 2147483648
    %v1468 = vxor.u32 %v1440, 2147483648
    %v1469 = vmul.f32 %v1467, 1.442695
    %v1470 = vpow.pop %v1469
    %v1471 = vmul.f32 %v1468, 1.442695
    %v1472 = vpow.pop %v1471
    %v1473 = vadd.f32 %v1470, 1.0
    %v1474 = vadd.f32 %v1472, 1.0
    %v1475 = vrcp.pop %v1473
    %v1476 = vmul.f32 1.0, %v1475
    %v1477 = vrcp.pop %v1474
    %v1478 = vmul.f32 1.0, %v1477
    %v1479 = vmul.f32 %v1462, %v1327
    %v1480 = vmul.f32 %v1464, %v1328
    %v1481 = vmul.f32 %v1450, %v1465
    %v1482 = vmul.f32 %v1452, %v1466
    %v1483 = vadd.f32 %v1479, %v1481
    %v1484 = vadd.f32 %v1480, %v1482
    %v1485 = vtanh.pop %v1483
    %v1486 = vtanh.pop %v1484
    %v1487 = vmul.f32 %v1476, %v1485
    %v1488 = vmul.f32 %v1478, %v1486
    %v1489 = vpack.c.bf16 %v1488, %v1487
    %s1490 = scalar_lea.vmem [#allocation4], 24
    %1491 = vst [vmem:[%s1490] sm:$0xff] %v1489
    %s1492 = smul.u32 8, 4
    %s1493 = smul.addr %s1492, 8
    %s1494 = scalar_lea.vmem [#allocation5], %s1493
    %v1495 = vld [vmem:[%s1494] sm:$0xff]
    %v1496 = vld [vmem:[%s1494 + $0x8] sm:$0xff]
    %v1497 = vld [vmem:[%s1494 + $0x10] sm:$0xff]
    %v1498 = vld [vmem:[%s1494 + $0x18] sm:$0xff]
    %v1499 = vld [vmem:[%s1494 + $0x20] sm:$0xff]
    %v1500 = vld [vmem:[%s1494 + $0x28] sm:$0xff]
    %v1501 = vld [vmem:[%s1494 + $0x30] sm:$0xff]
    %v1502 = vld [vmem:[%s1494 + $0x38] sm:$0xff]
    %1503 = vmatprep.subr.bf16.mxu0 %v817
    %1504 = vmatpush1.bf16.msra.mxu0 %v816
    %1505 = vmatprep.subr.bf16.mxu0 %v821
    %1506 = vmatpush1.bf16.msra.mxu0 %v820
    %1507 = vmatprep.subr.bf16.mxu0 %v825
    %1508 = vmatpush1.bf16.msra.mxu0 %v824
    %1509 = vmatprep.subr.bf16.mxu0 %v829
    %1510 = vmatpush1.bf16.msra.mxu0 %v828
    %1511 = vmatprep.subr.bf16.mxu0 %v833
    %1512 = vmatpush1.bf16.msra.mxu0 %v832
    %1513 = vmatprep.subr.bf16.mxu0 %v837
    %1514 = vmatpush1.bf16.msra.mxu0 %v836
    %1515 = vmatprep.subr.bf16.mxu0 %v841
    %1516 = vmatpush1.bf16.msra.mxu0 %v840
    %1517 = vmatprep.subr.bf16.mxu0 %v845
    %1518 = vmatpush1.bf16.msra.mxu0 %v844
    %1519 = vmatprep.subr.bf16.mxu0 0
    %1520 = vmatpush1.bf16.msra.mxu0 0
    %1521 = vmatprep.subr.bf16.mxu0 0
    %1522 = vmatpush1.bf16.msra.mxu0 0
    %1523 = vmatprep.subr.bf16.mxu0 0
    %1524 = vmatpush1.bf16.msra.mxu0 0
    %1525 = vmatprep.subr.bf16.mxu0 0
    %1526 = vmatpush1.bf16.msra.mxu0 0
    %1527 = vmatprep.subr.bf16.mxu0 0
    %1528 = vmatpush1.bf16.msra.mxu0 0
    %1529 = vmatprep.subr.bf16.mxu0 0
    %1530 = vmatpush1.bf16.msra.mxu0 0
    %1531 = vmatprep.subr.bf16.mxu0 0
    %1532 = vmatpush1.bf16.msra.mxu0 0
    %1533 = vmatprep.subr.bf16.mxu0 0
    %1534 = vmatpush1.bf16.msra.mxu0 0
    %1535 = vmatprep.mubr.bf16.mxu0 0
    %1536 = vmatmul.mubr.bf16.gmra.mrb[0].mxu0 %v1489
    %v1537 = vpop.f32.mrb[0].mxu0
    %v1538 = vadd.f32 0.0, %v1537
    %v1539 = vpop.f32.mrb[0].mxu0
    %v1540 = vadd.f32 0.0, %v1539
    %v1541 = vpop.f32.mrb[0].mxu0
    %v1542 = vadd.f32 0.0, %v1541
    %v1543 = vpop.f32.mrb[0].mxu0
    %v1544 = vadd.f32 0.0, %v1543
    %1545 = vdwg.mxu0
    %1546 = vmatprep.subr.bf16.mxu0 %v819
    %1547 = vmatpush1.bf16.msra.mxu0 %v818
    %1548 = vmatprep.subr.bf16.mxu0 %v823
    %1549 = vmatpush1.bf16.msra.mxu0 %v822
    %1550 = vmatprep.subr.bf16.mxu0 %v827
    %1551 = vmatpush1.bf16.msra.mxu0 %v826
    %1552 = vmatprep.subr.bf16.mxu0 %v831
    %1553 = vmatpush1.bf16.msra.mxu0 %v830
    %1554 = vmatprep.subr.bf16.mxu0 %v835
    %1555 = vmatpush1.bf16.msra.mxu0 %v834
    %1556 = vmatprep.subr.bf16.mxu0 %v839
    %1557 = vmatpush1.bf16.msra.mxu0 %v838
    %1558 = vmatprep.subr.bf16.mxu0 %v843
    %1559 = vmatpush1.bf16.msra.mxu0 %v842
    %1560 = vmatprep.subr.bf16.mxu0 %v847
    %1561 = vmatpush1.bf16.msra.mxu0 %v846
    %1562 = vmatprep.subr.bf16.mxu0 0
    %1563 = vmatpush1.bf16.msra.mxu0 0
    %1564 = vmatprep.subr.bf16.mxu0 0
    %1565 = vmatpush1.bf16.msra.mxu0 0
    %1566 = vmatprep.subr.bf16.mxu0 0
    %1567 = vmatpush1.bf16.msra.mxu0 0
    %1568 = vmatprep.subr.bf16.mxu0 0
    %1569 = vmatpush1.bf16.msra.mxu0 0
    %1570 = vmatprep.subr.bf16.mxu0 0
    %1571 = vmatpush1.bf16.msra.mxu0 0
    %1572 = vmatprep.subr.bf16.mxu0 0
    %1573 = vmatpush1.bf16.msra.mxu0 0
    %1574 = vmatprep.subr.bf16.mxu0 0
    %1575 = vmatpush1.bf16.msra.mxu0 0
    %1576 = vmatprep.subr.bf16.mxu0 0
    %1577 = vmatpush1.bf16.msra.mxu0 0
    %1578 = vmatprep.mubr.bf16.mxu0 0
    %1579 = vmatmul.mubr.bf16.gmra.mrb[0].mxu0 %v1489
    %v1580 = vpop.f32.mrb[0].mxu0
    %v1581 = vadd.f32 0.0, %v1580
    %v1582 = vpop.f32.mrb[0].mxu0
    %v1583 = vadd.f32 0.0, %v1582
    %v1584 = vpop.f32.mrb[0].mxu0
    %v1585 = vadd.f32 0.0, %v1584
    %v1586 = vpop.f32.mrb[0].mxu0
    %v1587 = vadd.f32 0.0, %v1586
    %1588 = vdwg.mxu0
    %v1589 = vadd.f32 %v1495, %v1538
    %v1590 = vadd.f32 %v1496, %v1540
    %v1591 = vadd.f32 %v1497, %v1581
    %v1592 = vadd.f32 %v1498, %v1583
    %v1593 = vadd.f32 %v1499, %v1542
    %v1594 = vadd.f32 %v1500, %v1544
    %v1595 = vadd.f32 %v1501, %v1585
    %v1596 = vadd.f32 %v1502, %v1587
    %v1597 = vxor.u32 %v1589, 2147483648
    %v1598 = vxor.u32 %v1593, 2147483648
    %v1599 = vmul.f32 %v1597, 1.442695
    %v1600 = vpow.pop %v1599
    %v1601 = vmul.f32 %v1598, 1.442695
    %v1602 = vpow.pop %v1601
    %v1603 = vadd.f32 %v1600, 1.0
    %v1604 = vadd.f32 %v1602, 1.0
    %v1605 = vrcp.pop %v1603
    %v1606 = vmul.f32 1.0, %v1605
    %v1607 = vrcp.pop %v1604
    %v1608 = vmul.f32 1.0, %v1607
    %v1609 = vxor.u32 %v1590, 2147483648
    %v1610 = vxor.u32 %v1594, 2147483648
    %v1611 = vmul.f32 %v1609, 1.442695
    %v1612 = vpow.pop %v1611
    %v1613 = vmul.f32 %v1610, 1.442695
    %v1614 = vpow.pop %v1613
    %v1615 = vadd.f32 %v1612, 1.0
    %v1616 = vadd.f32 %v1614, 1.0
    %v1617 = vrcp.pop %v1615
    %v1618 = vmul.f32 1.0, %v1617
    %v1619 = vrcp.pop %v1616
    %v1620 = vmul.f32 1.0, %v1619
    %v1621 = vtanh.pop %v1591
    %v1622 = vtanh.pop %v1595
    %v1623 = vxor.u32 %v1592, 2147483648
    %v1624 = vxor.u32 %v1596, 2147483648
    %v1625 = vmul.f32 %v1623, 1.442695
    %v1626 = vpow.pop %v1625
    %v1627 = vmul.f32 %v1624, 1.442695
    %v1628 = vpow.pop %v1627
    %v1629 = vadd.f32 %v1626, 1.0
    %v1630 = vadd.f32 %v1628, 1.0
    %v1631 = vrcp.pop %v1629
    %v1632 = vmul.f32 1.0, %v1631
    %v1633 = vrcp.pop %v1630
    %v1634 = vmul.f32 1.0, %v1633
    %v1635 = vmul.f32 %v1618, %v1483
    %v1636 = vmul.f32 %v1620, %v1484
    %v1637 = vmul.f32 %v1606, %v1621
    %v1638 = vmul.f32 %v1608, %v1622
    %v1639 = vadd.f32 %v1635, %v1637
    %v1640 = vadd.f32 %v1636, %v1638
    %v1641 = vtanh.pop %v1639
    %v1642 = vtanh.pop %v1640
    %v1643 = vmul.f32 %v1632, %v1641
    %v1644 = vmul.f32 %v1634, %v1642
    %v1645 = vpack.c.bf16 %v1644, %v1643
    %s1646 = scalar_lea.vmem [#allocation4], 32
    %1647 = vst [vmem:[%s1646] sm:$0xff] %v1645
    %s1648 = smul.u32 10, 4
    %s1649 = smul.addr %s1648, 8
    %s1650 = scalar_lea.vmem [#allocation5], %s1649
    %v1651 = vld [vmem:[%s1650] sm:$0xff]
    %v1652 = vld [vmem:[%s1650 + $0x8] sm:$0xff]
    %v1653 = vld [vmem:[%s1650 + $0x10] sm:$0xff]
    %v1654 = vld [vmem:[%s1650 + $0x18] sm:$0xff]
    %v1655 = vld [vmem:[%s1650 + $0x20] sm:$0xff]
    %v1656 = vld [vmem:[%s1650 + $0x28] sm:$0xff]
    %v1657 = vld [vmem:[%s1650 + $0x30] sm:$0xff]
    %v1658 = vld [vmem:[%s1650 + $0x38] sm:$0xff]
    %1659 = vmatprep.subr.bf16.mxu0 %v817
    %1660 = vmatpush1.bf16.msra.mxu0 %v816
    %1661 = vmatprep.subr.bf16.mxu0 %v821
    %1662 = vmatpush1.bf16.msra.mxu0 %v820
    %1663 = vmatprep.subr.bf16.mxu0 %v825
    %1664 = vmatpush1.bf16.msra.mxu0 %v824
    %1665 = vmatprep.subr.bf16.mxu0 %v829
    %1666 = vmatpush1.bf16.msra.mxu0 %v828
    %1667 = vmatprep.subr.bf16.mxu0 %v833
    %1668 = vmatpush1.bf16.msra.mxu0 %v832
    %1669 = vmatprep.subr.bf16.mxu0 %v837
    %1670 = vmatpush1.bf16.msra.mxu0 %v836
    %1671 = vmatprep.subr.bf16.mxu0 %v841
    %1672 = vmatpush1.bf16.msra.mxu0 %v840
    %1673 = vmatprep.subr.bf16.mxu0 %v845
    %1674 = vmatpush1.bf16.msra.mxu0 %v844
    %1675 = vmatprep.subr.bf16.mxu0 0
    %1676 = vmatpush1.bf16.msra.mxu0 0
    %1677 = vmatprep.subr.bf16.mxu0 0
    %1678 = vmatpush1.bf16.msra.mxu0 0
    %1679 = vmatprep.subr.bf16.mxu0 0
    %1680 = vmatpush1.bf16.msra.mxu0 0
    %1681 = vmatprep.subr.bf16.mxu0 0
    %1682 = vmatpush1.bf16.msra.mxu0 0
    %1683 = vmatprep.subr.bf16.mxu0 0
    %1684 = vmatpush1.bf16.msra.mxu0 0
    %1685 = vmatprep.subr.bf16.mxu0 0
    %1686 = vmatpush1.bf16.msra.mxu0 0
    %1687 = vmatprep.subr.bf16.mxu0 0
    %1688 = vmatpush1.bf16.msra.mxu0 0
    %1689 = vmatprep.subr.bf16.mxu0 0
    %1690 = vmatpush1.bf16.msra.mxu0 0
    %1691 = vmatprep.mubr.bf16.mxu0 0
    %1692 = vmatmul.mubr.bf16.gmra.mrb[0].mxu0 %v1645
    %v1693 = vpop.f32.mrb[0].mxu0
    %v1694 = vadd.f32 0.0, %v1693
    %v1695 = vpop.f32.mrb[0].mxu0
    %v1696 = vadd.f32 0.0, %v1695
    %v1697 = vpop.f32.mrb[0].mxu0
    %v1698 = vadd.f32 0.0, %v1697
    %v1699 = vpop.f32.mrb[0].mxu0
    %v1700 = vadd.f32 0.0, %v1699
    %1701 = vdwg.mxu0
    %1702 = vmatprep.subr.bf16.mxu0 %v819
    %1703 = vmatpush1.bf16.msra.mxu0 %v818
    %1704 = vmatprep.subr.bf16.mxu0 %v823
    %1705 = vmatpush1.bf16.msra.mxu0 %v822
    %1706 = vmatprep.subr.bf16.mxu0 %v827
    %1707 = vmatpush1.bf16.msra.mxu0 %v826
    %1708 = vmatprep.subr.bf16.mxu0 %v831
    %1709 = vmatpush1.bf16.msra.mxu0 %v830
    %1710 = vmatprep.subr.bf16.mxu0 %v835
    %1711 = vmatpush1.bf16.msra.mxu0 %v834
    %1712 = vmatprep.subr.bf16.mxu0 %v839
    %1713 = vmatpush1.bf16.msra.mxu0 %v838
    %1714 = vmatprep.subr.bf16.mxu0 %v843
    %1715 = vmatpush1.bf16.msra.mxu0 %v842
    %1716 = vmatprep.subr.bf16.mxu0 %v847
    %1717 = vmatpush1.bf16.msra.mxu0 %v846
    %1718 = vmatprep.subr.bf16.mxu0 0
    %1719 = vmatpush1.bf16.msra.mxu0 0
    %1720 = vmatprep.subr.bf16.mxu0 0
    %1721 = vmatpush1.bf16.msra.mxu0 0
    %1722 = vmatprep.subr.bf16.mxu0 0
    %1723 = vmatpush1.bf16.msra.mxu0 0
    %1724 = vmatprep.subr.bf16.mxu0 0
    %1725 = vmatpush1.bf16.msra.mxu0 0
    %1726 = vmatprep.subr.bf16.mxu0 0
    %1727 = vmatpush1.bf16.msra.mxu0 0
    %1728 = vmatprep.subr.bf16.mxu0 0
    %1729 = vmatpush1.bf16.msra.mxu0 0
    %1730 = vmatprep.subr.bf16.mxu0 0
    %1731 = vmatpush1.bf16.msra.mxu0 0
    %1732 = vmatprep.subr.bf16.mxu0 0
    %1733 = vmatpush1.bf16.msra.mxu0 0
    %1734 = vmatprep.mubr.bf16.mxu0 0
    %1735 = vmatmul.mubr.bf16.gmra.mrb[0].mxu0 %v1645
    %v1736 = vpop.f32.mrb[0].mxu0
    %v1737 = vadd.f32 0.0, %v1736
    %v1738 = vpop.f32.mrb[0].mxu0
    %v1739 = vadd.f32 0.0, %v1738
    %v1740 = vpop.f32.mrb[0].mxu0
    %v1741 = vadd.f32 0.0, %v1740
    %v1742 = vpop.f32.mrb[0].mxu0
    %v1743 = vadd.f32 0.0, %v1742
    %1744 = vdwg.mxu0
    %v1745 = vadd.f32 %v1651, %v1694
    %v1746 = vadd.f32 %v1652, %v1696
    %v1747 = vadd.f32 %v1653, %v1737
    %v1748 = vadd.f32 %v1654, %v1739
    %v1749 = vadd.f32 %v1655, %v1698
    %v1750 = vadd.f32 %v1656, %v1700
    %v1751 = vadd.f32 %v1657, %v1741
    %v1752 = vadd.f32 %v1658, %v1743
    %v1753 = vxor.u32 %v1745, 2147483648
    %v1754 = vxor.u32 %v1749, 2147483648
    %v1755 = vmul.f32 %v1753, 1.442695
    %v1756 = vpow.pop %v1755
    %v1757 = vmul.f32 %v1754, 1.442695
    %v1758 = vpow.pop %v1757
    %v1759 = vadd.f32 %v1756, 1.0
    %v1760 = vadd.f32 %v1758, 1.0
    %v1761 = vrcp.pop %v1759
    %v1762 = vmul.f32 1.0, %v1761
    %v1763 = vrcp.pop %v1760
    %v1764 = vmul.f32 1.0, %v1763
    %v1765 = vxor.u32 %v1746, 2147483648
    %v1766 = vxor.u32 %v1750, 2147483648
    %v1767 = vmul.f32 %v1765, 1.442695
    %v1768 = vpow.pop %v1767
    %v1769 = vmul.f32 %v1766, 1.442695
    %v1770 = vpow.pop %v1769
    %v1771 = vadd.f32 %v1768, 1.0
    %v1772 = vadd.f32 %v1770, 1.0
    %v1773 = vrcp.pop %v1771
    %v1774 = vmul.f32 1.0, %v1773
    %v1775 = vrcp.pop %v1772
    %v1776 = vmul.f32 1.0, %v1775
    %v1777 = vtanh.pop %v1747
    %v1778 = vtanh.pop %v1751
    %v1779 = vxor.u32 %v1748, 2147483648
    %v1780 = vxor.u32 %v1752, 2147483648
    %v1781 = vmul.f32 %v1779, 1.442695
    %v1782 = vpow.pop %v1781
    %v1783 = vmul.f32 %v1780, 1.442695
    %v1784 = vpow.pop %v1783
    %v1785 = vadd.f32 %v1782, 1.0
    %v1786 = vadd.f32 %v1784, 1.0
    %v1787 = vrcp.pop %v1785
    %v1788 = vmul.f32 1.0, %v1787
    %v1789 = vrcp.pop %v1786
    %v1790 = vmul.f32 1.0, %v1789
    %v1791 = vmul.f32 %v1774, %v1639
    %v1792 = vmul.f32 %v1776, %v1640
    %v1793 = vmul.f32 %v1762, %v1777
    %v1794 = vmul.f32 %v1764, %v1778
    %v1795 = vadd.f32 %v1791, %v1793
    %v1796 = vadd.f32 %v1792, %v1794
    %v1797 = vtanh.pop %v1795
    %v1798 = vtanh.pop %v1796
    %v1799 = vmul.f32 %v1788, %v1797
    %v1800 = vmul.f32 %v1790, %v1798
    %v1801 = vpack.c.bf16 %v1800, %v1799
    %s1802 = scalar_lea.vmem [#allocation4], 40
    %1803 = vst [vmem:[%s1802] sm:$0xff] %v1801
    %s1804 = smul.u32 12, 4
    %s1805 = smul.addr %s1804, 8
    %s1806 = scalar_lea.vmem [#allocation5], %s1805
    %v1807 = vld [vmem:[%s1806] sm:$0xff]
    %v1808 = vld [vmem:[%s1806 + $0x8] sm:$0xff]
    %v1809 = vld [vmem:[%s1806 + $0x10] sm:$0xff]
    %v1810 = vld [vmem:[%s1806 + $0x18] sm:$0xff]
    %v1811 = vld [vmem:[%s1806 + $0x20] sm:$0xff]
    %v1812 = vld [vmem:[%s1806 + $0x28] sm:$0xff]
    %v1813 = vld [vmem:[%s1806 + $0x30] sm:$0xff]
    %v1814 = vld [vmem:[%s1806 + $0x38] sm:$0xff]
    %1815 = vmatprep.subr.bf16.mxu0 %v817
    %1816 = vmatpush1.bf16.msra.mxu0 %v816
    %1817 = vmatprep.subr.bf16.mxu0 %v821
    %1818 = vmatpush1.bf16.msra.mxu0 %v820
    %1819 = vmatprep.subr.bf16.mxu0 %v825
    %1820 = vmatpush1.bf16.msra.mxu0 %v824
    %1821 = vmatprep.subr.bf16.mxu0 %v829
    %1822 = vmatpush1.bf16.msra.mxu0 %v828
    %1823 = vmatprep.subr.bf16.mxu0 %v833
    %1824 = vmatpush1.bf16.msra.mxu0 %v832
    %1825 = vmatprep.subr.bf16.mxu0 %v837
    %1826 = vmatpush1.bf16.msra.mxu0 %v836
    %1827 = vmatprep.subr.bf16.mxu0 %v841
    %1828 = vmatpush1.bf16.msra.mxu0 %v840
    %1829 = vmatprep.subr.bf16.mxu0 %v845
    %1830 = vmatpush1.bf16.msra.mxu0 %v844
    %1831 = vmatprep.subr.bf16.mxu0 0
    %1832 = vmatpush1.bf16.msra.mxu0 0
    %1833 = vmatprep.subr.bf16.mxu0 0
    %1834 = vmatpush1.bf16.msra.mxu0 0
    %1835 = vmatprep.subr.bf16.mxu0 0
    %1836 = vmatpush1.bf16.msra.mxu0 0
    %1837 = vmatprep.subr.bf16.mxu0 0
    %1838 = vmatpush1.bf16.msra.mxu0 0
    %1839 = vmatprep.subr.bf16.mxu0 0
    %1840 = vmatpush1.bf16.msra.mxu0 0
    %1841 = vmatprep.subr.bf16.mxu0 0
    %1842 = vmatpush1.bf16.msra.mxu0 0
    %1843 = vmatprep.subr.bf16.mxu0 0
    %1844 = vmatpush1.bf16.msra.mxu0 0
    %1845 = vmatprep.subr.bf16.mxu0 0
    %1846 = vmatpush1.bf16.msra.mxu0 0
    %1847 = vmatprep.mubr.bf16.mxu0 0
    %1848 = vmatmul.mubr.bf16.gmra.mrb[0].mxu0 %v1801
    %v1849 = vpop.f32.mrb[0].mxu0
    %v1850 = vadd.f32 0.0, %v1849
    %v1851 = vpop.f32.mrb[0].mxu0
    %v1852 = vadd.f32 0.0, %v1851
    %v1853 = vpop.f32.mrb[0].mxu0
    %v1854 = vadd.f32 0.0, %v1853
    %v1855 = vpop.f32.mrb[0].mxu0
    %v1856 = vadd.f32 0.0, %v1855
    %1857 = vdwg.mxu0
    %1858 = vmatprep.subr.bf16.mxu0 %v819
    %1859 = vmatpush1.bf16.msra.mxu0 %v818
    %1860 = vmatprep.subr.bf16.mxu0 %v823
    %1861 = vmatpush1.bf16.msra.mxu0 %v822
    %1862 = vmatprep.subr.bf16.mxu0 %v827
    %1863 = vmatpush1.bf16.msra.mxu0 %v826
    %1864 = vmatprep.subr.bf16.mxu0 %v831
    %1865 = vmatpush1.bf16.msra.mxu0 %v830
    %1866 = vmatprep.subr.bf16.mxu0 %v835
    %1867 = vmatpush1.bf16.msra.mxu0 %v834
    %1868 = vmatprep.subr.bf16.mxu0 %v839
    %1869 = vmatpush1.bf16.msra.mxu0 %v838
    %1870 = vmatprep.subr.bf16.mxu0 %v843
    %1871 = vmatpush1.bf16.msra.mxu0 %v842
    %1872 = vmatprep.subr.bf16.mxu0 %v847
    %1873 = vmatpush1.bf16.msra.mxu0 %v846
    %1874 = vmatprep.subr.bf16.mxu0 0
    %1875 = vmatpush1.bf16.msra.mxu0 0
    %1876 = vmatprep.subr.bf16.mxu0 0
    %1877 = vmatpush1.bf16.msra.mxu0 0
    %1878 = vmatprep.subr.bf16.mxu0 0
    %1879 = vmatpush1.bf16.msra.mxu0 0
    %1880 = vmatprep.subr.bf16.mxu0 0
    %1881 = vmatpush1.bf16.msra.mxu0 0
    %1882 = vmatprep.subr.bf16.mxu0 0
    %1883 = vmatpush1.bf16.msra.mxu0 0
    %1884 = vmatprep.subr.bf16.mxu0 0
    %1885 = vmatpush1.bf16.msra.mxu0 0
    %1886 = vmatprep.subr.bf16.mxu0 0
    %1887 = vmatpush1.bf16.msra.mxu0 0
    %1888 = vmatprep.subr.bf16.mxu0 0
    %1889 = vmatpush1.bf16.msra.mxu0 0
    %1890 = vmatprep.mubr.bf16.mxu0 0
    %1891 = vmatmul.mubr.bf16.gmra.mrb[0].mxu0 %v1801
    %v1892 = vpop.f32.mrb[0].mxu0
    %v1893 = vadd.f32 0.0, %v1892
    %v1894 = vpop.f32.mrb[0].mxu0
    %v1895 = vadd.f32 0.0, %v1894
    %v1896 = vpop.f32.mrb[0].mxu0
    %v1897 = vadd.f32 0.0, %v1896
    %v1898 = vpop.f32.mrb[0].mxu0
    %v1899 = vadd.f32 0.0, %v1898
    %1900 = vdwg.mxu0
    %v1901 = vadd.f32 %v1807, %v1850
    %v1902 = vadd.f32 %v1808, %v1852
    %v1903 = vadd.f32 %v1809, %v1893
    %v1904 = vadd.f32 %v1810, %v1895
    %v1905 = vadd.f32 %v1811, %v1854
    %v1906 = vadd.f32 %v1812, %v1856
    %v1907 = vadd.f32 %v1813, %v1897
    %v1908 = vadd.f32 %v1814, %v1899
    %v1909 = vxor.u32 %v1901, 2147483648
    %v1910 = vxor.u32 %v1905, 2147483648
    %v1911 = vmul.f32 %v1909, 1.442695
    %v1912 = vpow.pop %v1911
    %v1913 = vmul.f32 %v1910, 1.442695
    %v1914 = vpow.pop %v1913
    %v1915 = vadd.f32 %v1912, 1.0
    %v1916 = vadd.f32 %v1914, 1.0
    %v1917 = vrcp.pop %v1915
    %v1918 = vmul.f32 1.0, %v1917
    %v1919 = vrcp.pop %v1916
    %v1920 = vmul.f32 1.0, %v1919
    %v1921 = vxor.u32 %v1902, 2147483648
    %v1922 = vxor.u32 %v1906, 2147483648
    %v1923 = vmul.f32 %v1921, 1.442695
    %v1924 = vpow.pop %v1923
    %v1925 = vmul.f32 %v1922, 1.442695
    %v1926 = vpow.pop %v1925
    %v1927 = vadd.f32 %v1924, 1.0
    %v1928 = vadd.f32 %v1926, 1.0
    %v1929 = vrcp.pop %v1927
    %v1930 = vmul.f32 1.0, %v1929
    %v1931 = vrcp.pop %v1928
    %v1932 = vmul.f32 1.0, %v1931
    %v1933 = vtanh.pop %v1903
    %v1934 = vtanh.pop %v1907
    %v1935 = vxor.u32 %v1904, 2147483648
    %v1936 = vxor.u32 %v1908, 2147483648
    %v1937 = vmul.f32 %v1935, 1.442695
    %v1938 = vpow.pop %v1937
    %v1939 = vmul.f32 %v1936, 1.442695
    %v1940 = vpow.pop %v1939
    %v1941 = vadd.f32 %v1938, 1.0
    %v1942 = vadd.f32 %v1940, 1.0
    %v1943 = vrcp.pop %v1941
    %v1944 = vmul.f32 1.0, %v1943
    %v1945 = vrcp.pop %v1942
    %v1946 = vmul.f32 1.0, %v1945
    %v1947 = vmul.f32 %v1930, %v1795
    %v1948 = vmul.f32 %v1932, %v1796
    %v1949 = vmul.f32 %v1918, %v1933
    %v1950 = vmul.f32 %v1920, %v1934
    %v1951 = vadd.f32 %v1947, %v1949
    %v1952 = vadd.f32 %v1948, %v1950
    %v1953 = vtanh.pop %v1951
    %v1954 = vtanh.pop %v1952
    %v1955 = vmul.f32 %v1944, %v1953
    %v1956 = vmul.f32 %v1946, %v1954
    %v1957 = vpack.c.bf16 %v1956, %v1955
    %s1958 = scalar_lea.vmem [#allocation4], 48
    %1959 = vst [vmem:[%s1958] sm:$0xff] %v1957
    %s1960 = smul.u32 14, 4
    %s1961 = smul.addr %s1960, 8
    %s1962 = scalar_lea.vmem [#allocation5], %s1961
    %v1963 = vld [vmem:[%s1962] sm:$0xff]
    %v1964 = vld [vmem:[%s1962 + $0x8] sm:$0xff]
    %v1965 = vld [vmem:[%s1962 + $0x10] sm:$0xff]
    %v1966 = vld [vmem:[%s1962 + $0x18] sm:$0xff]
    %v1967 = vld [vmem:[%s1962 + $0x20] sm:$0xff]
    %v1968 = vld [vmem:[%s1962 + $0x28] sm:$0xff]
    %v1969 = vld [vmem:[%s1962 + $0x30] sm:$0xff]
    %v1970 = vld [vmem:[%s1962 + $0x38] sm:$0xff]
    %1971 = vmatprep.subr.bf16.mxu0 %v817
    %1972 = vmatpush1.bf16.msra.mxu0 %v816
    %1973 = vmatprep.subr.bf16.mxu0 %v821
    %1974 = vmatpush1.bf16.msra.mxu0 %v820
    %1975 = vmatprep.subr.bf16.mxu0 %v825
    %1976 = vmatpush1.bf16.msra.mxu0 %v824
    %1977 = vmatprep.subr.bf16.mxu0 %v829
    %1978 = vmatpush1.bf16.msra.mxu0 %v828
    %1979 = vmatprep.subr.bf16.mxu0 %v833
    %1980 = vmatpush1.bf16.msra.mxu0 %v832
    %1981 = vmatprep.subr.bf16.mxu0 %v837
    %1982 = vmatpush1.bf16.msra.mxu0 %v836
    %1983 = vmatprep.subr.bf16.mxu0 %v841
    %1984 = vmatpush1.bf16.msra.mxu0 %v840
    %1985 = vmatprep.subr.bf16.mxu0 %v845
    %1986 = vmatpush1.bf16.msra.mxu0 %v844
    %1987 = vmatprep.subr.bf16.mxu0 0
    %1988 = vmatpush1.bf16.msra.mxu0 0
    %1989 = vmatprep.subr.bf16.mxu0 0
    %1990 = vmatpush1.bf16.msra.mxu0 0
    %1991 = vmatprep.subr.bf16.mxu0 0
    %1992 = vmatpush1.bf16.msra.mxu0 0
    %1993 = vmatprep.subr.bf16.mxu0 0
    %1994 = vmatpush1.bf16.msra.mxu0 0
    %1995 = vmatprep.subr.bf16.mxu0 0
    %1996 = vmatpush1.bf16.msra.mxu0 0
    %1997 = vmatprep.subr.bf16.mxu0 0
    %1998 = vmatpush1.bf16.msra.mxu0 0
    %1999 = vmatprep.subr.bf16.mxu0 0
    %2000 = vmatpush1.bf16.msra.mxu0 0
    %2001 = vmatprep.subr.bf16.mxu0 0
    %2002 = vmatpush1.bf16.msra.mxu0 0
    %2003 = vmatprep.mubr.bf16.mxu0 0
    %2004 = vmatmul.mubr.bf16.gmra.mrb[0].mxu0 %v1957
    %v2005 = vpop.f32.mrb[0].mxu0
    %v2006 = vadd.f32 0.0, %v2005
    %v2007 = vpop.f32.mrb[0].mxu0
    %v2008 = vadd.f32 0.0, %v2007
    %v2009 = vpop.f32.mrb[0].mxu0
    %v2010 = vadd.f32 0.0, %v2009
    %v2011 = vpop.f32.mrb[0].mxu0
    %v2012 = vadd.f32 0.0, %v2011
    %2013 = vdwg.mxu0
    %2014 = vmatprep.subr.bf16.mxu0 %v819
    %2015 = vmatpush1.bf16.msra.mxu0 %v818
    %2016 = vmatprep.subr.bf16.mxu0 %v823
    %2017 = vmatpush1.bf16.msra.mxu0 %v822
    %2018 = vmatprep.subr.bf16.mxu0 %v827
    %2019 = vmatpush1.bf16.msra.mxu0 %v826
    %2020 = vmatprep.subr.bf16.mxu0 %v831
    %2021 = vmatpush1.bf16.msra.mxu0 %v830
    %2022 = vmatprep.subr.bf16.mxu0 %v835
    %2023 = vmatpush1.bf16.msra.mxu0 %v834
    %2024 = vmatprep.subr.bf16.mxu0 %v839
    %2025 = vmatpush1.bf16.msra.mxu0 %v838
    %2026 = vmatprep.subr.bf16.mxu0 %v843
    %2027 = vmatpush1.bf16.msra.mxu0 %v842
    %2028 = vmatprep.subr.bf16.mxu0 %v847
    %2029 = vmatpush1.bf16.msra.mxu0 %v846
    %2030 = vmatprep.subr.bf16.mxu0 0
    %2031 = vmatpush1.bf16.msra.mxu0 0
    %2032 = vmatprep.subr.bf16.mxu0 0
    %2033 = vmatpush1.bf16.msra.mxu0 0
    %2034 = vmatprep.subr.bf16.mxu0 0
    %2035 = vmatpush1.bf16.msra.mxu0 0
    %2036 = vmatprep.subr.bf16.mxu0 0
    %2037 = vmatpush1.bf16.msra.mxu0 0
    %2038 = vmatprep.subr.bf16.mxu0 0
    %2039 = vmatpush1.bf16.msra.mxu0 0
    %2040 = vmatprep.subr.bf16.mxu0 0
    %2041 = vmatpush1.bf16.msra.mxu0 0
    %2042 = vmatprep.subr.bf16.mxu0 0
    %2043 = vmatpush1.bf16.msra.mxu0 0
    %2044 = vmatprep.subr.bf16.mxu0 0
    %2045 = vmatpush1.bf16.msra.mxu0 0
    %2046 = vmatprep.mubr.bf16.mxu0 0
    %2047 = vmatmul.mubr.bf16.gmra.mrb[0].mxu0 %v1957
    %v2048 = vpop.f32.mrb[0].mxu0
    %v2049 = vadd.f32 0.0, %v2048
    %v2050 = vpop.f32.mrb[0].mxu0
    %v2051 = vadd.f32 0.0, %v2050
    %v2052 = vpop.f32.mrb[0].mxu0
    %v2053 = vadd.f32 0.0, %v2052
    %v2054 = vpop.f32.mrb[0].mxu0
    %v2055 = vadd.f32 0.0, %v2054
    %2056 = vdwg.mxu0
    %v2057 = vadd.f32 %v1963, %v2006
    %v2058 = vadd.f32 %v1964, %v2008
    %v2059 = vadd.f32 %v1965, %v2049
    %v2060 = vadd.f32 %v1966, %v2051
    %v2061 = vadd.f32 %v1967, %v2010
    %v2062 = vadd.f32 %v1968, %v2012
    %v2063 = vadd.f32 %v1969, %v2053
    %v2064 = vadd.f32 %v1970, %v2055
    %v2065 = vxor.u32 %v2057, 2147483648
    %v2066 = vxor.u32 %v2061, 2147483648
    %v2067 = vmul.f32 %v2065, 1.442695
    %v2068 = vpow.pop %v2067
    %v2069 = vmul.f32 %v2066, 1.442695
    %v2070 = vpow.pop %v2069
    %v2071 = vadd.f32 %v2068, 1.0
    %v2072 = vadd.f32 %v2070, 1.0
    %v2073 = vrcp.pop %v2071
    %v2074 = vmul.f32 1.0, %v2073
    %v2075 = vrcp.pop %v2072
    %v2076 = vmul.f32 1.0, %v2075
    %v2077 = vxor.u32 %v2058, 2147483648
    %v2078 = vxor.u32 %v2062, 2147483648
    %v2079 = vmul.f32 %v2077, 1.442695
    %v2080 = vpow.pop %v2079
    %v2081 = vmul.f32 %v2078, 1.442695
    %v2082 = vpow.pop %v2081
    %v2083 = vadd.f32 %v2080, 1.0
    %v2084 = vadd.f32 %v2082, 1.0
    %v2085 = vrcp.pop %v2083
    %v2086 = vmul.f32 1.0, %v2085
    %v2087 = vrcp.pop %v2084
    %v2088 = vmul.f32 1.0, %v2087
    %v2089 = vtanh.pop %v2059
    %v2090 = vtanh.pop %v2063
    %v2091 = vxor.u32 %v2060, 2147483648
    %v2092 = vxor.u32 %v2064, 2147483648
    %v2093 = vmul.f32 %v2091, 1.442695
    %v2094 = vpow.pop %v2093
    %v2095 = vmul.f32 %v2092, 1.442695
    %v2096 = vpow.pop %v2095
    %v2097 = vadd.f32 %v2094, 1.0
    %v2098 = vadd.f32 %v2096, 1.0
    %v2099 = vrcp.pop %v2097
    %v2100 = vmul.f32 1.0, %v2099
    %v2101 = vrcp.pop %v2098
    %v2102 = vmul.f32 1.0, %v2101
    %v2103 = vmul.f32 %v2086, %v1951
    %v2104 = vmul.f32 %v2088, %v1952
    %v2105 = vmul.f32 %v2074, %v2089
    %v2106 = vmul.f32 %v2076, %v2090
    %v2107 = vadd.f32 %v2103, %v2105
    %v2108 = vadd.f32 %v2104, %v2106
    %v2109 = vtanh.pop %v2107
    %v2110 = vtanh.pop %v2108
    %v2111 = vmul.f32 %v2100, %v2109
    %v2112 = vmul.f32 %v2102, %v2110
    %v2113 = vpack.c.bf16 %v2112, %v2111
    %s2114 = scalar_lea.vmem [#allocation4], 56
    %2115 = vst [vmem:[%s2114] sm:$0xff] %v2113
    %2116 = vst [vmem:[#allocation2] sm:$0xff] %v2113
    %2117 = vst [vmem:[#allocation3] sm:$0xff] %v2107
    %2118 = vst [vmem:[#allocation3 + $0x8] sm:$0xff] %v2108
    %v2119 = vld [vmem:[#allocation4] sm:$0xff]
    %v2120 = vld [vmem:[#allocation4 + $0x8] sm:$0xff]
    %v2121 = vld [vmem:[#allocation4 + $0x10] sm:$0xff]
    %v2122 = vld [vmem:[#allocation4 + $0x18] sm:$0xff]
    %v2123 = vld [vmem:[#allocation4 + $0x20] sm:$0xff]
    %v2124 = vld [vmem:[#allocation4 + $0x28] sm:$0xff]
    %v2125 = vld [vmem:[#allocation4 + $0x30] sm:$0xff]
    %v2126 = vld [vmem:[#allocation4 + $0x38] sm:$0xff]
    %v2127 = vld [vmem:[#allocation12] sm:$0xff]
    %v2128 = vld [vmem:[#allocation12 + $0x8] sm:$0xff]
    %v2129 = vld [vmem:[#allocation12 + $0x10] sm:$0xff]
    %v2130 = vld [vmem:[#allocation12 + $0x18] sm:$0xff]
    %v2131 = vld [vmem:[#allocation12 + $0x20] sm:$0xff]
    %v2132 = vld [vmem:[#allocation12 + $0x28] sm:$0xff]
    %v2133 = vld [vmem:[#allocation12 + $0x30] sm:$0xff]
    %v2134 = vld [vmem:[#allocation12 + $0x38] sm:$0xff]
    %v2135 = vld [vmem:[#allocation12 + $0x40] sm:$0xff]
    %v2136 = vld [vmem:[#allocation12 + $0x48] sm:$0xff]
    %v2137 = vld [vmem:[#allocation12 + $0x50] sm:$0xff]
    %v2138 = vld [vmem:[#allocation12 + $0x58] sm:$0xff]
    %v2139 = vld [vmem:[#allocation12 + $0x60] sm:$0xff]
    %v2140 = vld [vmem:[#allocation12 + $0x68] sm:$0xff]
    %v2141 = vld [vmem:[#allocation12 + $0x70] sm:$0xff]
    %v2142 = vld [vmem:[#allocation12 + $0x78] sm:$0xff]
    %v2143 = vld [vmem:[#allocation12 + $0x80] sm:$0xff]
    %v2144 = vld [vmem:[#allocation12 + $0x88] sm:$0xff]
    %v2145 = vld [vmem:[#allocation12 + $0x90] sm:$0xff]
    %v2146 = vld [vmem:[#allocation12 + $0x98] sm:$0xff]
    %v2147 = vld [vmem:[#allocation12 + $0xa0] sm:$0xff]
    %v2148 = vld [vmem:[#allocation12 + $0xa8] sm:$0xff]
    %v2149 = vld [vmem:[#allocation12 + $0xb0] sm:$0xff]
    %v2150 = vld [vmem:[#allocation12 + $0xb8] sm:$0xff]
    %v2151 = vld [vmem:[#allocation12 + $0xc0] sm:$0xff]
    %v2152 = vld [vmem:[#allocation12 + $0xc8] sm:$0xff]
    %v2153 = vld [vmem:[#allocation12 + $0xd0] sm:$0xff]
    %v2154 = vld [vmem:[#allocation12 + $0xd8] sm:$0xff]
    %v2155 = vld [vmem:[#allocation12 + $0xe0] sm:$0xff]
    %v2156 = vld [vmem:[#allocation12 + $0xe8] sm:$0xff]
    %v2157 = vld [vmem:[#allocation12 + $0xf0] sm:$0xff]
    %v2158 = vld [vmem:[#allocation12 + $0xf8] sm:$0xff]
    %v2159 = vld [vmem:[%s6] sm:$0xf]
    %v2161 = vlaneseq
    %v2162 = vshrl.u32 %v2161, 7
    %v2163 = vsub.s32 0, %v2162
    %v2164 = vrot.slane %v2159, %v2163
    %v2165 = vlaneseq
    %v2166 = vshrl.u32 %v2165, 7
    %v2167 = vsub.s32 1, %v2166
    %v2168 = vrot.slane %v2159, %v2167
    %v2169 = vlaneseq
    %v2170 = vshrl.u32 %v2169, 7
    %v2171 = vsub.s32 2, %v2170
    %v2172 = vrot.slane %v2159, %v2171
    %v2173 = vlaneseq
    %v2174 = vshrl.u32 %v2173, 7
    %v2175 = vsub.s32 3, %v2174
    %v2176 = vrot.slane %v2159, %v2175
    %v2213 = vunpack.c.l.b16 %v2127
    %v2214 = vunpack.c.h.b16 %v2127
    %v2215 = vunpack.c.l.b16 %v2128
    %v2216 = vunpack.c.h.b16 %v2128
    %v2217 = vunpack.c.l.b16 %v2129
    %v2218 = vunpack.c.h.b16 %v2129
    %v2219 = vunpack.c.l.b16 %v2130
    %v2220 = vunpack.c.h.b16 %v2130
    %v2221 = vunpack.c.l.b16 %v2131
    %v2222 = vunpack.c.h.b16 %v2131
    %v2223 = vunpack.c.l.b16 %v2132
    %v2224 = vunpack.c.h.b16 %v2132
    %v2225 = vunpack.c.l.b16 %v2133
    %v2226 = vunpack.c.h.b16 %v2133
    %v2227 = vunpack.c.l.b16 %v2134
    %v2228 = vunpack.c.h.b16 %v2134
    %v2229 = vunpack.c.l.b16 %v2135
    %v2230 = vunpack.c.h.b16 %v2135
    %v2231 = vunpack.c.l.b16 %v2136
    %v2232 = vunpack.c.h.b16 %v2136
    %v2233 = vunpack.c.l.b16 %v2137
    %v2234 = vunpack.c.h.b16 %v2137
    %v2235 = vunpack.c.l.b16 %v2138
    %v2236 = vunpack.c.h.b16 %v2138
    %v2237 = vunpack.c.l.b16 %v2139
    %v2238 = vunpack.c.h.b16 %v2139
    %v2239 = vunpack.c.l.b16 %v2140
    %v2240 = vunpack.c.h.b16 %v2140
    %v2241 = vunpack.c.l.b16 %v2141
    %v2242 = vunpack.c.h.b16 %v2141
    %v2243 = vunpack.c.l.b16 %v2142
    %v2244 = vunpack.c.h.b16 %v2142
    %v2245 = vunpack.c.l.b16 %v2143
    %v2246 = vunpack.c.h.b16 %v2143
    %v2247 = vunpack.c.l.b16 %v2144
    %v2248 = vunpack.c.h.b16 %v2144
    %v2249 = vunpack.c.l.b16 %v2145
    %v2250 = vunpack.c.h.b16 %v2145
    %v2251 = vunpack.c.l.b16 %v2146
    %v2252 = vunpack.c.h.b16 %v2146
    %v2253 = vunpack.c.l.b16 %v2147
    %v2254 = vunpack.c.h.b16 %v2147
    %v2255 = vunpack.c.l.b16 %v2148
    %v2256 = vunpack.c.h.b16 %v2148
    %v2257 = vunpack.c.l.b16 %v2149
    %v2258 = vunpack.c.h.b16 %v2149
    %v2259 = vunpack.c.l.b16 %v2150
    %v2260 = vunpack.c.h.b16 %v2150
    %v2261 = vunpack.c.l.b16 %v2151
    %v2262 = vunpack.c.h.b16 %v2151
    %v2263 = vunpack.c.l.b16 %v2152
    %v2264 = vunpack.c.h.b16 %v2152
    %v2265 = vunpack.c.l.b16 %v2153
    %v2266 = vunpack.c.h.b16 %v2153
    %v2267 = vunpack.c.l.b16 %v2154
    %v2268 = vunpack.c.h.b16 %v2154
    %v2269 = vunpack.c.l.b16 %v2155
    %v2270 = vunpack.c.h.b16 %v2155
    %v2271 = vunpack.c.l.b16 %v2156
    %v2272 = vunpack.c.h.b16 %v2156
    %v2273 = vunpack.c.l.b16 %v2157
    %v2274 = vunpack.c.h.b16 %v2157
    %v2275 = vunpack.c.l.b16 %v2158
    %v2276 = vunpack.c.h.b16 %v2158
    %v2277 = vpack.c.b16 %v2217, %v2213
    %v2278 = vpack.c.b16 %v2218, %v2214
    %v2279 = vpack.c.b16 %v2219, %v2215
    %v2280 = vpack.c.b16 %v2220, %v2216
    %v2281 = vpack.c.b16 %v2225, %v2221
    %v2282 = vpack.c.b16 %v2226, %v2222
    %v2283 = vpack.c.b16 %v2227, %v2223
    %v2284 = vpack.c.b16 %v2228, %v2224
    %v2285 = vpack.c.b16 %v2233, %v2229
    %v2286 = vpack.c.b16 %v2234, %v2230
    %v2287 = vpack.c.b16 %v2235, %v2231
    %v2288 = vpack.c.b16 %v2236, %v2232
    %v2289 = vpack.c.b16 %v2241, %v2237
    %v2290 = vpack.c.b16 %v2242, %v2238
    %v2291 = vpack.c.b16 %v2243, %v2239
    %v2292 = vpack.c.b16 %v2244, %v2240
    %v2293 = vpack.c.b16 %v2249, %v2245
    %v2294 = vpack.c.b16 %v2250, %v2246
    %v2295 = vpack.c.b16 %v2251, %v2247
    %v2296 = vpack.c.b16 %v2252, %v2248
    %v2297 = vpack.c.b16 %v2257, %v2253
    %v2298 = vpack.c.b16 %v2258, %v2254
    %v2299 = vpack.c.b16 %v2259, %v2255
    %v2300 = vpack.c.b16 %v2260, %v2256
    %v2301 = vpack.c.b16 %v2265, %v2261
    %v2302 = vpack.c.b16 %v2266, %v2262
    %v2303 = vpack.c.b16 %v2267, %v2263
    %v2304 = vpack.c.b16 %v2268, %v2264
    %v2305 = vpack.c.b16 %v2273, %v2269
    %v2306 = vpack.c.b16 %v2274, %v2270
    %v2307 = vpack.c.b16 %v2275, %v2271
    %v2308 = vpack.c.b16 %v2276, %v2272
    %2341 = vmatprep.subr.bf16.mxu0 %v2278
    %2342 = vmatpush1.bf16.msra.mxu0 %v2277
    %2343 = vmatprep.subr.bf16.mxu0 %v2282
    %2344 = vmatpush1.bf16.msra.mxu0 %v2281
    %2345 = vmatprep.subr.bf16.mxu0 %v2286
    %2346 = vmatpush1.bf16.msra.mxu0 %v2285
    %2347 = vmatprep.subr.bf16.mxu0 %v2290
    %2348 = vmatpush1.bf16.msra.mxu0 %v2289
    %2349 = vmatprep.subr.bf16.mxu0 %v2294
    %2350 = vmatpush1.bf16.msra.mxu0 %v2293
    %2351 = vmatprep.subr.bf16.mxu0 %v2298
    %2352 = vmatpush1.bf16.msra.mxu0 %v2297
    %2353 = vmatprep.subr.bf16.mxu0 %v2302
    %2354 = vmatpush1.bf16.msra.mxu0 %v2301
    %2355 = vmatprep.subr.bf16.mxu0 %v2306
    %2356 = vmatpush1.bf16.msra.mxu0 %v2305
    %2357 = vmatprep.subr.bf16.mxu0 0
    %2358 = vmatpush1.bf16.msra.mxu0 0
    %2359 = vmatprep.subr.bf16.mxu0 0
    %2360 = vmatpush1.bf16.msra.mxu0 0
    %2361 = vmatprep.subr.bf16.mxu0 0
    %2362 = vmatpush1.bf16.msra.mxu0 0
    %2363 = vmatprep.subr.bf16.mxu0 0
    %2364 = vmatpush1.bf16.msra.mxu0 0
    %2365 = vmatprep.subr.bf16.mxu0 0
    %2366 = vmatpush1.bf16.msra.mxu0 0
    %2367 = vmatprep.subr.bf16.mxu0 0
    %2368 = vmatpush1.bf16.msra.mxu0 0
    %2369 = vmatprep.subr.bf16.mxu0 0
    %2370 = vmatpush1.bf16.msra.mxu0 0
    %2371 = vmatprep.subr.bf16.mxu0 0
    %2372 = vmatpush1.bf16.msra.mxu0 0
    %2373 = vmatprep.mubr.bf16.mxu0 0
    %2374 = vmatmul.mubr.bf16.gmra.mrb[0].mxu0 %v2119
    %v2375 = vpop.f32.mrb[0].mxu0
    %v2376 = vadd.f32 %v2164, %v2375
    %v2377 = vpop.f32.mrb[0].mxu0
    %v2378 = vadd.f32 %v2168, %v2377
    %v2379 = vpop.f32.mrb[0].mxu0
    %v2380 = vadd.f32 %v2164, %v2379
    %v2381 = vpop.f32.mrb[0].mxu0
    %v2382 = vadd.f32 %v2168, %v2381
    %2383 = vmatprep.mubr.bf16.mxu0 0
    %2384 = vmatmul.mubr.bf16.gmra.mrb[0].mxu0 %v2120
    %v2385 = vpop.f32.mrb[0].mxu0
    %v2386 = vadd.f32 %v2164, %v2385
    %v2387 = vpop.f32.mrb[0].mxu0
    %v2388 = vadd.f32 %v2168, %v2387
    %v2389 = vpop.f32.mrb[0].mxu0
    %v2390 = vadd.f32 %v2164, %v2389
    %v2391 = vpop.f32.mrb[0].mxu0
    %v2392 = vadd.f32 %v2168, %v2391
    %2393 = vmatprep.mubr.bf16.mxu0 0
    %2394 = vmatmul.mubr.bf16.gmra.mrb[0].mxu0 %v2121
    %v2395 = vpop.f32.mrb[0].mxu0
    %v2396 = vadd.f32 %v2164, %v2395
    %v2397 = vpop.f32.mrb[0].mxu0
    %v2398 = vadd.f32 %v2168, %v2397
    %v2399 = vpop.f32.mrb[0].mxu0
    %v2400 = vadd.f32 %v2164, %v2399
    %v2401 = vpop.f32.mrb[0].mxu0
    %v2402 = vadd.f32 %v2168, %v2401
    %2403 = vmatprep.mubr.bf16.mxu0 0
    %2404 = vmatmul.mubr.bf16.gmra.mrb[0].mxu0 %v2122
    %v2405 = vpop.f32.mrb[0].mxu0
    %v2406 = vadd.f32 %v2164, %v2405
    %v2407 = vpop.f32.mrb[0].mxu0
    %v2408 = vadd.f32 %v2168, %v2407
    %v2409 = vpop.f32.mrb[0].mxu0
    %v2410 = vadd.f32 %v2164, %v2409
    %v2411 = vpop.f32.mrb[0].mxu0
    %v2412 = vadd.f32 %v2168, %v2411
    %2413 = vmatprep.mubr.bf16.mxu0 0
    %2414 = vmatmul.mubr.bf16.gmra.mrb[0].mxu0 %v2123
    %v2415 = vpop.f32.mrb[0].mxu0
    %v2416 = vadd.f32 %v2164, %v2415
    %v2417 = vpop.f32.mrb[0].mxu0
    %v2418 = vadd.f32 %v2168, %v2417
    %v2419 = vpop.f32.mrb[0].mxu0
    %v2420 = vadd.f32 %v2164, %v2419
    %v2421 = vpop.f32.mrb[0].mxu0
    %v2422 = vadd.f32 %v2168, %v2421
    %2423 = vmatprep.mubr.bf16.mxu0 0
    %2424 = vmatmul.mubr.bf16.gmra.mrb[0].mxu0 %v2124
    %v2425 = vpop.f32.mrb[0].mxu0
    %v2426 = vadd.f32 %v2164, %v2425
    %v2427 = vpop.f32.mrb[0].mxu0
    %v2428 = vadd.f32 %v2168, %v2427
    %v2429 = vpop.f32.mrb[0].mxu0
    %v2430 = vadd.f32 %v2164, %v2429
    %v2431 = vpop.f32.mrb[0].mxu0
    %v2432 = vadd.f32 %v2168, %v2431
    %2433 = vmatprep.mubr.bf16.mxu0 0
    %2434 = vmatmul.mubr.bf16.gmra.mrb[0].mxu0 %v2125
    %v2435 = vpop.f32.mrb[0].mxu0
    %v2436 = vadd.f32 %v2164, %v2435
    %v2437 = vpop.f32.mrb[0].mxu0
    %v2438 = vadd.f32 %v2168, %v2437
    %v2439 = vpop.f32.mrb[0].mxu0
    %v2440 = vadd.f32 %v2164, %v2439
    %v2441 = vpop.f32.mrb[0].mxu0
    %v2442 = vadd.f32 %v2168, %v2441
    %2443 = vmatprep.mubr.bf16.mxu0 0
    %2444 = vmatmul.mubr.bf16.gmra.mrb[0].mxu0 %v2126
    %v2445 = vpop.f32.mrb[0].mxu0
    %v2446 = vadd.f32 %v2164, %v2445
    %v2447 = vpop.f32.mrb[0].mxu0
    %v2448 = vadd.f32 %v2168, %v2447
    %v2449 = vpop.f32.mrb[0].mxu0
    %v2450 = vadd.f32 %v2164, %v2449
    %v2451 = vpop.f32.mrb[0].mxu0
    %v2452 = vadd.f32 %v2168, %v2451
    %2453 = vdwg.mxu0
    %2454 = vmatprep.subr.bf16.mxu0 %v2280
    %2455 = vmatpush1.bf16.msra.mxu0 %v2279
    %2456 = vmatprep.subr.bf16.mxu0 %v2284
    %2457 = vmatpush1.bf16.msra.mxu0 %v2283
    %2458 = vmatprep.subr.bf16.mxu0 %v2288
    %2459 = vmatpush1.bf16.msra.mxu0 %v2287
    %2460 = vmatprep.subr.bf16.mxu0 %v2292
    %2461 = vmatpush1.bf16.msra.mxu0 %v2291
    %2462 = vmatprep.subr.bf16.mxu0 %v2296
    %2463 = vmatpush1.bf16.msra.mxu0 %v2295
    %2464 = vmatprep.subr.bf16.mxu0 %v2300
    %2465 = vmatpush1.bf16.msra.mxu0 %v2299
    %2466 = vmatprep.subr.bf16.mxu0 %v2304
    %2467 = vmatpush1.bf16.msra.mxu0 %v2303
    %2468 = vmatprep.subr.bf16.mxu0 %v2308
    %2469 = vmatpush1.bf16.msra.mxu0 %v2307
    %2470 = vmatprep.subr.bf16.mxu0 0
    %2471 = vmatpush1.bf16.msra.mxu0 0
    %2472 = vmatprep.subr.bf16.mxu0 0
    %2473 = vmatpush1.bf16.msra.mxu0 0
    %2474 = vmatprep.subr.bf16.mxu0 0
    %2475 = vmatpush1.bf16.msra.mxu0 0
    %2476 = vmatprep.subr.bf16.mxu0 0
    %2477 = vmatpush1.bf16.msra.mxu0 0
    %2478 = vmatprep.subr.bf16.mxu0 0
    %2479 = vmatpush1.bf16.msra.mxu0 0
    %2480 = vmatprep.subr.bf16.mxu0 0
    %2481 = vmatpush1.bf16.msra.mxu0 0
    %2482 = vmatprep.subr.bf16.mxu0 0
    %2483 = vmatpush1.bf16.msra.mxu0 0
    %2484 = vmatprep.subr.bf16.mxu0 0
    %2485 = vmatpush1.bf16.msra.mxu0 0
    %2486 = vmatprep.mubr.bf16.mxu0 0
    %2487 = vmatmul.mubr.bf16.gmra.mrb[0].mxu0 %v2119
    %v2488 = vpop.f32.mrb[0].mxu0
    %v2489 = vadd.f32 %v2172, %v2488
    %v2490 = vpop.f32.mrb[0].mxu0
    %v2491 = vadd.f32 %v2176, %v2490
    %v2492 = vpop.f32.mrb[0].mxu0
    %v2493 = vadd.f32 %v2172, %v2492
    %v2494 = vpop.f32.mrb[0].mxu0
    %v2495 = vadd.f32 %v2176, %v2494
    %2496 = vmatprep.mubr.bf16.mxu0 0
    %2497 = vmatmul.mubr.bf16.gmra.mrb[0].mxu0 %v2120
    %v2498 = vpop.f32.mrb[0].mxu0
    %v2499 = vadd.f32 %v2172, %v2498
    %v2500 = vpop.f32.mrb[0].mxu0
    %v2501 = vadd.f32 %v2176, %v2500
    %v2502 = vpop.f32.mrb[0].mxu0
    %v2503 = vadd.f32 %v2172, %v2502
    %v2504 = vpop.f32.mrb[0].mxu0
    %v2505 = vadd.f32 %v2176, %v2504
    %2506 = vmatprep.mubr.bf16.mxu0 0
    %2507 = vmatmul.mubr.bf16.gmra.mrb[0].mxu0 %v2121
    %v2508 = vpop.f32.mrb[0].mxu0
    %v2509 = vadd.f32 %v2172, %v2508
    %v2510 = vpop.f32.mrb[0].mxu0
    %v2511 = vadd.f32 %v2176, %v2510
    %v2512 = vpop.f32.mrb[0].mxu0
    %v2513 = vadd.f32 %v2172, %v2512
    %v2514 = vpop.f32.mrb[0].mxu0
    %v2515 = vadd.f32 %v2176, %v2514
    %2516 = vmatprep.mubr.bf16.mxu0 0
    %2517 = vmatmul.mubr.bf16.gmra.mrb[0].mxu0 %v2122
    %v2518 = vpop.f32.mrb[0].mxu0
    %v2519 = vadd.f32 %v2172, %v2518
    %v2520 = vpop.f32.mrb[0].mxu0
    %v2521 = vadd.f32 %v2176, %v2520
    %v2522 = vpop.f32.mrb[0].mxu0
    %v2523 = vadd.f32 %v2172, %v2522
    %v2524 = vpop.f32.mrb[0].mxu0
    %v2525 = vadd.f32 %v2176, %v2524
    %2526 = vmatprep.mubr.bf16.mxu0 0
    %2527 = vmatmul.mubr.bf16.gmra.mrb[0].mxu0 %v2123
    %v2528 = vpop.f32.mrb[0].mxu0
    %v2529 = vadd.f32 %v2172, %v2528
    %v2530 = vpop.f32.mrb[0].mxu0
    %v2531 = vadd.f32 %v2176, %v2530
    %v2532 = vpop.f32.mrb[0].mxu0
    %v2533 = vadd.f32 %v2172, %v2532
    %v2534 = vpop.f32.mrb[0].mxu0
    %v2535 = vadd.f32 %v2176, %v2534
    %2536 = vmatprep.mubr.bf16.mxu0 0
    %2537 = vmatmul.mubr.bf16.gmra.mrb[0].mxu0 %v2124
    %v2538 = vpop.f32.mrb[0].mxu0
    %v2539 = vadd.f32 %v2172, %v2538
    %v2540 = vpop.f32.mrb[0].mxu0
    %v2541 = vadd.f32 %v2176, %v2540
    %v2542 = vpop.f32.mrb[0].mxu0
    %v2543 = vadd.f32 %v2172, %v2542
    %v2544 = vpop.f32.mrb[0].mxu0
    %v2545 = vadd.f32 %v2176, %v2544
    %2546 = vmatprep.mubr.bf16.mxu0 0
    %2547 = vmatmul.mubr.bf16.gmra.mrb[0].mxu0 %v2125
    %v2548 = vpop.f32.mrb[0].mxu0
    %v2549 = vadd.f32 %v2172, %v2548
    %v2550 = vpop.f32.mrb[0].mxu0
    %v2551 = vadd.f32 %v2176, %v2550
    %v2552 = vpop.f32.mrb[0].mxu0
    %v2553 = vadd.f32 %v2172, %v2552
    %v2554 = vpop.f32.mrb[0].mxu0
    %v2555 = vadd.f32 %v2176, %v2554
    %2556 = vmatprep.mubr.bf16.mxu0 0
    %2557 = vmatmul.mubr.bf16.gmra.mrb[0].mxu0 %v2126
    %v2558 = vpop.f32.mrb[0].mxu0
    %v2559 = vadd.f32 %v2172, %v2558
    %v2560 = vpop.f32.mrb[0].mxu0
    %v2561 = vadd.f32 %v2176, %v2560
    %v2562 = vpop.f32.mrb[0].mxu0
    %v2563 = vadd.f32 %v2172, %v2562
    %v2564 = vpop.f32.mrb[0].mxu0
    %v2565 = vadd.f32 %v2176, %v2564
    %2566 = vdwg.mxu0
    %2567 = vst [vmem:[#allocation5] sm:$0xff] %v2376
    %2568 = vst [vmem:[#allocation5 + $0x8] sm:$0xff] %v2378
    %2569 = vst [vmem:[#allocation5 + $0x10] sm:$0xff] %v2489
    %2570 = vst [vmem:[#allocation5 + $0x18] sm:$0xff] %v2491
    %2571 = vst [vmem:[#allocation5 + $0x20] sm:$0xff] %v2380
    %2572 = vst [vmem:[#allocation5 + $0x28] sm:$0xff] %v2382
    %2573 = vst [vmem:[#allocation5 + $0x30] sm:$0xff] %v2493
    %2574 = vst [vmem:[#allocation5 + $0x38] sm:$0xff] %v2495
    %2575 = vst [vmem:[#allocation5 + $0x40] sm:$0xff] %v2386
    %2576 = vst [vmem:[#allocation5 + $0x48] sm:$0xff] %v2388
    %2577 = vst [vmem:[#allocation5 + $0x50] sm:$0xff] %v2499
    %2578 = vst [vmem:[#allocation5 + $0x58] sm:$0xff] %v2501
    %2579 = vst [vmem:[#allocation5 + $0x60] sm:$0xff] %v2390
    %2580 = vst [vmem:[#allocation5 + $0x68] sm:$0xff] %v2392
    %2581 = vst [vmem:[#allocation5 + $0x70] sm:$0xff] %v2503
    %2582 = vst [vmem:[#allocation5 + $0x78] sm:$0xff] %v2505
    %2583 = vst [vmem:[#allocation5 + $0x80] sm:$0xff] %v2396
    %2584 = vst [vmem:[#allocation5 + $0x88] sm:$0xff] %v2398
    %2585 = vst [vmem:[#allocation5 + $0x90] sm:$0xff] %v2509
    %2586 = vst [vmem:[#allocation5 + $0x98] sm:$0xff] %v2511
    %2587 = vst [vmem:[#allocation5 + $0xa0] sm:$0xff] %v2400
    %2588 = vst [vmem:[#allocation5 + $0xa8] sm:$0xff] %v2402
    %2589 = vst [vmem:[#allocation5 + $0xb0] sm:$0xff] %v2513
    %2590 = vst [vmem:[#allocation5 + $0xb8] sm:$0xff] %v2515
    %2591 = vst [vmem:[#allocation5 + $0xc0] sm:$0xff] %v2406
    %2592 = vst [vmem:[#allocation5 + $0xc8] sm:$0xff] %v2408
    %2593 = vst [vmem:[#allocation5 + $0xd0] sm:$0xff] %v2519
    %2594 = vst [vmem:[#allocation5 + $0xd8] sm:$0xff] %v2521
    %2595 = vst [vmem:[#allocation5 + $0xe0] sm:$0xff] %v2410
    %2596 = vst [vmem:[#allocation5 + $0xe8] sm:$0xff] %v2412
    %2597 = vst [vmem:[#allocation5 + $0xf0] sm:$0xff] %v2523
    %2598 = vst [vmem:[#allocation5 + $0xf8] sm:$0xff] %v2525
    %2599 = vst [vmem:[#allocation5 + $0x100] sm:$0xff] %v2416
    %2600 = vst [vmem:[#allocation5 + $0x108] sm:$0xff] %v2418
    %2601 = vst [vmem:[#allocation5 + $0x110] sm:$0xff] %v2529
    %2602 = vst [vmem:[#allocation5 + $0x118] sm:$0xff] %v2531
    %2603 = vst [vmem:[#allocation5 + $0x120] sm:$0xff] %v2420
    %2604 = vst [vmem:[#allocation5 + $0x128] sm:$0xff] %v2422
    %2605 = vst [vmem:[#allocation5 + $0x130] sm:$0xff] %v2533
    %2606 = vst [vmem:[#allocation5 + $0x138] sm:$0xff] %v2535
    %2607 = vst [vmem:[#allocation5 + $0x140] sm:$0xff] %v2426
    %2608 = vst [vmem:[#allocation5 + $0x148] sm:$0xff] %v2428
    %2609 = vst [vmem:[#allocation5 + $0x150] sm:$0xff] %v2539
    %2610 = vst [vmem:[#allocation5 + $0x158] sm:$0xff] %v2541
    %2611 = vst [vmem:[#allocation5 + $0x160] sm:$0xff] %v2430
    %2612 = vst [vmem:[#allocation5 + $0x168] sm:$0xff] %v2432
    %2613 = vst [vmem:[#allocation5 + $0x170] sm:$0xff] %v2543
    %2614 = vst [vmem:[#allocation5 + $0x178] sm:$0xff] %v2545
    %2615 = vst [vmem:[#allocation5 + $0x180] sm:$0xff] %v2436
    %2616 = vst [vmem:[#allocation5 + $0x188] sm:$0xff] %v2438
    %2617 = vst [vmem:[#allocation5 + $0x190] sm:$0xff] %v2549
    %2618 = vst [vmem:[#allocation5 + $0x198] sm:$0xff] %v2551
    %2619 = vst [vmem:[#allocation5 + $0x1a0] sm:$0xff] %v2440
    %2620 = vst [vmem:[#allocation5 + $0x1a8] sm:$0xff] %v2442
    %2621 = vst [vmem:[#allocation5 + $0x1b0] sm:$0xff] %v2553
    %2622 = vst [vmem:[#allocation5 + $0x1b8] sm:$0xff] %v2555
    %2623 = vst [vmem:[#allocation5 + $0x1c0] sm:$0xff] %v2446
    %2624 = vst [vmem:[#allocation5 + $0x1c8] sm:$0xff] %v2448
    %2625 = vst [vmem:[#allocation5 + $0x1d0] sm:$0xff] %v2559
    %2626 = vst [vmem:[#allocation5 + $0x1d8] sm:$0xff] %v2561
    %2627 = vst [vmem:[#allocation5 + $0x1e0] sm:$0xff] %v2450
    %2628 = vst [vmem:[#allocation5 + $0x1e8] sm:$0xff] %v2452
    %2629 = vst [vmem:[#allocation5 + $0x1f0] sm:$0xff] %v2563
    %2630 = vst [vmem:[#allocation5 + $0x1f8] sm:$0xff] %v2565
    %v2631 = vld [vmem:[#allocation14] sm:$0xff]
    %v2632 = vld [vmem:[#allocation14 + $0x8] sm:$0xff]
    %v2633 = vld [vmem:[#allocation14 + $0x10] sm:$0xff]
    %v2634 = vld [vmem:[#allocation14 + $0x18] sm:$0xff]
    %v2635 = vld [vmem:[#allocation14 + $0x20] sm:$0xff]
    %v2636 = vld [vmem:[#allocation14 + $0x28] sm:$0xff]
    %v2637 = vld [vmem:[#allocation14 + $0x30] sm:$0xff]
    %v2638 = vld [vmem:[#allocation14 + $0x38] sm:$0xff]
    %v2639 = vld [vmem:[#allocation14 + $0x40] sm:$0xff]
    %v2640 = vld [vmem:[#allocation14 + $0x48] sm:$0xff]
    %v2641 = vld [vmem:[#allocation14 + $0x50] sm:$0xff]
    %v2642 = vld [vmem:[#allocation14 + $0x58] sm:$0xff]
    %v2643 = vld [vmem:[#allocation14 + $0x60] sm:$0xff]
    %v2644 = vld [vmem:[#allocation14 + $0x68] sm:$0xff]
    %v2645 = vld [vmem:[#allocation14 + $0x70] sm:$0xff]
    %v2646 = vld [vmem:[#allocation14 + $0x78] sm:$0xff]
    %v2647 = vld [vmem:[#allocation14 + $0x80] sm:$0xff]
    %v2648 = vld [vmem:[#allocation14 + $0x88] sm:$0xff]
    %v2649 = vld [vmem:[#allocation14 + $0x90] sm:$0xff]
    %v2650 = vld [vmem:[#allocation14 + $0x98] sm:$0xff]
    %v2651 = vld [vmem:[#allocation14 + $0xa0] sm:$0xff]
    %v2652 = vld [vmem:[#allocation14 + $0xa8] sm:$0xff]
    %v2653 = vld [vmem:[#allocation14 + $0xb0] sm:$0xff]
    %v2654 = vld [vmem:[#allocation14 + $0xb8] sm:$0xff]
    %v2655 = vld [vmem:[#allocation14 + $0xc0] sm:$0xff]
    %v2656 = vld [vmem:[#allocation14 + $0xc8] sm:$0xff]
    %v2657 = vld [vmem:[#allocation14 + $0xd0] sm:$0xff]
    %v2658 = vld [vmem:[#allocation14 + $0xd8] sm:$0xff]
    %v2659 = vld [vmem:[#allocation14 + $0xe0] sm:$0xff]
    %v2660 = vld [vmem:[#allocation14 + $0xe8] sm:$0xff]
    %v2661 = vld [vmem:[#allocation14 + $0xf0] sm:$0xff]
    %v2662 = vld [vmem:[#allocation14 + $0xf8] sm:$0xff]
    %s2663 = scalar_lea.vmem [#allocation2], 8
    %v2664 = vld [vmem:[%s2663] sm:$0xff]
    %s2665 = scalar_lea.vmem [#allocation3], 16
    %v2666 = vld [vmem:[%s2665] sm:$0xff]
    %v2667 = vld [vmem:[%s2665 + $0x8] sm:$0xff]
    %v2668 = vld [vmem:[%s711] sm:$0xff]
    %v2669 = vld [vmem:[%s711 + $0x8] sm:$0xff]
    %v2670 = vld [vmem:[%s711 + $0x10] sm:$0xff]
    %v2671 = vld [vmem:[%s711 + $0x18] sm:$0xff]
    %v2672 = vld [vmem:[%s711 + $0x20] sm:$0xff]
    %v2673 = vld [vmem:[%s711 + $0x28] sm:$0xff]
    %v2674 = vld [vmem:[%s711 + $0x30] sm:$0xff]
    %v2675 = vld [vmem:[%s711 + $0x38] sm:$0xff]
    %v2708 = vunpack.c.l.b16 %v2631
    %v2709 = vunpack.c.h.b16 %v2631
    %v2710 = vunpack.c.l.b16 %v2632
    %v2711 = vunpack.c.h.b16 %v2632
    %v2712 = vunpack.c.l.b16 %v2633
    %v2713 = vunpack.c.h.b16 %v2633
    %v2714 = vunpack.c.l.b16 %v2634
    %v2715 = vunpack.c.h.b16 %v2634
    %v2716 = vunpack.c.l.b16 %v2635
    %v2717 = vunpack.c.h.b16 %v2635
    %v2718 = vunpack.c.l.b16 %v2636
    %v2719 = vunpack.c.h.b16 %v2636
    %v2720 = vunpack.c.l.b16 %v2637
    %v2721 = vunpack.c.h.b16 %v2637
    %v2722 = vunpack.c.l.b16 %v2638
    %v2723 = vunpack.c.h.b16 %v2638
    %v2724 = vunpack.c.l.b16 %v2639
    %v2725 = vunpack.c.h.b16 %v2639
    %v2726 = vunpack.c.l.b16 %v2640
    %v2727 = vunpack.c.h.b16 %v2640
    %v2728 = vunpack.c.l.b16 %v2641
    %v2729 = vunpack.c.h.b16 %v2641
    %v2730 = vunpack.c.l.b16 %v2642
    %v2731 = vunpack.c.h.b16 %v2642
    %v2732 = vunpack.c.l.b16 %v2643
    %v2733 = vunpack.c.h.b16 %v2643
    %v2734 = vunpack.c.l.b16 %v2644
    %v2735 = vunpack.c.h.b16 %v2644
    %v2736 = vunpack.c.l.b16 %v2645
    %v2737 = vunpack.c.h.b16 %v2645
    %v2738 = vunpack.c.l.b16 %v2646
    %v2739 = vunpack.c.h.b16 %v2646
    %v2740 = vunpack.c.l.b16 %v2647
    %v2741 = vunpack.c.h.b16 %v2647
    %v2742 = vunpack.c.l.b16 %v2648
    %v2743 = vunpack.c.h.b16 %v2648
    %v2744 = vunpack.c.l.b16 %v2649
    %v2745 = vunpack.c.h.b16 %v2649
    %v2746 = vunpack.c.l.b16 %v2650
    %v2747 = vunpack.c.h.b16 %v2650
    %v2748 = vunpack.c.l.b16 %v2651
    %v2749 = vunpack.c.h.b16 %v2651
    %v2750 = vunpack.c.l.b16 %v2652
    %v2751 = vunpack.c.h.b16 %v2652
    %v2752 = vunpack.c.l.b16 %v2653
    %v2753 = vunpack.c.h.b16 %v2653
    %v2754 = vunpack.c.l.b16 %v2654
    %v2755 = vunpack.c.h.b16 %v2654
    %v2756 = vunpack.c.l.b16 %v2655
    %v2757 = vunpack.c.h.b16 %v2655
    %v2758 = vunpack.c.l.b16 %v2656
    %v2759 = vunpack.c.h.b16 %v2656
    %v2760 = vunpack.c.l.b16 %v2657
    %v2761 = vunpack.c.h.b16 %v2657
    %v2762 = vunpack.c.l.b16 %v2658
    %v2763 = vunpack.c.h.b16 %v2658
    %v2764 = vunpack.c.l.b16 %v2659
    %v2765 = vunpack.c.h.b16 %v2659
    %v2766 = vunpack.c.l.b16 %v2660
    %v2767 = vunpack.c.h.b16 %v2660
    %v2768 = vunpack.c.l.b16 %v2661
    %v2769 = vunpack.c.h.b16 %v2661
    %v2770 = vunpack.c.l.b16 %v2662
    %v2771 = vunpack.c.h.b16 %v2662
    %v2772 = vpack.c.b16 %v2712, %v2708
    %v2773 = vpack.c.b16 %v2713, %v2709
    %v2774 = vpack.c.b16 %v2714, %v2710
    %v2775 = vpack.c.b16 %v2715, %v2711
    %v2776 = vpack.c.b16 %v2720, %v2716
    %v2777 = vpack.c.b16 %v2721, %v2717
    %v2778 = vpack.c.b16 %v2722, %v2718
    %v2779 = vpack.c.b16 %v2723, %v2719
    %v2780 = vpack.c.b16 %v2728, %v2724
    %v2781 = vpack.c.b16 %v2729, %v2725
    %v2782 = vpack.c.b16 %v2730, %v2726
    %v2783 = vpack.c.b16 %v2731, %v2727
    %v2784 = vpack.c.b16 %v2736, %v2732
    %v2785 = vpack.c.b16 %v2737, %v2733
    %v2786 = vpack.c.b16 %v2738, %v2734
    %v2787 = vpack.c.b16 %v2739, %v2735
    %v2788 = vpack.c.b16 %v2744, %v2740
    %v2789 = vpack.c.b16 %v2745, %v2741
    %v2790 = vpack.c.b16 %v2746, %v2742
    %v2791 = vpack.c.b16 %v2747, %v2743
    %v2792 = vpack.c.b16 %v2752, %v2748
    %v2793 = vpack.c.b16 %v2753, %v2749
    %v2794 = vpack.c.b16 %v2754, %v2750
    %v2795 = vpack.c.b16 %v2755, %v2751
    %v2796 = vpack.c.b16 %v2760, %v2756
    %v2797 = vpack.c.b16 %v2761, %v2757
    %v2798 = vpack.c.b16 %v2762, %v2758
    %v2799 = vpack.c.b16 %v2763, %v2759
    %v2800 = vpack.c.b16 %v2768, %v2764
    %v2801 = vpack.c.b16 %v2769, %v2765
    %v2802 = vpack.c.b16 %v2770, %v2766
    %v2803 = vpack.c.b16 %v2771, %v2767
    %2836 = vmatprep.subr.bf16.mxu0 %v2773
    %2837 = vmatpush1.bf16.msra.mxu0 %v2772
    %2838 = vmatprep.subr.bf16.mxu0 %v2777
    %2839 = vmatpush1.bf16.msra.mxu0 %v2776
    %2840 = vmatprep.subr.bf16.mxu0 %v2781
    %2841 = vmatpush1.bf16.msra.mxu0 %v2780
    %2842 = vmatprep.subr.bf16.mxu0 %v2785
    %2843 = vmatpush1.bf16.msra.mxu0 %v2784
    %2844 = vmatprep.subr.bf16.mxu0 %v2789
    %2845 = vmatpush1.bf16.msra.mxu0 %v2788
    %2846 = vmatprep.subr.bf16.mxu0 %v2793
    %2847 = vmatpush1.bf16.msra.mxu0 %v2792
    %2848 = vmatprep.subr.bf16.mxu0 %v2797
    %2849 = vmatpush1.bf16.msra.mxu0 %v2796
    %2850 = vmatprep.subr.bf16.mxu0 %v2801
    %2851 = vmatpush1.bf16.msra.mxu0 %v2800
    %2852 = vmatprep.subr.bf16.mxu0 0
    %2853 = vmatpush1.bf16.msra.mxu0 0
    %2854 = vmatprep.subr.bf16.mxu0 0
    %2855 = vmatpush1.bf16.msra.mxu0 0
    %2856 = vmatprep.subr.bf16.mxu0 0
    %2857 = vmatpush1.bf16.msra.mxu0 0
    %2858 = vmatprep.subr.bf16.mxu0 0
    %2859 = vmatpush1.bf16.msra.mxu0 0
    %2860 = vmatprep.subr.bf16.mxu0 0
    %2861 = vmatpush1.bf16.msra.mxu0 0
    %2862 = vmatprep.subr.bf16.mxu0 0
    %2863 = vmatpush1.bf16.msra.mxu0 0
    %2864 = vmatprep.subr.bf16.mxu0 0
    %2865 = vmatpush1.bf16.msra.mxu0 0
    %2866 = vmatprep.subr.bf16.mxu0 0
    %2867 = vmatpush1.bf16.msra.mxu0 0
    %2868 = vmatprep.mubr.bf16.mxu0 0
    %2869 = vmatmul.mubr.bf16.gmra.mrb[0].mxu0 %v2664
    %v2870 = vpop.f32.mrb[0].mxu0
    %v2871 = vadd.f32 0.0, %v2870
    %v2872 = vpop.f32.mrb[0].mxu0
    %v2873 = vadd.f32 0.0, %v2872
    %v2874 = vpop.f32.mrb[0].mxu0
    %v2875 = vadd.f32 0.0, %v2874
    %v2876 = vpop.f32.mrb[0].mxu0
    %v2877 = vadd.f32 0.0, %v2876
    %2878 = vdwg.mxu0
    %2879 = vmatprep.subr.bf16.mxu0 %v2775
    %2880 = vmatpush1.bf16.msra.mxu0 %v2774
    %2881 = vmatprep.subr.bf16.mxu0 %v2779
    %2882 = vmatpush1.bf16.msra.mxu0 %v2778
    %2883 = vmatprep.subr.bf16.mxu0 %v2783
    %2884 = vmatpush1.bf16.msra.mxu0 %v2782
    %2885 = vmatprep.subr.bf16.mxu0 %v2787
    %2886 = vmatpush1.bf16.msra.mxu0 %v2786
    %2887 = vmatprep.subr.bf16.mxu0 %v2791
    %2888 = vmatpush1.bf16.msra.mxu0 %v2790
    %2889 = vmatprep.subr.bf16.mxu0 %v2795
    %2890 = vmatpush1.bf16.msra.mxu0 %v2794
    %2891 = vmatprep.subr.bf16.mxu0 %v2799
    %2892 = vmatpush1.bf16.msra.mxu0 %v2798
    %2893 = vmatprep.subr.bf16.mxu0 %v2803
    %2894 = vmatpush1.bf16.msra.mxu0 %v2802
    %2895 = vmatprep.subr.bf16.mxu0 0
    %2896 = vmatpush1.bf16.msra.mxu0 0
    %2897 = vmatprep.subr.bf16.mxu0 0
    %2898 = vmatpush1.bf16.msra.mxu0 0
    %2899 = vmatprep.subr.bf16.mxu0 0
    %2900 = vmatpush1.bf16.msra.mxu0 0
    %2901 = vmatprep.subr.bf16.mxu0 0
    %2902 = vmatpush1.bf16.msra.mxu0 0
    %2903 = vmatprep.subr.bf16.mxu0 0
    %2904 = vmatpush1.bf16.msra.mxu0 0
    %2905 = vmatprep.subr.bf16.mxu0 0
    %2906 = vmatpush1.bf16.msra.mxu0 0
    %2907 = vmatprep.subr.bf16.mxu0 0
    %2908 = vmatpush1.bf16.msra.mxu0 0
    %2909 = vmatprep.subr.bf16.mxu0 0
    %2910 = vmatpush1.bf16.msra.mxu0 0
    %2911 = vmatprep.mubr.bf16.mxu0 0
    %2912 = vmatmul.mubr.bf16.gmra.mrb[0].mxu0 %v2664
    %v2913 = vpop.f32.mrb[0].mxu0
    %v2914 = vadd.f32 0.0, %v2913
    %v2915 = vpop.f32.mrb[0].mxu0
    %v2916 = vadd.f32 0.0, %v2915
    %v2917 = vpop.f32.mrb[0].mxu0
    %v2918 = vadd.f32 0.0, %v2917
    %v2919 = vpop.f32.mrb[0].mxu0
    %v2920 = vadd.f32 0.0, %v2919
    %2921 = vdwg.mxu0
    %v2922 = vadd.f32 %v2668, %v2871
    %v2923 = vadd.f32 %v2669, %v2873
    %v2924 = vadd.f32 %v2670, %v2914
    %v2925 = vadd.f32 %v2671, %v2916
    %v2926 = vadd.f32 %v2672, %v2875
    %v2927 = vadd.f32 %v2673, %v2877
    %v2928 = vadd.f32 %v2674, %v2918
    %v2929 = vadd.f32 %v2675, %v2920
    %v2930 = vxor.u32 %v2922, 2147483648
    %v2931 = vxor.u32 %v2926, 2147483648
    %v2932 = vmul.f32 %v2930, 1.442695
    %v2933 = vpow.pop %v2932
    %v2934 = vmul.f32 %v2931, 1.442695
    %v2935 = vpow.pop %v2934
    %v2936 = vadd.f32 %v2933, 1.0
    %v2937 = vadd.f32 %v2935, 1.0
    %v2938 = vrcp.pop %v2936
    %v2939 = vmul.f32 1.0, %v2938
    %v2940 = vrcp.pop %v2937
    %v2941 = vmul.f32 1.0, %v2940
    %v2942 = vxor.u32 %v2923, 2147483648
    %v2943 = vxor.u32 %v2927, 2147483648
    %v2944 = vmul.f32 %v2942, 1.442695
    %v2945 = vpow.pop %v2944
    %v2946 = vmul.f32 %v2943, 1.442695
    %v2947 = vpow.pop %v2946
    %v2948 = vadd.f32 %v2945, 1.0
    %v2949 = vadd.f32 %v2947, 1.0
    %v2950 = vrcp.pop %v2948
    %v2951 = vmul.f32 1.0, %v2950
    %v2952 = vrcp.pop %v2949
    %v2953 = vmul.f32 1.0, %v2952
    %v2954 = vtanh.pop %v2924
    %v2955 = vtanh.pop %v2928
    %v2956 = vxor.u32 %v2925, 2147483648
    %v2957 = vxor.u32 %v2929, 2147483648
    %v2958 = vmul.f32 %v2956, 1.442695
    %v2959 = vpow.pop %v2958
    %v2960 = vmul.f32 %v2957, 1.442695
    %v2961 = vpow.pop %v2960
    %v2962 = vadd.f32 %v2959, 1.0
    %v2963 = vadd.f32 %v2961, 1.0
    %v2964 = vrcp.pop %v2962
    %v2965 = vmul.f32 1.0, %v2964
    %v2966 = vrcp.pop %v2963
    %v2967 = vmul.f32 1.0, %v2966
    %v2968 = vmul.f32 %v2951, %v2666
    %v2969 = vmul.f32 %v2953, %v2667
    %v2970 = vmul.f32 %v2939, %v2954
    %v2971 = vmul.f32 %v2941, %v2955
    %v2972 = vadd.f32 %v2968, %v2970
    %v2973 = vadd.f32 %v2969, %v2971
    %v2974 = vtanh.pop %v2972
    %v2975 = vtanh.pop %v2973
    %v2976 = vmul.f32 %v2965, %v2974
    %v2977 = vmul.f32 %v2967, %v2975
    %v2978 = vpack.c.bf16 %v2977, %v2976
    %2979 = vst [vmem:[#allocation15] sm:$0xff] %v2976
    %2980 = vst [vmem:[#allocation15 + $0x8] sm:$0xff] %v2977
    %v2981 = vld [vmem:[%s1026] sm:$0xff]
    %v2982 = vld [vmem:[%s1026 + $0x8] sm:$0xff]
    %v2983 = vld [vmem:[%s1026 + $0x10] sm:$0xff]
    %v2984 = vld [vmem:[%s1026 + $0x18] sm:$0xff]
    %v2985 = vld [vmem:[%s1026 + $0x20] sm:$0xff]
    %v2986 = vld [vmem:[%s1026 + $0x28] sm:$0xff]
    %v2987 = vld [vmem:[%s1026 + $0x30] sm:$0xff]
    %v2988 = vld [vmem:[%s1026 + $0x38] sm:$0xff]
    %2989 = vmatprep.subr.bf16.mxu0 %v2773
    %2990 = vmatpush1.bf16.msra.mxu0 %v2772
    %2991 = vmatprep.subr.bf16.mxu0 %v2777
    %2992 = vmatpush1.bf16.msra.mxu0 %v2776
    %2993 = vmatprep.subr.bf16.mxu0 %v2781
    %2994 = vmatpush1.bf16.msra.mxu0 %v2780
    %2995 = vmatprep.subr.bf16.mxu0 %v2785
    %2996 = vmatpush1.bf16.msra.mxu0 %v2784
    %2997 = vmatprep.subr.bf16.mxu0 %v2789
    %2998 = vmatpush1.bf16.msra.mxu0 %v2788
    %2999 = vmatprep.subr.bf16.mxu0 %v2793
    %3000 = vmatpush1.bf16.msra.mxu0 %v2792
    %3001 = vmatprep.subr.bf16.mxu0 %v2797
    %3002 = vmatpush1.bf16.msra.mxu0 %v2796
    %3003 = vmatprep.subr.bf16.mxu0 %v2801
    %3004 = vmatpush1.bf16.msra.mxu0 %v2800
    %3005 = vmatprep.subr.bf16.mxu0 0
    %3006 = vmatpush1.bf16.msra.mxu0 0
    %3007 = vmatprep.subr.bf16.mxu0 0
    %3008 = vmatpush1.bf16.msra.mxu0 0
    %3009 = vmatprep.subr.bf16.mxu0 0
    %3010 = vmatpush1.bf16.msra.mxu0 0
    %3011 = vmatprep.subr.bf16.mxu0 0
    %3012 = vmatpush1.bf16.msra.mxu0 0
    %3013 = vmatprep.subr.bf16.mxu0 0
    %3014 = vmatpush1.bf16.msra.mxu0 0
    %3015 = vmatprep.subr.bf16.mxu0 0
    %3016 = vmatpush1.bf16.msra.mxu0 0
    %3017 = vmatprep.subr.bf16.mxu0 0
    %3018 = vmatpush1.bf16.msra.mxu0 0
    %3019 = vmatprep.subr.bf16.mxu0 0
    %3020 = vmatpush1.bf16.msra.mxu0 0
    %3021 = vmatprep.mubr.bf16.mxu0 0
    %3022 = vmatmul.mubr.bf16.gmra.mrb[0].mxu0 %v2978
    %v3023 = vpop.f32.mrb[0].mxu0
    %v3024 = vadd.f32 0.0, %v3023
    %v3025 = vpop.f32.mrb[0].mxu0
    %v3026 = vadd.f32 0.0, %v3025
    %v3027 = vpop.f32.mrb[0].mxu0
    %v3028 = vadd.f32 0.0, %v3027
    %v3029 = vpop.f32.mrb[0].mxu0
    %v3030 = vadd.f32 0.0, %v3029
    %3031 = vdwg.mxu0
    %3032 = vmatprep.subr.bf16.mxu0 %v2775
    %3033 = vmatpush1.bf16.msra.mxu0 %v2774
    %3034 = vmatprep.subr.bf16.mxu0 %v2779
    %3035 = vmatpush1.bf16.msra.mxu0 %v2778
    %3036 = vmatprep.subr.bf16.mxu0 %v2783
    %3037 = vmatpush1.bf16.msra.mxu0 %v2782
    %3038 = vmatprep.subr.bf16.mxu0 %v2787
    %3039 = vmatpush1.bf16.msra.mxu0 %v2786
    %3040 = vmatprep.subr.bf16.mxu0 %v2791
    %3041 = vmatpush1.bf16.msra.mxu0 %v2790
    %3042 = vmatprep.subr.bf16.mxu0 %v2795
    %3043 = vmatpush1.bf16.msra.mxu0 %v2794
    %3044 = vmatprep.subr.bf16.mxu0 %v2799
    %3045 = vmatpush1.bf16.msra.mxu0 %v2798
    %3046 = vmatprep.subr.bf16.mxu0 %v2803
    %3047 = vmatpush1.bf16.msra.mxu0 %v2802
    %3048 = vmatprep.subr.bf16.mxu0 0
    %3049 = vmatpush1.bf16.msra.mxu0 0
    %3050 = vmatprep.subr.bf16.mxu0 0
    %3051 = vmatpush1.bf16.msra.mxu0 0
    %3052 = vmatprep.subr.bf16.mxu0 0
    %3053 = vmatpush1.bf16.msra.mxu0 0
    %3054 = vmatprep.subr.bf16.mxu0 0
    %3055 = vmatpush1.bf16.msra.mxu0 0
    %3056 = vmatprep.subr.bf16.mxu0 0
    %3057 = vmatpush1.bf16.msra.mxu0 0
    %3058 = vmatprep.subr.bf16.mxu0 0
    %3059 = vmatpush1.bf16.msra.mxu0 0
    %3060 = vmatprep.subr.bf16.mxu0 0
    %3061 = vmatpush1.bf16.msra.mxu0 0
    %3062 = vmatprep.subr.bf16.mxu0 0
    %3063 = vmatpush1.bf16.msra.mxu0 0
    %3064 = vmatprep.mubr.bf16.mxu0 0
    %3065 = vmatmul.mubr.bf16.gmra.mrb[0].mxu0 %v2978
    %v3066 = vpop.f32.mrb[0].mxu0
    %v3067 = vadd.f32 0.0, %v3066
    %v3068 = vpop.f32.mrb[0].mxu0
    %v3069 = vadd.f32 0.0, %v3068
    %v3070 = vpop.f32.mrb[0].mxu0
    %v3071 = vadd.f32 0.0, %v3070
    %v3072 = vpop.f32.mrb[0].mxu0
    %v3073 = vadd.f32 0.0, %v3072
    %3074 = vdwg.mxu0
    %v3075 = vadd.f32 %v2981, %v3024
    %v3076 = vadd.f32 %v2982, %v3026
    %v3077 = vadd.f32 %v2983, %v3067
    %v3078 = vadd.f32 %v2984, %v3069
    %v3079 = vadd.f32 %v2985, %v3028
    %v3080 = vadd.f32 %v2986, %v3030
    %v3081 = vadd.f32 %v2987, %v3071
    %v3082 = vadd.f32 %v2988, %v3073
    %v3083 = vxor.u32 %v3075, 2147483648
    %v3084 = vxor.u32 %v3079, 2147483648
    %v3085 = vmul.f32 %v3083, 1.442695
    %v3086 = vpow.pop %v3085
    %v3087 = vmul.f32 %v3084, 1.442695
    %v3088 = vpow.pop %v3087
    %v3089 = vadd.f32 %v3086, 1.0
    %v3090 = vadd.f32 %v3088, 1.0
    %v3091 = vrcp.pop %v3089
    %v3092 = vmul.f32 1.0, %v3091
    %v3093 = vrcp.pop %v3090
    %v3094 = vmul.f32 1.0, %v3093
    %v3095 = vxor.u32 %v3076, 2147483648
    %v3096 = vxor.u32 %v3080, 2147483648
    %v3097 = vmul.f32 %v3095, 1.442695
    %v3098 = vpow.pop %v3097
    %v3099 = vmul.f32 %v3096, 1.442695
    %v3100 = vpow.pop %v3099
    %v3101 = vadd.f32 %v3098, 1.0
    %v3102 = vadd.f32 %v3100, 1.0
    %v3103 = vrcp.pop %v3101
    %v3104 = vmul.f32 1.0, %v3103
    %v3105 = vrcp.pop %v3102
    %v3106 = vmul.f32 1.0, %v3105
    %v3107 = vtanh.pop %v3077
    %v3108 = vtanh.pop %v3081
    %v3109 = vxor.u32 %v3078, 2147483648
    %v3110 = vxor.u32 %v3082, 2147483648
    %v3111 = vmul.f32 %v3109, 1.442695
    %v3112 = vpow.pop %v3111
    %v3113 = vmul.f32 %v3110, 1.442695
    %v3114 = vpow.pop %v3113
    %v3115 = vadd.f32 %v3112, 1.0
    %v3116 = vadd.f32 %v3114, 1.0
    %v3117 = vrcp.pop %v3115
    %v3118 = vmul.f32 1.0, %v3117
    %v3119 = vrcp.pop %v3116
    %v3120 = vmul.f32 1.0, %v3119
    %v3121 = vmul.f32 %v3104, %v2972
    %v3122 = vmul.f32 %v3106, %v2973
    %v3123 = vmul.f32 %v3092, %v3107
    %v3124 = vmul.f32 %v3094, %v3108
    %v3125 = vadd.f32 %v3121, %v3123
    %v3126 = vadd.f32 %v3122, %v3124
    %v3127 = vtanh.pop %v3125
    %v3128 = vtanh.pop %v3126
    %v3129 = vmul.f32 %v3118, %v3127
    %v3130 = vmul.f32 %v3120, %v3128
    %v3131 = vpack.c.bf16 %v3130, %v3129
    %s3132 = scalar_lea.vmem [#allocation15], 16
    %3133 = vst [vmem:[%s3132] sm:$0xff] %v3129
    %3134 = vst [vmem:[%s3132 + $0x8] sm:$0xff] %v3130
    %v3135 = vld [vmem:[%s1182] sm:$0xff]
    %v3136 = vld [vmem:[%s1182 + $0x8] sm:$0xff]
    %v3137 = vld [vmem:[%s1182 + $0x10] sm:$0xff]
    %v3138 = vld [vmem:[%s1182 + $0x18] sm:$0xff]
    %v3139 = vld [vmem:[%s1182 + $0x20] sm:$0xff]
    %v3140 = vld [vmem:[%s1182 + $0x28] sm:$0xff]
    %v3141 = vld [vmem:[%s1182 + $0x30] sm:$0xff]
    %v3142 = vld [vmem:[%s1182 + $0x38] sm:$0xff]
    %3143 = vmatprep.subr.bf16.mxu0 %v2773
    %3144 = vmatpush1.bf16.msra.mxu0 %v2772
    %3145 = vmatprep.subr.bf16.mxu0 %v2777
    %3146 = vmatpush1.bf16.msra.mxu0 %v2776
    %3147 = vmatprep.subr.bf16.mxu0 %v2781
    %3148 = vmatpush1.bf16.msra.mxu0 %v2780
    %3149 = vmatprep.subr.bf16.mxu0 %v2785
    %3150 = vmatpush1.bf16.msra.mxu0 %v2784
    %3151 = vmatprep.subr.bf16.mxu0 %v2789
    %3152 = vmatpush1.bf16.msra.mxu0 %v2788
    %3153 = vmatprep.subr.bf16.mxu0 %v2793
    %3154 = vmatpush1.bf16.msra.mxu0 %v2792
    %3155 = vmatprep.subr.bf16.mxu0 %v2797
    %3156 = vmatpush1.bf16.msra.mxu0 %v2796
    %3157 = vmatprep.subr.bf16.mxu0 %v2801
    %3158 = vmatpush1.bf16.msra.mxu0 %v2800
    %3159 = vmatprep.subr.bf16.mxu0 0
    %3160 = vmatpush1.bf16.msra.mxu0 0
    %3161 = vmatprep.subr.bf16.mxu0 0
    %3162 = vmatpush1.bf16.msra.mxu0 0
    %3163 = vmatprep.subr.bf16.mxu0 0
    %3164 = vmatpush1.bf16.msra.mxu0 0
    %3165 = vmatprep.subr.bf16.mxu0 0
    %3166 = vmatpush1.bf16.msra.mxu0 0
    %3167 = vmatprep.subr.bf16.mxu0 0
    %3168 = vmatpush1.bf16.msra.mxu0 0
    %3169 = vmatprep.subr.bf16.mxu0 0
    %3170 = vmatpush1.bf16.msra.mxu0 0
    %3171 = vmatprep.subr.bf16.mxu0 0
    %3172 = vmatpush1.bf16.msra.mxu0 0
    %3173 = vmatprep.subr.bf16.mxu0 0
    %3174 = vmatpush1.bf16.msra.mxu0 0
    %3175 = vmatprep.mubr.bf16.mxu0 0
    %3176 = vmatmul.mubr.bf16.gmra.mrb[0].mxu0 %v3131
    %v3177 = vpop.f32.mrb[0].mxu0
    %v3178 = vadd.f32 0.0, %v3177
    %v3179 = vpop.f32.mrb[0].mxu0
    %v3180 = vadd.f32 0.0, %v3179
    %v3181 = vpop.f32.mrb[0].mxu0
    %v3182 = vadd.f32 0.0, %v3181
    %v3183 = vpop.f32.mrb[0].mxu0
    %v3184 = vadd.f32 0.0, %v3183
    %3185 = vdwg.mxu0
    %3186 = vmatprep.subr.bf16.mxu0 %v2775
    %3187 = vmatpush1.bf16.msra.mxu0 %v2774
    %3188 = vmatprep.subr.bf16.mxu0 %v2779
    %3189 = vmatpush1.bf16.msra.mxu0 %v2778
    %3190 = vmatprep.subr.bf16.mxu0 %v2783
    %3191 = vmatpush1.bf16.msra.mxu0 %v2782
    %3192 = vmatprep.subr.bf16.mxu0 %v2787
    %3193 = vmatpush1.bf16.msra.mxu0 %v2786
    %3194 = vmatprep.subr.bf16.mxu0 %v2791
    %3195 = vmatpush1.bf16.msra.mxu0 %v2790
    %3196 = vmatprep.subr.bf16.mxu0 %v2795
    %3197 = vmatpush1.bf16.msra.mxu0 %v2794
    %3198 = vmatprep.subr.bf16.mxu0 %v2799
    %3199 = vmatpush1.bf16.msra.mxu0 %v2798
    %3200 = vmatprep.subr.bf16.mxu0 %v2803
    %3201 = vmatpush1.bf16.msra.mxu0 %v2802
    %3202 = vmatprep.subr.bf16.mxu0 0
    %3203 = vmatpush1.bf16.msra.mxu0 0
    %3204 = vmatprep.subr.bf16.mxu0 0
    %3205 = vmatpush1.bf16.msra.mxu0 0
    %3206 = vmatprep.subr.bf16.mxu0 0
    %3207 = vmatpush1.bf16.msra.mxu0 0
    %3208 = vmatprep.subr.bf16.mxu0 0
    %3209 = vmatpush1.bf16.msra.mxu0 0
    %3210 = vmatprep.subr.bf16.mxu0 0
    %3211 = vmatpush1.bf16.msra.mxu0 0
    %3212 = vmatprep.subr.bf16.mxu0 0
    %3213 = vmatpush1.bf16.msra.mxu0 0
    %3214 = vmatprep.subr.bf16.mxu0 0
    %3215 = vmatpush1.bf16.msra.mxu0 0
    %3216 = vmatprep.subr.bf16.mxu0 0
    %3217 = vmatpush1.bf16.msra.mxu0 0
    %3218 = vmatprep.mubr.bf16.mxu0 0
    %3219 = vmatmul.mubr.bf16.gmra.mrb[0].mxu0 %v3131
    %v3220 = vpop.f32.mrb[0].mxu0
    %v3221 = vadd.f32 0.0, %v3220
    %v3222 = vpop.f32.mrb[0].mxu0
    %v3223 = vadd.f32 0.0, %v3222
    %v3224 = vpop.f32.mrb[0].mxu0
    %v3225 = vadd.f32 0.0, %v3224
    %v3226 = vpop.f32.mrb[0].mxu0
    %v3227 = vadd.f32 0.0, %v3226
    %3228 = vdwg.mxu0
    %v3229 = vadd.f32 %v3135, %v3178
    %v3230 = vadd.f32 %v3136, %v3180
    %v3231 = vadd.f32 %v3137, %v3221
    %v3232 = vadd.f32 %v3138, %v3223
    %v3233 = vadd.f32 %v3139, %v3182
    %v3234 = vadd.f32 %v3140, %v3184
    %v3235 = vadd.f32 %v3141, %v3225
    %v3236 = vadd.f32 %v3142, %v3227
    %v3237 = vxor.u32 %v3229, 2147483648
    %v3238 = vxor.u32 %v3233, 2147483648
    %v3239 = vmul.f32 %v3237, 1.442695
    %v3240 = vpow.pop %v3239
    %v3241 = vmul.f32 %v3238, 1.442695
    %v3242 = vpow.pop %v3241
    %v3243 = vadd.f32 %v3240, 1.0
    %v3244 = vadd.f32 %v3242, 1.0
    %v3245 = vrcp.pop %v3243
    %v3246 = vmul.f32 1.0, %v3245
    %v3247 = vrcp.pop %v3244
    %v3248 = vmul.f32 1.0, %v3247
    %v3249 = vxor.u32 %v3230, 2147483648
    %v3250 = vxor.u32 %v3234, 2147483648
    %v3251 = vmul.f32 %v3249, 1.442695
    %v3252 = vpow.pop %v3251
    %v3253 = vmul.f32 %v3250, 1.442695
    %v3254 = vpow.pop %v3253
    %v3255 = vadd.f32 %v3252, 1.0
    %v3256 = vadd.f32 %v3254, 1.0
    %v3257 = vrcp.pop %v3255
    %v3258 = vmul.f32 1.0, %v3257
    %v3259 = vrcp.pop %v3256
    %v3260 = vmul.f32 1.0, %v3259
    %v3261 = vtanh.pop %v3231
    %v3262 = vtanh.pop %v3235
    %v3263 = vxor.u32 %v3232, 2147483648
    %v3264 = vxor.u32 %v3236, 2147483648
    %v3265 = vmul.f32 %v3263, 1.442695
    %v3266 = vpow.pop %v3265
    %v3267 = vmul.f32 %v3264, 1.442695
    %v3268 = vpow.pop %v3267
    %v3269 = vadd.f32 %v3266, 1.0
    %v3270 = vadd.f32 %v3268, 1.0
    %v3271 = vrcp.pop %v3269
    %v3272 = vmul.f32 1.0, %v3271
    %v3273 = vrcp.pop %v3270
    %v3274 = vmul.f32 1.0, %v3273
    %v3275 = vmul.f32 %v3258, %v3125
    %v3276 = vmul.f32 %v3260, %v3126
    %v3277 = vmul.f32 %v3246, %v3261
    %v3278 = vmul.f32 %v3248, %v3262
    %v3279 = vadd.f32 %v3275, %v3277
    %v3280 = vadd.f32 %v3276, %v3278
    %v3281 = vtanh.pop %v3279
    %v3282 = vtanh.pop %v3280
    %v3283 = vmul.f32 %v3272, %v3281
    %v3284 = vmul.f32 %v3274, %v3282
    %v3285 = vpack.c.bf16 %v3284, %v3283
    %s3286 = scalar_lea.vmem [#allocation15], 32
    %3287 = vst [vmem:[%s3286] sm:$0xff] %v3283
    %3288 = vst [vmem:[%s3286 + $0x8] sm:$0xff] %v3284
    %v3289 = vld [vmem:[%s1338] sm:$0xff]
    %v3290 = vld [vmem:[%s1338 + $0x8] sm:$0xff]
    %v3291 = vld [vmem:[%s1338 + $0x10] sm:$0xff]
    %v3292 = vld [vmem:[%s1338 + $0x18] sm:$0xff]
    %v3293 = vld [vmem:[%s1338 + $0x20] sm:$0xff]
    %v3294 = vld [vmem:[%s1338 + $0x28] sm:$0xff]
    %v3295 = vld [vmem:[%s1338 + $0x30] sm:$0xff]
    %v3296 = vld [vmem:[%s1338 + $0x38] sm:$0xff]
    %3297 = vmatprep.subr.bf16.mxu0 %v2773
    %3298 = vmatpush1.bf16.msra.mxu0 %v2772
    %3299 = vmatprep.subr.bf16.mxu0 %v2777
    %3300 = vmatpush1.bf16.msra.mxu0 %v2776
    %3301 = vmatprep.subr.bf16.mxu0 %v2781
    %3302 = vmatpush1.bf16.msra.mxu0 %v2780
    %3303 = vmatprep.subr.bf16.mxu0 %v2785
    %3304 = vmatpush1.bf16.msra.mxu0 %v2784
    %3305 = vmatprep.subr.bf16.mxu0 %v2789
    %3306 = vmatpush1.bf16.msra.mxu0 %v2788
    %3307 = vmatprep.subr.bf16.mxu0 %v2793
    %3308 = vmatpush1.bf16.msra.mxu0 %v2792
    %3309 = vmatprep.subr.bf16.mxu0 %v2797
    %3310 = vmatpush1.bf16.msra.mxu0 %v2796
    %3311 = vmatprep.subr.bf16.mxu0 %v2801
    %3312 = vmatpush1.bf16.msra.mxu0 %v2800
    %3313 = vmatprep.subr.bf16.mxu0 0
    %3314 = vmatpush1.bf16.msra.mxu0 0
    %3315 = vmatprep.subr.bf16.mxu0 0
    %3316 = vmatpush1.bf16.msra.mxu0 0
    %3317 = vmatprep.subr.bf16.mxu0 0
    %3318 = vmatpush1.bf16.msra.mxu0 0
    %3319 = vmatprep.subr.bf16.mxu0 0
    %3320 = vmatpush1.bf16.msra.mxu0 0
    %3321 = vmatprep.subr.bf16.mxu0 0
    %3322 = vmatpush1.bf16.msra.mxu0 0
    %3323 = vmatprep.subr.bf16.mxu0 0
    %3324 = vmatpush1.bf16.msra.mxu0 0
    %3325 = vmatprep.subr.bf16.mxu0 0
    %3326 = vmatpush1.bf16.msra.mxu0 0
    %3327 = vmatprep.subr.bf16.mxu0 0
    %3328 = vmatpush1.bf16.msra.mxu0 0
    %3329 = vmatprep.mubr.bf16.mxu0 0
    %3330 = vmatmul.mubr.bf16.gmra.mrb[0].mxu0 %v3285
    %v3331 = vpop.f32.mrb[0].mxu0
    %v3332 = vadd.f32 0.0, %v3331
    %v3333 = vpop.f32.mrb[0].mxu0
    %v3334 = vadd.f32 0.0, %v3333
    %v3335 = vpop.f32.mrb[0].mxu0
    %v3336 = vadd.f32 0.0, %v3335
    %v3337 = vpop.f32.mrb[0].mxu0
    %v3338 = vadd.f32 0.0, %v3337
    %3339 = vdwg.mxu0
    %3340 = vmatprep.subr.bf16.mxu0 %v2775
    %3341 = vmatpush1.bf16.msra.mxu0 %v2774
    %3342 = vmatprep.subr.bf16.mxu0 %v2779
    %3343 = vmatpush1.bf16.msra.mxu0 %v2778
    %3344 = vmatprep.subr.bf16.mxu0 %v2783
    %3345 = vmatpush1.bf16.msra.mxu0 %v2782
    %3346 = vmatprep.subr.bf16.mxu0 %v2787
    %3347 = vmatpush1.bf16.msra.mxu0 %v2786
    %3348 = vmatprep.subr.bf16.mxu0 %v2791
    %3349 = vmatpush1.bf16.msra.mxu0 %v2790
    %3350 = vmatprep.subr.bf16.mxu0 %v2795
    %3351 = vmatpush1.bf16.msra.mxu0 %v2794
    %3352 = vmatprep.subr.bf16.mxu0 %v2799
    %3353 = vmatpush1.bf16.msra.mxu0 %v2798
    %3354 = vmatprep.subr.bf16.mxu0 %v2803
    %3355 = vmatpush1.bf16.msra.mxu0 %v2802
    %3356 = vmatprep.subr.bf16.mxu0 0
    %3357 = vmatpush1.bf16.msra.mxu0 0
    %3358 = vmatprep.subr.bf16.mxu0 0
    %3359 = vmatpush1.bf16.msra.mxu0 0
    %3360 = vmatprep.subr.bf16.mxu0 0
    %3361 = vmatpush1.bf16.msra.mxu0 0
    %3362 = vmatprep.subr.bf16.mxu0 0
    %3363 = vmatpush1.bf16.msra.mxu0 0
    %3364 = vmatprep.subr.bf16.mxu0 0
    %3365 = vmatpush1.bf16.msra.mxu0 0
    %3366 = vmatprep.subr.bf16.mxu0 0
    %3367 = vmatpush1.bf16.msra.mxu0 0
    %3368 = vmatprep.subr.bf16.mxu0 0
    %3369 = vmatpush1.bf16.msra.mxu0 0
    %3370 = vmatprep.subr.bf16.mxu0 0
    %3371 = vmatpush1.bf16.msra.mxu0 0
    %3372 = vmatprep.mubr.bf16.mxu0 0
    %3373 = vmatmul.mubr.bf16.gmra.mrb[0].mxu0 %v3285
    %v3374 = vpop.f32.mrb[0].mxu0
    %v3375 = vadd.f32 0.0, %v3374
    %v3376 = vpop.f32.mrb[0].mxu0
    %v3377 = vadd.f32 0.0, %v3376
    %v3378 = vpop.f32.mrb[0].mxu0
    %v3379 = vadd.f32 0.0, %v3378
    %v3380 = vpop.f32.mrb[0].mxu0
    %v3381 = vadd.f32 0.0, %v3380
    %3382 = vdwg.mxu0
    %v3383 = vadd.f32 %v3289, %v3332
    %v3384 = vadd.f32 %v3290, %v3334
    %v3385 = vadd.f32 %v3291, %v3375
    %v3386 = vadd.f32 %v3292, %v3377
    %v3387 = vadd.f32 %v3293, %v3336
    %v3388 = vadd.f32 %v3294, %v3338
    %v3389 = vadd.f32 %v3295, %v3379
    %v3390 = vadd.f32 %v3296, %v3381
    %v3391 = vxor.u32 %v3383, 2147483648
    %v3392 = vxor.u32 %v3387, 2147483648
    %v3393 = vmul.f32 %v3391, 1.442695
    %v3394 = vpow.pop %v3393
    %v3395 = vmul.f32 %v3392, 1.442695
    %v3396 = vpow.pop %v3395
    %v3397 = vadd.f32 %v3394, 1.0
    %v3398 = vadd.f32 %v3396, 1.0
    %v3399 = vrcp.pop %v3397
    %v3400 = vmul.f32 1.0, %v3399
    %v3401 = vrcp.pop %v3398
    %v3402 = vmul.f32 1.0, %v3401
    %v3403 = vxor.u32 %v3384, 2147483648
    %v3404 = vxor.u32 %v3388, 2147483648
    %v3405 = vmul.f32 %v3403, 1.442695
    %v3406 = vpow.pop %v3405
    %v3407 = vmul.f32 %v3404, 1.442695
    %v3408 = vpow.pop %v3407
    %v3409 = vadd.f32 %v3406, 1.0
    %v3410 = vadd.f32 %v3408, 1.0
    %v3411 = vrcp.pop %v3409
    %v3412 = vmul.f32 1.0, %v3411
    %v3413 = vrcp.pop %v3410
    %v3414 = vmul.f32 1.0, %v3413
    %v3415 = vtanh.pop %v3385
    %v3416 = vtanh.pop %v3389
    %v3417 = vxor.u32 %v3386, 2147483648
    %v3418 = vxor.u32 %v3390, 2147483648
    %v3419 = vmul.f32 %v3417, 1.442695
    %v3420 = vpow.pop %v3419
    %v3421 = vmul.f32 %v3418, 1.442695
    %v3422 = vpow.pop %v3421
    %v3423 = vadd.f32 %v3420, 1.0
    %v3424 = vadd.f32 %v3422, 1.0
    %v3425 = vrcp.pop %v3423
    %v3426 = vmul.f32 1.0, %v3425
    %v3427 = vrcp.pop %v3424
    %v3428 = vmul.f32 1.0, %v3427
    %v3429 = vmul.f32 %v3412, %v3279
    %v3430 = vmul.f32 %v3414, %v3280
    %v3431 = vmul.f32 %v3400, %v3415
    %v3432 = vmul.f32 %v3402, %v3416
    %v3433 = vadd.f32 %v3429, %v3431
    %v3434 = vadd.f32 %v3430, %v3432
    %v3435 = vtanh.pop %v3433
    %v3436 = vtanh.pop %v3434
    %v3437 = vmul.f32 %v3426, %v3435
    %v3438 = vmul.f32 %v3428, %v3436
    %v3439 = vpack.c.bf16 %v3438, %v3437
    %s3440 = scalar_lea.vmem [#allocation15], 48
    %3441 = vst [vmem:[%s3440] sm:$0xff] %v3437
    %3442 = vst [vmem:[%s3440 + $0x8] sm:$0xff] %v3438
    %v3443 = vld [vmem:[%s1494] sm:$0xff]
    %v3444 = vld [vmem:[%s1494 + $0x8] sm:$0xff]
    %v3445 = vld [vmem:[%s1494 + $0x10] sm:$0xff]
    %v3446 = vld [vmem:[%s1494 + $0x18] sm:$0xff]
    %v3447 = vld [vmem:[%s1494 + $0x20] sm:$0xff]
    %v3448 = vld [vmem:[%s1494 + $0x28] sm:$0xff]
    %v3449 = vld [vmem:[%s1494 + $0x30] sm:$0xff]
    %v3450 = vld [vmem:[%s1494 + $0x38] sm:$0xff]
    %3451 = vmatprep.subr.bf16.mxu0 %v2773
    %3452 = vmatpush1.bf16.msra.mxu0 %v2772
    %3453 = vmatprep.subr.bf16.mxu0 %v2777
    %3454 = vmatpush1.bf16.msra.mxu0 %v2776
    %3455 = vmatprep.subr.bf16.mxu0 %v2781
    %3456 = vmatpush1.bf16.msra.mxu0 %v2780
    %3457 = vmatprep.subr.bf16.mxu0 %v2785
    %3458 = vmatpush1.bf16.msra.mxu0 %v2784
    %3459 = vmatprep.subr.bf16.mxu0 %v2789
    %3460 = vmatpush1.bf16.msra.mxu0 %v2788
    %3461 = vmatprep.subr.bf16.mxu0 %v2793
    %3462 = vmatpush1.bf16.msra.mxu0 %v2792
    %3463 = vmatprep.subr.bf16.mxu0 %v2797
    %3464 = vmatpush1.bf16.msra.mxu0 %v2796
    %3465 = vmatprep.subr.bf16.mxu0 %v2801
    %3466 = vmatpush1.bf16.msra.mxu0 %v2800
    %3467 = vmatprep.subr.bf16.mxu0 0
    %3468 = vmatpush1.bf16.msra.mxu0 0
    %3469 = vmatprep.subr.bf16.mxu0 0
    %3470 = vmatpush1.bf16.msra.mxu0 0
    %3471 = vmatprep.subr.bf16.mxu0 0
    %3472 = vmatpush1.bf16.msra.mxu0 0
    %3473 = vmatprep.subr.bf16.mxu0 0
    %3474 = vmatpush1.bf16.msra.mxu0 0
    %3475 = vmatprep.subr.bf16.mxu0 0
    %3476 = vmatpush1.bf16.msra.mxu0 0
    %3477 = vmatprep.subr.bf16.mxu0 0
    %3478 = vmatpush1.bf16.msra.mxu0 0
    %3479 = vmatprep.subr.bf16.mxu0 0
    %3480 = vmatpush1.bf16.msra.mxu0 0
    %3481 = vmatprep.subr.bf16.mxu0 0
    %3482 = vmatpush1.bf16.msra.mxu0 0
    %3483 = vmatprep.mubr.bf16.mxu0 0
    %3484 = vmatmul.mubr.bf16.gmra.mrb[0].mxu0 %v3439
    %v3485 = vpop.f32.mrb[0].mxu0
    %v3486 = vadd.f32 0.0, %v3485
    %v3487 = vpop.f32.mrb[0].mxu0
    %v3488 = vadd.f32 0.0, %v3487
    %v3489 = vpop.f32.mrb[0].mxu0
    %v3490 = vadd.f32 0.0, %v3489
    %v3491 = vpop.f32.mrb[0].mxu0
    %v3492 = vadd.f32 0.0, %v3491
    %3493 = vdwg.mxu0
    %3494 = vmatprep.subr.bf16.mxu0 %v2775
    %3495 = vmatpush1.bf16.msra.mxu0 %v2774
    %3496 = vmatprep.subr.bf16.mxu0 %v2779
    %3497 = vmatpush1.bf16.msra.mxu0 %v2778
    %3498 = vmatprep.subr.bf16.mxu0 %v2783
    %3499 = vmatpush1.bf16.msra.mxu0 %v2782
    %3500 = vmatprep.subr.bf16.mxu0 %v2787
    %3501 = vmatpush1.bf16.msra.mxu0 %v2786
    %3502 = vmatprep.subr.bf16.mxu0 %v2791
    %3503 = vmatpush1.bf16.msra.mxu0 %v2790
    %3504 = vmatprep.subr.bf16.mxu0 %v2795
    %3505 = vmatpush1.bf16.msra.mxu0 %v2794
    %3506 = vmatprep.subr.bf16.mxu0 %v2799
    %3507 = vmatpush1.bf16.msra.mxu0 %v2798
    %3508 = vmatprep.subr.bf16.mxu0 %v2803
    %3509 = vmatpush1.bf16.msra.mxu0 %v2802
    %3510 = vmatprep.subr.bf16.mxu0 0
    %3511 = vmatpush1.bf16.msra.mxu0 0
    %3512 = vmatprep.subr.bf16.mxu0 0
    %3513 = vmatpush1.bf16.msra.mxu0 0
    %3514 = vmatprep.subr.bf16.mxu0 0
    %3515 = vmatpush1.bf16.msra.mxu0 0
    %3516 = vmatprep.subr.bf16.mxu0 0
    %3517 = vmatpush1.bf16.msra.mxu0 0
    %3518 = vmatprep.subr.bf16.mxu0 0
    %3519 = vmatpush1.bf16.msra.mxu0 0
    %3520 = vmatprep.subr.bf16.mxu0 0
    %3521 = vmatpush1.bf16.msra.mxu0 0
    %3522 = vmatprep.subr.bf16.mxu0 0
    %3523 = vmatpush1.bf16.msra.mxu0 0
    %3524 = vmatprep.subr.bf16.mxu0 0
    %3525 = vmatpush1.bf16.msra.mxu0 0
    %3526 = vmatprep.mubr.bf16.mxu0 0
    %3527 = vmatmul.mubr.bf16.gmra.mrb[0].mxu0 %v3439
    %v3528 = vpop.f32.mrb[0].mxu0
    %v3529 = vadd.f32 0.0, %v3528
    %v3530 = vpop.f32.mrb[0].mxu0
    %v3531 = vadd.f32 0.0, %v3530
    %v3532 = vpop.f32.mrb[0].mxu0
    %v3533 = vadd.f32 0.0, %v3532
    %v3534 = vpop.f32.mrb[0].mxu0
    %v3535 = vadd.f32 0.0, %v3534
    %3536 = vdwg.mxu0
    %v3537 = vadd.f32 %v3443, %v3486
    %v3538 = vadd.f32 %v3444, %v3488
    %v3539 = vadd.f32 %v3445, %v3529
    %v3540 = vadd.f32 %v3446, %v3531
    %v3541 = vadd.f32 %v3447, %v3490
    %v3542 = vadd.f32 %v3448, %v3492
    %v3543 = vadd.f32 %v3449, %v3533
    %v3544 = vadd.f32 %v3450, %v3535
    %v3545 = vxor.u32 %v3537, 2147483648
    %v3546 = vxor.u32 %v3541, 2147483648
    %v3547 = vmul.f32 %v3545, 1.442695
    %v3548 = vpow.pop %v3547
    %v3549 = vmul.f32 %v3546, 1.442695
    %v3550 = vpow.pop %v3549
    %v3551 = vadd.f32 %v3548, 1.0
    %v3552 = vadd.f32 %v3550, 1.0
    %v3553 = vrcp.pop %v3551
    %v3554 = vmul.f32 1.0, %v3553
    %v3555 = vrcp.pop %v3552
    %v3556 = vmul.f32 1.0, %v3555
    %v3557 = vxor.u32 %v3538, 2147483648
    %v3558 = vxor.u32 %v3542, 2147483648
    %v3559 = vmul.f32 %v3557, 1.442695
    %v3560 = vpow.pop %v3559
    %v3561 = vmul.f32 %v3558, 1.442695
    %v3562 = vpow.pop %v3561
    %v3563 = vadd.f32 %v3560, 1.0
    %v3564 = vadd.f32 %v3562, 1.0
    %v3565 = vrcp.pop %v3563
    %v3566 = vmul.f32 1.0, %v3565
    %v3567 = vrcp.pop %v3564
    %v3568 = vmul.f32 1.0, %v3567
    %v3569 = vtanh.pop %v3539
    %v3570 = vtanh.pop %v3543
    %v3571 = vxor.u32 %v3540, 2147483648
    %v3572 = vxor.u32 %v3544, 2147483648
    %v3573 = vmul.f32 %v3571, 1.442695
    %v3574 = vpow.pop %v3573
    %v3575 = vmul.f32 %v3572, 1.442695
    %v3576 = vpow.pop %v3575
    %v3577 = vadd.f32 %v3574, 1.0
    %v3578 = vadd.f32 %v3576, 1.0
    %v3579 = vrcp.pop %v3577
    %v3580 = vmul.f32 1.0, %v3579
    %v3581 = vrcp.pop %v3578
    %v3582 = vmul.f32 1.0, %v3581
    %v3583 = vmul.f32 %v3566, %v3433
    %v3584 = vmul.f32 %v3568, %v3434
    %v3585 = vmul.f32 %v3554, %v3569
    %v3586 = vmul.f32 %v3556, %v3570
    %v3587 = vadd.f32 %v3583, %v3585
    %v3588 = vadd.f32 %v3584, %v3586
    %v3589 = vtanh.pop %v3587
    %v3590 = vtanh.pop %v3588
    %v3591 = vmul.f32 %v3580, %v3589
    %v3592 = vmul.f32 %v3582, %v3590
    %v3593 = vpack.c.bf16 %v3592, %v3591
    %s3594 = scalar_lea.vmem [#allocation15], 64
    %3595 = vst [vmem:[%s3594] sm:$0xff] %v3591
    %3596 = vst [vmem:[%s3594 + $0x8] sm:$0xff] %v3592
    %v3597 = vld [vmem:[%s1650] sm:$0xff]
    %v3598 = vld [vmem:[%s1650 + $0x8] sm:$0xff]
    %v3599 = vld [vmem:[%s1650 + $0x10] sm:$0xff]
    %v3600 = vld [vmem:[%s1650 + $0x18] sm:$0xff]
    %v3601 = vld [vmem:[%s1650 + $0x20] sm:$0xff]
    %v3602 = vld [vmem:[%s1650 + $0x28] sm:$0xff]
    %v3603 = vld [vmem:[%s1650 + $0x30] sm:$0xff]
    %v3604 = vld [vmem:[%s1650 + $0x38] sm:$0xff]
    %3605 = vmatprep.subr.bf16.mxu0 %v2773
    %3606 = vmatpush1.bf16.msra.mxu0 %v2772
    %3607 = vmatprep.subr.bf16.mxu0 %v2777
    %3608 = vmatpush1.bf16.msra.mxu0 %v2776
    %3609 = vmatprep.subr.bf16.mxu0 %v2781
    %3610 = vmatpush1.bf16.msra.mxu0 %v2780
    %3611 = vmatprep.subr.bf16.mxu0 %v2785
    %3612 = vmatpush1.bf16.msra.mxu0 %v2784
    %3613 = vmatprep.subr.bf16.mxu0 %v2789
    %3614 = vmatpush1.bf16.msra.mxu0 %v2788
    %3615 = vmatprep.subr.bf16.mxu0 %v2793
    %3616 = vmatpush1.bf16.msra.mxu0 %v2792
    %3617 = vmatprep.subr.bf16.mxu0 %v2797
    %3618 = vmatpush1.bf16.msra.mxu0 %v2796
    %3619 = vmatprep.subr.bf16.mxu0 %v2801
    %3620 = vmatpush1.bf16.msra.mxu0 %v2800
    %3621 = vmatprep.subr.bf16.mxu0 0
    %3622 = vmatpush1.bf16.msra.mxu0 0
    %3623 = vmatprep.subr.bf16.mxu0 0
    %3624 = vmatpush1.bf16.msra.mxu0 0
    %3625 = vmatprep.subr.bf16.mxu0 0
    %3626 = vmatpush1.bf16.msra.mxu0 0
    %3627 = vmatprep.subr.bf16.mxu0 0
    %3628 = vmatpush1.bf16.msra.mxu0 0
    %3629 = vmatprep.subr.bf16.mxu0 0
    %3630 = vmatpush1.bf16.msra.mxu0 0
    %3631 = vmatprep.subr.bf16.mxu0 0
    %3632 = vmatpush1.bf16.msra.mxu0 0
    %3633 = vmatprep.subr.bf16.mxu0 0
    %3634 = vmatpush1.bf16.msra.mxu0 0
    %3635 = vmatprep.subr.bf16.mxu0 0
    %3636 = vmatpush1.bf16.msra.mxu0 0
    %3637 = vmatprep.mubr.bf16.mxu0 0
    %3638 = vmatmul.mubr.bf16.gmra.mrb[0].mxu0 %v3593
    %v3639 = vpop.f32.mrb[0].mxu0
    %v3640 = vadd.f32 0.0, %v3639
    %v3641 = vpop.f32.mrb[0].mxu0
    %v3642 = vadd.f32 0.0, %v3641
    %v3643 = vpop.f32.mrb[0].mxu0
    %v3644 = vadd.f32 0.0, %v3643
    %v3645 = vpop.f32.mrb[0].mxu0
    %v3646 = vadd.f32 0.0, %v3645
    %3647 = vdwg.mxu0
    %3648 = vmatprep.subr.bf16.mxu0 %v2775
    %3649 = vmatpush1.bf16.msra.mxu0 %v2774
    %3650 = vmatprep.subr.bf16.mxu0 %v2779
    %3651 = vmatpush1.bf16.msra.mxu0 %v2778
    %3652 = vmatprep.subr.bf16.mxu0 %v2783
    %3653 = vmatpush1.bf16.msra.mxu0 %v2782
    %3654 = vmatprep.subr.bf16.mxu0 %v2787
    %3655 = vmatpush1.bf16.msra.mxu0 %v2786
    %3656 = vmatprep.subr.bf16.mxu0 %v2791
    %3657 = vmatpush1.bf16.msra.mxu0 %v2790
    %3658 = vmatprep.subr.bf16.mxu0 %v2795
    %3659 = vmatpush1.bf16.msra.mxu0 %v2794
    %3660 = vmatprep.subr.bf16.mxu0 %v2799
    %3661 = vmatpush1.bf16.msra.mxu0 %v2798
    %3662 = vmatprep.subr.bf16.mxu0 %v2803
    %3663 = vmatpush1.bf16.msra.mxu0 %v2802
    %3664 = vmatprep.subr.bf16.mxu0 0
    %3665 = vmatpush1.bf16.msra.mxu0 0
    %3666 = vmatprep.subr.bf16.mxu0 0
    %3667 = vmatpush1.bf16.msra.mxu0 0
    %3668 = vmatprep.subr.bf16.mxu0 0
    %3669 = vmatpush1.bf16.msra.mxu0 0
    %3670 = vmatprep.subr.bf16.mxu0 0
    %3671 = vmatpush1.bf16.msra.mxu0 0
    %3672 = vmatprep.subr.bf16.mxu0 0
    %3673 = vmatpush1.bf16.msra.mxu0 0
    %3674 = vmatprep.subr.bf16.mxu0 0
    %3675 = vmatpush1.bf16.msra.mxu0 0
    %3676 = vmatprep.subr.bf16.mxu0 0
    %3677 = vmatpush1.bf16.msra.mxu0 0
    %3678 = vmatprep.subr.bf16.mxu0 0
    %3679 = vmatpush1.bf16.msra.mxu0 0
    %3680 = vmatprep.mubr.bf16.mxu0 0
    %3681 = vmatmul.mubr.bf16.gmra.mrb[0].mxu0 %v3593
    %v3682 = vpop.f32.mrb[0].mxu0
    %v3683 = vadd.f32 0.0, %v3682
    %v3684 = vpop.f32.mrb[0].mxu0
    %v3685 = vadd.f32 0.0, %v3684
    %v3686 = vpop.f32.mrb[0].mxu0
    %v3687 = vadd.f32 0.0, %v3686
    %v3688 = vpop.f32.mrb[0].mxu0
    %v3689 = vadd.f32 0.0, %v3688
    %3690 = vdwg.mxu0
    %v3691 = vadd.f32 %v3597, %v3640
    %v3692 = vadd.f32 %v3598, %v3642
    %v3693 = vadd.f32 %v3599, %v3683
    %v3694 = vadd.f32 %v3600, %v3685
    %v3695 = vadd.f32 %v3601, %v3644
    %v3696 = vadd.f32 %v3602, %v3646
    %v3697 = vadd.f32 %v3603, %v3687
    %v3698 = vadd.f32 %v3604, %v3689
    %v3699 = vxor.u32 %v3691, 2147483648
    %v3700 = vxor.u32 %v3695, 2147483648
    %v3701 = vmul.f32 %v3699, 1.442695
    %v3702 = vpow.pop %v3701
    %v3703 = vmul.f32 %v3700, 1.442695
    %v3704 = vpow.pop %v3703
    %v3705 = vadd.f32 %v3702, 1.0
    %v3706 = vadd.f32 %v3704, 1.0
    %v3707 = vrcp.pop %v3705
    %v3708 = vmul.f32 1.0, %v3707
    %v3709 = vrcp.pop %v3706
    %v3710 = vmul.f32 1.0, %v3709
    %v3711 = vxor.u32 %v3692, 2147483648
    %v3712 = vxor.u32 %v3696, 2147483648
    %v3713 = vmul.f32 %v3711, 1.442695
    %v3714 = vpow.pop %v3713
    %v3715 = vmul.f32 %v3712, 1.442695
    %v3716 = vpow.pop %v3715
    %v3717 = vadd.f32 %v3714, 1.0
    %v3718 = vadd.f32 %v3716, 1.0
    %v3719 = vrcp.pop %v3717
    %v3720 = vmul.f32 1.0, %v3719
    %v3721 = vrcp.pop %v3718
    %v3722 = vmul.f32 1.0, %v3721
    %v3723 = vtanh.pop %v3693
    %v3724 = vtanh.pop %v3697
    %v3725 = vxor.u32 %v3694, 2147483648
    %v3726 = vxor.u32 %v3698, 2147483648
    %v3727 = vmul.f32 %v3725, 1.442695
    %v3728 = vpow.pop %v3727
    %v3729 = vmul.f32 %v3726, 1.442695
    %v3730 = vpow.pop %v3729
    %v3731 = vadd.f32 %v3728, 1.0
    %v3732 = vadd.f32 %v3730, 1.0
    %v3733 = vrcp.pop %v3731
    %v3734 = vmul.f32 1.0, %v3733
    %v3735 = vrcp.pop %v3732
    %v3736 = vmul.f32 1.0, %v3735
    %v3737 = vmul.f32 %v3720, %v3587
    %v3738 = vmul.f32 %v3722, %v3588
    %v3739 = vmul.f32 %v3708, %v3723
    %v3740 = vmul.f32 %v3710, %v3724
    %v3741 = vadd.f32 %v3737, %v3739
    %v3742 = vadd.f32 %v3738, %v3740
    %v3743 = vtanh.pop %v3741
    %v3744 = vtanh.pop %v3742
    %v3745 = vmul.f32 %v3734, %v3743
    %v3746 = vmul.f32 %v3736, %v3744
    %v3747 = vpack.c.bf16 %v3746, %v3745
    %s3748 = scalar_lea.vmem [#allocation15], 80
    %3749 = vst [vmem:[%s3748] sm:$0xff] %v3745
    %3750 = vst [vmem:[%s3748 + $0x8] sm:$0xff] %v3746
    %v3751 = vld [vmem:[%s1806] sm:$0xff]
    %v3752 = vld [vmem:[%s1806 + $0x8] sm:$0xff]
    %v3753 = vld [vmem:[%s1806 + $0x10] sm:$0xff]
    %v3754 = vld [vmem:[%s1806 + $0x18] sm:$0xff]
    %v3755 = vld [vmem:[%s1806 + $0x20] sm:$0xff]
    %v3756 = vld [vmem:[%s1806 + $0x28] sm:$0xff]
    %v3757 = vld [vmem:[%s1806 + $0x30] sm:$0xff]
    %v3758 = vld [vmem:[%s1806 + $0x38] sm:$0xff]
    %3759 = vmatprep.subr.bf16.mxu0 %v2773
    %3760 = vmatpush1.bf16.msra.mxu0 %v2772
    %3761 = vmatprep.subr.bf16.mxu0 %v2777
    %3762 = vmatpush1.bf16.msra.mxu0 %v2776
    %3763 = vmatprep.subr.bf16.mxu0 %v2781
    %3764 = vmatpush1.bf16.msra.mxu0 %v2780
    %3765 = vmatprep.subr.bf16.mxu0 %v2785
    %3766 = vmatpush1.bf16.msra.mxu0 %v2784
    %3767 = vmatprep.subr.bf16.mxu0 %v2789
    %3768 = vmatpush1.bf16.msra.mxu0 %v2788
    %3769 = vmatprep.subr.bf16.mxu0 %v2793
    %3770 = vmatpush1.bf16.msra.mxu0 %v2792
    %3771 = vmatprep.subr.bf16.mxu0 %v2797
    %3772 = vmatpush1.bf16.msra.mxu0 %v2796
    %3773 = vmatprep.subr.bf16.mxu0 %v2801
    %3774 = vmatpush1.bf16.msra.mxu0 %v2800
    %3775 = vmatprep.subr.bf16.mxu0 0
    %3776 = vmatpush1.bf16.msra.mxu0 0
    %3777 = vmatprep.subr.bf16.mxu0 0
    %3778 = vmatpush1.bf16.msra.mxu0 0
    %3779 = vmatprep.subr.bf16.mxu0 0
    %3780 = vmatpush1.bf16.msra.mxu0 0
    %3781 = vmatprep.subr.bf16.mxu0 0
    %3782 = vmatpush1.bf16.msra.mxu0 0
    %3783 = vmatprep.subr.bf16.mxu0 0
    %3784 = vmatpush1.bf16.msra.mxu0 0
    %3785 = vmatprep.subr.bf16.mxu0 0
    %3786 = vmatpush1.bf16.msra.mxu0 0
    %3787 = vmatprep.subr.bf16.mxu0 0
    %3788 = vmatpush1.bf16.msra.mxu0 0
    %3789 = vmatprep.subr.bf16.mxu0 0
    %3790 = vmatpush1.bf16.msra.mxu0 0
    %3791 = vmatprep.mubr.bf16.mxu0 0
    %3792 = vmatmul.mubr.bf16.gmra.mrb[0].mxu0 %v3747
    %v3793 = vpop.f32.mrb[0].mxu0
    %v3794 = vadd.f32 0.0, %v3793
    %v3795 = vpop.f32.mrb[0].mxu0
    %v3796 = vadd.f32 0.0, %v3795
    %v3797 = vpop.f32.mrb[0].mxu0
    %v3798 = vadd.f32 0.0, %v3797
    %v3799 = vpop.f32.mrb[0].mxu0
    %v3800 = vadd.f32 0.0, %v3799
    %3801 = vdwg.mxu0
    %3802 = vmatprep.subr.bf16.mxu0 %v2775
    %3803 = vmatpush1.bf16.msra.mxu0 %v2774
    %3804 = vmatprep.subr.bf16.mxu0 %v2779
    %3805 = vmatpush1.bf16.msra.mxu0 %v2778
    %3806 = vmatprep.subr.bf16.mxu0 %v2783
    %3807 = vmatpush1.bf16.msra.mxu0 %v2782
    %3808 = vmatprep.subr.bf16.mxu0 %v2787
    %3809 = vmatpush1.bf16.msra.mxu0 %v2786
    %3810 = vmatprep.subr.bf16.mxu0 %v2791
    %3811 = vmatpush1.bf16.msra.mxu0 %v2790
    %3812 = vmatprep.subr.bf16.mxu0 %v2795
    %3813 = vmatpush1.bf16.msra.mxu0 %v2794
    %3814 = vmatprep.subr.bf16.mxu0 %v2799
    %3815 = vmatpush1.bf16.msra.mxu0 %v2798
    %3816 = vmatprep.subr.bf16.mxu0 %v2803
    %3817 = vmatpush1.bf16.msra.mxu0 %v2802
    %3818 = vmatprep.subr.bf16.mxu0 0
    %3819 = vmatpush1.bf16.msra.mxu0 0
    %3820 = vmatprep.subr.bf16.mxu0 0
    %3821 = vmatpush1.bf16.msra.mxu0 0
    %3822 = vmatprep.subr.bf16.mxu0 0
    %3823 = vmatpush1.bf16.msra.mxu0 0
    %3824 = vmatprep.subr.bf16.mxu0 0
    %3825 = vmatpush1.bf16.msra.mxu0 0
    %3826 = vmatprep.subr.bf16.mxu0 0
    %3827 = vmatpush1.bf16.msra.mxu0 0
    %3828 = vmatprep.subr.bf16.mxu0 0
    %3829 = vmatpush1.bf16.msra.mxu0 0
    %3830 = vmatprep.subr.bf16.mxu0 0
    %3831 = vmatpush1.bf16.msra.mxu0 0
    %3832 = vmatprep.subr.bf16.mxu0 0
    %3833 = vmatpush1.bf16.msra.mxu0 0
    %3834 = vmatprep.mubr.bf16.mxu0 0
    %3835 = vmatmul.mubr.bf16.gmra.mrb[0].mxu0 %v3747
    %v3836 = vpop.f32.mrb[0].mxu0
    %v3837 = vadd.f32 0.0, %v3836
    %v3838 = vpop.f32.mrb[0].mxu0
    %v3839 = vadd.f32 0.0, %v3838
    %v3840 = vpop.f32.mrb[0].mxu0
    %v3841 = vadd.f32 0.0, %v3840
    %v3842 = vpop.f32.mrb[0].mxu0
    %v3843 = vadd.f32 0.0, %v3842
    %3844 = vdwg.mxu0
    %v3845 = vadd.f32 %v3751, %v3794
    %v3846 = vadd.f32 %v3752, %v3796
    %v3847 = vadd.f32 %v3753, %v3837
    %v3848 = vadd.f32 %v3754, %v3839
    %v3849 = vadd.f32 %v3755, %v3798
    %v3850 = vadd.f32 %v3756, %v3800
    %v3851 = vadd.f32 %v3757, %v3841
    %v3852 = vadd.f32 %v3758, %v3843
    %v3853 = vxor.u32 %v3845, 2147483648
    %v3854 = vxor.u32 %v3849, 2147483648
    %v3855 = vmul.f32 %v3853, 1.442695
    %v3856 = vpow.pop %v3855
    %v3857 = vmul.f32 %v3854, 1.442695
    %v3858 = vpow.pop %v3857
    %v3859 = vadd.f32 %v3856, 1.0
    %v3860 = vadd.f32 %v3858, 1.0
    %v3861 = vrcp.pop %v3859
    %v3862 = vmul.f32 1.0, %v3861
    %v3863 = vrcp.pop %v3860
    %v3864 = vmul.f32 1.0, %v3863
    %v3865 = vxor.u32 %v3846, 2147483648
    %v3866 = vxor.u32 %v3850, 2147483648
    %v3867 = vmul.f32 %v3865, 1.442695
    %v3868 = vpow.pop %v3867
    %v3869 = vmul.f32 %v3866, 1.442695
    %v3870 = vpow.pop %v3869
    %v3871 = vadd.f32 %v3868, 1.0
    %v3872 = vadd.f32 %v3870, 1.0
    %v3873 = vrcp.pop %v3871
    %v3874 = vmul.f32 1.0, %v3873
    %v3875 = vrcp.pop %v3872
    %v3876 = vmul.f32 1.0, %v3875
    %v3877 = vtanh.pop %v3847
    %v3878 = vtanh.pop %v3851
    %v3879 = vxor.u32 %v3848, 2147483648
    %v3880 = vxor.u32 %v3852, 2147483648
    %v3881 = vmul.f32 %v3879, 1.442695
    %v3882 = vpow.pop %v3881
    %v3883 = vmul.f32 %v3880, 1.442695
    %v3884 = vpow.pop %v3883
    %v3885 = vadd.f32 %v3882, 1.0
    %v3886 = vadd.f32 %v3884, 1.0
    %v3887 = vrcp.pop %v3885
    %v3888 = vmul.f32 1.0, %v3887
    %v3889 = vrcp.pop %v3886
    %v3890 = vmul.f32 1.0, %v3889
    %v3891 = vmul.f32 %v3874, %v3741
    %v3892 = vmul.f32 %v3876, %v3742
    %v3893 = vmul.f32 %v3862, %v3877
    %v3894 = vmul.f32 %v3864, %v3878
    %v3895 = vadd.f32 %v3891, %v3893
    %v3896 = vadd.f32 %v3892, %v3894
    %v3897 = vtanh.pop %v3895
    %v3898 = vtanh.pop %v3896
    %v3899 = vmul.f32 %v3888, %v3897
    %v3900 = vmul.f32 %v3890, %v3898
    %v3901 = vpack.c.bf16 %v3900, %v3899
    %s3902 = scalar_lea.vmem [#allocation15], 96
    %3903 = vst [vmem:[%s3902] sm:$0xff] %v3899
    %3904 = vst [vmem:[%s3902 + $0x8] sm:$0xff] %v3900
    %v3905 = vld [vmem:[%s1962] sm:$0xff]
    %v3906 = vld [vmem:[%s1962 + $0x8] sm:$0xff]
    %v3907 = vld [vmem:[%s1962 + $0x10] sm:$0xff]
    %v3908 = vld [vmem:[%s1962 + $0x18] sm:$0xff]
    %v3909 = vld [vmem:[%s1962 + $0x20] sm:$0xff]
    %v3910 = vld [vmem:[%s1962 + $0x28] sm:$0xff]
    %v3911 = vld [vmem:[%s1962 + $0x30] sm:$0xff]
    %v3912 = vld [vmem:[%s1962 + $0x38] sm:$0xff]
    %3913 = vmatprep.subr.bf16.mxu0 %v2773
    %3914 = vmatpush1.bf16.msra.mxu0 %v2772
    %3915 = vmatprep.subr.bf16.mxu0 %v2777
    %3916 = vmatpush1.bf16.msra.mxu0 %v2776
    %3917 = vmatprep.subr.bf16.mxu0 %v2781
    %3918 = vmatpush1.bf16.msra.mxu0 %v2780
    %3919 = vmatprep.subr.bf16.mxu0 %v2785
    %3920 = vmatpush1.bf16.msra.mxu0 %v2784
    %3921 = vmatprep.subr.bf16.mxu0 %v2789
    %3922 = vmatpush1.bf16.msra.mxu0 %v2788
    %3923 = vmatprep.subr.bf16.mxu0 %v2793
    %3924 = vmatpush1.bf16.msra.mxu0 %v2792
    %3925 = vmatprep.subr.bf16.mxu0 %v2797
    %3926 = vmatpush1.bf16.msra.mxu0 %v2796
    %3927 = vmatprep.subr.bf16.mxu0 %v2801
    %3928 = vmatpush1.bf16.msra.mxu0 %v2800
    %3929 = vmatprep.subr.bf16.mxu0 0
    %3930 = vmatpush1.bf16.msra.mxu0 0
    %3931 = vmatprep.subr.bf16.mxu0 0
    %3932 = vmatpush1.bf16.msra.mxu0 0
    %3933 = vmatprep.subr.bf16.mxu0 0
    %3934 = vmatpush1.bf16.msra.mxu0 0
    %3935 = vmatprep.subr.bf16.mxu0 0
    %3936 = vmatpush1.bf16.msra.mxu0 0
    %3937 = vmatprep.subr.bf16.mxu0 0
    %3938 = vmatpush1.bf16.msra.mxu0 0
    %3939 = vmatprep.subr.bf16.mxu0 0
    %3940 = vmatpush1.bf16.msra.mxu0 0
    %3941 = vmatprep.subr.bf16.mxu0 0
    %3942 = vmatpush1.bf16.msra.mxu0 0
    %3943 = vmatprep.subr.bf16.mxu0 0
    %3944 = vmatpush1.bf16.msra.mxu0 0
    %3945 = vmatprep.mubr.bf16.mxu0 0
    %3946 = vmatmul.mubr.bf16.gmra.mrb[0].mxu0 %v3901
    %v3947 = vpop.f32.mrb[0].mxu0
    %v3948 = vadd.f32 0.0, %v3947
    %v3949 = vpop.f32.mrb[0].mxu0
    %v3950 = vadd.f32 0.0, %v3949
    %v3951 = vpop.f32.mrb[0].mxu0
    %v3952 = vadd.f32 0.0, %v3951
    %v3953 = vpop.f32.mrb[0].mxu0
    %v3954 = vadd.f32 0.0, %v3953
    %3955 = vdwg.mxu0
    %3956 = vmatprep.subr.bf16.mxu0 %v2775
    %3957 = vmatpush1.bf16.msra.mxu0 %v2774
    %3958 = vmatprep.subr.bf16.mxu0 %v2779
    %3959 = vmatpush1.bf16.msra.mxu0 %v2778
    %3960 = vmatprep.subr.bf16.mxu0 %v2783
    %3961 = vmatpush1.bf16.msra.mxu0 %v2782
    %3962 = vmatprep.subr.bf16.mxu0 %v2787
    %3963 = vmatpush1.bf16.msra.mxu0 %v2786
    %3964 = vmatprep.subr.bf16.mxu0 %v2791
    %3965 = vmatpush1.bf16.msra.mxu0 %v2790
    %3966 = vmatprep.subr.bf16.mxu0 %v2795
    %3967 = vmatpush1.bf16.msra.mxu0 %v2794
    %3968 = vmatprep.subr.bf16.mxu0 %v2799
    %3969 = vmatpush1.bf16.msra.mxu0 %v2798
    %3970 = vmatprep.subr.bf16.mxu0 %v2803
    %3971 = vmatpush1.bf16.msra.mxu0 %v2802
    %3972 = vmatprep.subr.bf16.mxu0 0
    %3973 = vmatpush1.bf16.msra.mxu0 0
    %3974 = vmatprep.subr.bf16.mxu0 0
    %3975 = vmatpush1.bf16.msra.mxu0 0
    %3976 = vmatprep.subr.bf16.mxu0 0
    %3977 = vmatpush1.bf16.msra.mxu0 0
    %3978 = vmatprep.subr.bf16.mxu0 0
    %3979 = vmatpush1.bf16.msra.mxu0 0
    %3980 = vmatprep.subr.bf16.mxu0 0
    %3981 = vmatpush1.bf16.msra.mxu0 0
    %3982 = vmatprep.subr.bf16.mxu0 0
    %3983 = vmatpush1.bf16.msra.mxu0 0
    %3984 = vmatprep.subr.bf16.mxu0 0
    %3985 = vmatpush1.bf16.msra.mxu0 0
    %3986 = vmatprep.subr.bf16.mxu0 0
    %3987 = vmatpush1.bf16.msra.mxu0 0
    %3988 = vmatprep.mubr.bf16.mxu0 0
    %3989 = vmatmul.mubr.bf16.gmra.mrb[0].mxu0 %v3901
    %v3990 = vpop.f32.mrb[0].mxu0
    %v3991 = vadd.f32 0.0, %v3990
    %v3992 = vpop.f32.mrb[0].mxu0
    %v3993 = vadd.f32 0.0, %v3992
    %v3994 = vpop.f32.mrb[0].mxu0
    %v3995 = vadd.f32 0.0, %v3994
    %v3996 = vpop.f32.mrb[0].mxu0
    %v3997 = vadd.f32 0.0, %v3996
    %3998 = vdwg.mxu0
    %v3999 = vadd.f32 %v3905, %v3948
    %v4000 = vadd.f32 %v3906, %v3950
    %v4001 = vadd.f32 %v3907, %v3991
    %v4002 = vadd.f32 %v3908, %v3993
    %v4003 = vadd.f32 %v3909, %v3952
    %v4004 = vadd.f32 %v3910, %v3954
    %v4005 = vadd.f32 %v3911, %v3995
    %v4006 = vadd.f32 %v3912, %v3997
    %v4007 = vxor.u32 %v3999, 2147483648
    %v4008 = vxor.u32 %v4003, 2147483648
    %v4009 = vmul.f32 %v4007, 1.442695
    %v4010 = vpow.pop %v4009
    %v4011 = vmul.f32 %v4008, 1.442695
    %v4012 = vpow.pop %v4011
    %v4013 = vadd.f32 %v4010, 1.0
    %v4014 = vadd.f32 %v4012, 1.0
    %v4015 = vrcp.pop %v4013
    %v4016 = vmul.f32 1.0, %v4015
    %v4017 = vrcp.pop %v4014
    %v4018 = vmul.f32 1.0, %v4017
    %v4019 = vxor.u32 %v4000, 2147483648
    %v4020 = vxor.u32 %v4004, 2147483648
    %v4021 = vmul.f32 %v4019, 1.442695
    %v4022 = vpow.pop %v4021
    %v4023 = vmul.f32 %v4020, 1.442695
    %v4024 = vpow.pop %v4023
    %v4025 = vadd.f32 %v4022, 1.0
    %v4026 = vadd.f32 %v4024, 1.0
    %v4027 = vrcp.pop %v4025
    %v4028 = vmul.f32 1.0, %v4027
    %v4029 = vrcp.pop %v4026
    %v4030 = vmul.f32 1.0, %v4029
    %v4031 = vtanh.pop %v4001
    %v4032 = vtanh.pop %v4005
    %v4033 = vxor.u32 %v4002, 2147483648
    %v4034 = vxor.u32 %v4006, 2147483648
    %v4035 = vmul.f32 %v4033, 1.442695
    %v4036 = vpow.pop %v4035
    %v4037 = vmul.f32 %v4034, 1.442695
    %v4038 = vpow.pop %v4037
    %v4039 = vadd.f32 %v4036, 1.0
    %v4040 = vadd.f32 %v4038, 1.0
    %v4041 = vrcp.pop %v4039
    %v4042 = vmul.f32 1.0, %v4041
    %v4043 = vrcp.pop %v4040
    %v4044 = vmul.f32 1.0, %v4043
    %v4045 = vmul.f32 %v4028, %v3895
    %v4046 = vmul.f32 %v4030, %v3896
    %v4047 = vmul.f32 %v4016, %v4031
    %v4048 = vmul.f32 %v4018, %v4032
    %v4049 = vadd.f32 %v4045, %v4047
    %v4050 = vadd.f32 %v4046, %v4048
    %v4051 = vtanh.pop %v4049
    %v4052 = vtanh.pop %v4050
    %v4053 = vmul.f32 %v4042, %v4051
    %v4054 = vmul.f32 %v4044, %v4052
    %v4055 = vpack.c.bf16 %v4054, %v4053
    %s4056 = scalar_lea.vmem [#allocation15], 112
    %4057 = vst [vmem:[%s4056] sm:$0xff] %v4053
    %4058 = vst [vmem:[%s4056 + $0x8] sm:$0xff] %v4054
    %4059 = vst [vmem:[%s2663] sm:$0xff] %v4055
    %4060 = vst [vmem:[%s2665] sm:$0xff] %v4049
    %4061 = vst [vmem:[%s2665 + $0x8] sm:$0xff] %v4050
    // Predicated region
    $region54: #{tpu_custom_call.1} parent=1 // pred_check
      _
    $region55: #{tpu_custom_call.1} parent=1 // pred_check_branch
      %4063 = sbr.rel (0) target = $region57
    $region56: #{tpu_custom_call.1} parent=1 // pred_region
      %s4065 = ssub.s32 2048, 2048
      %4066 = vsyncadd [#allocation8], %s4065
      %s4067 = sshll.u32 [#allocation15], 4
      %s4068 = int_to_ptr.vmem [resolvable:$true] %s4067
      %4073 = dma.vmem_to_hbm [thread:$0]  %s4068, 2048, %s7, [#allocation8], 128, 128, 8
    $region57: #{tpu_custom_call.1} parent=1 // pred_fallthru
      _
    // Predicated region
    $region58: #{tpu_custom_call.1} parent=1 // pred_check
      _
    $region59: #{tpu_custom_call.1} parent=1 // pred_check_branch
      %4075 = sbr.rel (0) target = $region61
    $region60: #{tpu_custom_call.1} parent=1 // pred_region
      %4076 = dma.done [#allocation8], 2048
    $region61: #{tpu_custom_call.1} parent=1 // pred_fallthru
      _
    %4077 = vsyncpa [#allocation7], 1
    %4078 = vsyncpa [#allocation10], 1
    %4079 = vsyncpa [#allocation13], 1
    %4080 = vsyncpa [#allocation8], 1

</llo_original>
